<compile_context>
chip_gen: v7x
topology: tpu7x:2x2x1
jax: 0.10.0
libtpu: 0.0.40
codegen_flags: <defaults>
</compile_context>

<pallas_src>
import jax
import jax.numpy as jnp
from jax.experimental import pallas as pl
from jax.experimental.pallas import tpu as pltpu

IN_DIM = 28 * 28   # 784
H1 = 512
H2 = 256
OUT = 1
NEG_SLOPE = 0.01   # nn.LeakyReLU() default


def d_kernel(x_ref, w1_ref, b1_ref, w2_ref, b2_ref, w3_ref, b3_ref, o_ref):
    # Cast the streamed tile to bf16 on the VPU (negligible vs the matmuls).
    x = x_ref[...].astype(jnp.bfloat16)                                  # (tile, 784)

    # Layer 1: Linear(784, 512) + LeakyReLU.  bf16 operands, f32 accumulation.
    h = jnp.dot(x, w1_ref[...], preferred_element_type=jnp.float32)
    h = h + b1_ref[...]
    h = jnp.where(h > 0, h, NEG_SLOPE * h)

    # Layer 2: Linear(512, 256) + LeakyReLU.
    h = jnp.dot(h.astype(jnp.bfloat16), w2_ref[...],
                preferred_element_type=jnp.float32)
    h = h + b2_ref[...]
    h = jnp.where(h > 0, h, NEG_SLOPE * h)

    # Layer 3: Linear(256, 1), computed lane-dense.  Contract w3 (8, 256) with
    # h (tile, 256) along the feature dim (QK^T pattern) -> (8, tile); the real
    # logits sit in row 0 (rows 1..7 of w3 are zeros).  Keeps the sigmoid tail
    # and the output store on full 128-lane vregs and the writeback unmasked.
    z = jax.lax.dot_general(w3_ref[...], h.astype(jnp.bfloat16),
                            (((1,), (1,)), ((), ())),
                            preferred_element_type=jnp.float32)          # (8, tile)
    logits = z[0:1, :] + b3_ref[0, 0]                                    # (1, tile)

    # Sigmoid; the denominator reciprocal goes to the otherwise-idle EUP slot.
    o_ref[0] = pl.reciprocal(1.0 + jnp.exp(-logits),
                             approx=True).astype(o_ref.dtype)


def _pick_tile(batch, tile_cap):
    """Batch-tile rows: multiple of 128, capped at tile_cap, chosen so that
    small/medium batches still produce >= 2 grid steps (v7x megacore split),
    while large batches use big tiles to amortize per-step overhead."""
    tile_cap = max(128, (int(tile_cap) // 128) * 128)
    b128 = ((batch + 127) // 128) * 128          # 128-row MXU/sublane granule
    if b128 <= 2 * tile_cap:
        tile = max(128, ((b128 // 2 + 127) // 128) * 128)   # ~half the batch
    else:
        tile = tile_cap
    return tile, pl.cdiv(batch, tile)


def prepare_params(params):
    """One-time conversion of the f32 parameters into kernel-ready layout and
    dtype (hoisted out of the forward path)."""
    w1, b1, w2, b2, w3, b3 = params
    w3_pad = jnp.zeros((8, H2), jnp.float32).at[0, :].set(w3.reshape(-1))
    return (w1.astype(jnp.bfloat16),
            b1.reshape(1, H1).astype(jnp.float32),
            w2.astype(jnp.bfloat16),
            b2.reshape(1, H2).astype(jnp.float32),
            w3_pad.astype(jnp.bfloat16),
            b3.reshape(1, 1).astype(jnp.float32))


def discriminator_forward(x, kparams, *, tile_b=1024):
    """x: any shape whose trailing dims flatten to 784 (e.g. (B,1,28,28)).
    kparams: output of prepare_params()."""
    w1b, b1f, w2b, b2f, w3p, b3s = kparams
    x2d = x.reshape(-1, IN_DIM)            # original dtype; cast in-kernel
    batch = x2d.shape[0]
    tile, num_tiles = _pick_tile(batch, tile_b)

    out = pl.pallas_call(
        d_kernel,
        out_shape=jax.ShapeDtypeStruct((num_tiles, 1, tile), jnp.float32),
        grid_spec=pltpu.PrefetchScalarGridSpec(
            num_scalar_prefetch=0,
            grid=(num_tiles,),
            in_specs=[
                # x tile: streamed, boundary block may be partial (garbage rows
                # are independent and sliced off on the host).
                pl.BlockSpec((tile, IN_DIM), lambda i: (i, 0)),
                pl.BlockSpec((IN_DIM, H1), lambda i: (0, 0)),   # w1 (bf16, resident)
                pl.BlockSpec((1, H1), lambda i: (0, 0)),        # b1 (f32)
                pl.BlockSpec((H1, H2), lambda i: (0, 0)),       # w2 (bf16, resident)
                pl.BlockSpec((1, H2), lambda i: (0, 0)),        # b2 (f32)
                pl.BlockSpec((8, H2), lambda i: (0, 0)),        # w3 padded rows (bf16)
                pl.BlockSpec((1, 1), lambda i: (0, 0),
                             memory_space=pltpu.MemorySpace.SMEM),  # b3 scalar
            ],
            out_specs=pl.BlockSpec((1, 1, tile), lambda i: (i, 0, 0)),
        ),
        compiler_params=pltpu.CompilerParams(
            dimension_semantics=("parallel",)),
    )(x2d, w1b, b1f, w2b, b2f, w3p, b3s)

    # (num_tiles, 1, tile) lane-dense rows -> (batch, 1) column for the caller.
    return out.reshape(-1)[:batch].reshape(batch, OUT)


def init_params(key):
    """Deterministic init mimicking PyTorch Linear default: U(-1/sqrt(fan_in), +)."""
    ks = jax.random.split(key, 6)

    def linear(kw, kb, fan_in, fan_out):
        bound = 1.0 / (fan_in ** 0.5)
        w = jax.random.uniform(kw, (fan_in, fan_out), jnp.float32, -bound, bound)
        b = jax.random.uniform(kb, (1, fan_out), jnp.float32, -bound, bound)
        return w, b

    w1, b1 = linear(ks[0], ks[1], IN_DIM, H1)
    w2, b2 = linear(ks[2], ks[3], H1, H2)
    w3, b3 = linear(ks[4], ks[5], H2, OUT)
    return (w1, b1, w2, b2, w3, b3)


def reference_forward(x, params):
    """Pure f32 JAX reference (PyTorch semantics)."""
    w1, b1, w2, b2, w3, b3 = params
    x2d = x.reshape(-1, IN_DIM).astype(jnp.float32)
    h = x2d @ w1 + b1
    h = jnp.where(h > 0, h, NEG_SLOPE * h)
    h = h @ w2 + b2
    h = jnp.where(h > 0, h, NEG_SLOPE * h)
    h = h @ w3 + b3
    return jax.nn.sigmoid(h)


if __name__ == "__main__":
    key = jax.random.PRNGKey(0)
    k_x, k_p = jax.random.split(key)
    params = init_params(k_p)
    kparams = prepare_params(params)   # cast weights once, outside forward

    # Small batch of "images", NCHW like PyTorch: (2, 1, 28, 28)
    x = jax.random.normal(k_x, (2, 1, 28, 28), jnp.float32)
    out = jax.block_until_ready(discriminator_forward(x, kparams))
    ref = reference_forward(x, params)
    assert out.shape == (2, 1), out.shape
    # bf16 matmul operands + approx reciprocal vs f32 reference: loose-but-
    # meaningful tolerance for a sigmoid output in (0, 1).
    assert jnp.allclose(out, ref, atol=2e-2), (out, ref)

    # Exercise the multi-tile grid + ragged boundary block path (grid of 2).
    x2 = jax.random.normal(k_x, (300, 1, 28, 28), jnp.float32)
    out2 = jax.block_until_ready(discriminator_forward(x2, kparams))
    ref2 = reference_forward(x2, params)
    assert out2.shape == (300, 1), out2.shape
    assert jnp.allclose(out2, ref2, atol=2e-2)

    print("KERNEL_OK")
</pallas_src>

<mosaic_0001>
module attributes {stable_mosaic.version = 11 : i64} {
  func.func @d_kernel(%arg0: i32, %arg1: memref<128x784xf32, #tpu.memory_space<vmem>>, %arg2: memref<784x512xbf16, #tpu.memory_space<vmem>>, %arg3: memref<1x512xf32, #tpu.memory_space<vmem>>, %arg4: memref<512x256xbf16, #tpu.memory_space<vmem>>, %arg5: memref<1x256xf32, #tpu.memory_space<vmem>>, %arg6: memref<8x256xbf16, #tpu.memory_space<vmem>>, %arg7: memref<1x1xf32, #tpu.memory_space<smem>>, %arg8: memref<1x1x128xf32, #tpu.memory_space<vmem>>) attributes {dimension_semantics = [#tpu.dimension_semantics<parallel>], iteration_bounds = array<i64: 1>, scalar_prefetch = 0 : i64, scratch_operands = 0 : i64, tpu.core_type = #tpu.core_type<tc>, window_params = [{transform_indices = @transform_0, window_bounds = array<i64: 128, 784>}, {pipeline_mode = #tpu.pipeline_mode<synchronous>, transform_indices = @transform_1, window_bounds = array<i64: 784, 512>}, {pipeline_mode = #tpu.pipeline_mode<synchronous>, transform_indices = @transform_2, window_bounds = array<i64: 1, 512>}, {pipeline_mode = #tpu.pipeline_mode<synchronous>, transform_indices = @transform_3, window_bounds = array<i64: 512, 256>}, {pipeline_mode = #tpu.pipeline_mode<synchronous>, transform_indices = @transform_4, window_bounds = array<i64: 1, 256>}, {pipeline_mode = #tpu.pipeline_mode<synchronous>, transform_indices = @transform_5, window_bounds = array<i64: 8, 256>}, {transform_indices = @transform_6, window_bounds = array<i64: 1, 1>}, {transform_indices = @transform_7, window_bounds = array<i64: 1, 1, 128>}]} {
    %c0 = arith.constant 0 : index
    %c0_0 = arith.constant 0 : index
    %0 = vector.load %arg1[%c0, %c0_0] : memref<128x784xf32, #tpu.memory_space<vmem>>, vector<128x784xf32>
    %1 = arith.truncf %0 : vector<128x784xf32> to vector<128x784xbf16>
    %c0_1 = arith.constant 0 : index
    %c0_2 = arith.constant 0 : index
    %2 = vector.load %arg2[%c0_1, %c0_2] : memref<784x512xbf16, #tpu.memory_space<vmem>>, vector<784x512xbf16>
    %cst = arith.constant dense<0.000000e+00> : vector<128x512xf32>
    %3 = tpu.matmul %1, %2, %cst {dimension_numbers = #tpu.dot_dimension_numbers<[1], [0], [0], [1], [0, 0, 1, 1], [], []>} : vector<128x784xbf16>, vector<784x512xbf16>, vector<128x512xf32> -> vector<128x512xf32>
    %c0_3 = arith.constant 0 : index
    %c0_4 = arith.constant 0 : index
    %4 = vector.load %arg3[%c0_3, %c0_4] : memref<1x512xf32, #tpu.memory_space<vmem>>, vector<1x512xf32>
    %5 = vector.broadcast %4 : vector<1x512xf32> to vector<128x512xf32>
    %6 = arith.addf %3, %5 : vector<128x512xf32>
    %cst_5 = arith.constant 0.000000e+00 : f32
    %7 = vector.broadcast %cst_5 : f32 to vector<128x512xf32>
    %8 = arith.cmpf ogt, %6, %7 : vector<128x512xf32>
    %cst_6 = arith.constant 0.00999999977 : f32
    %9 = vector.broadcast %cst_6 : f32 to vector<128x512xf32>
    %10 = arith.mulf %9, %6 : vector<128x512xf32>
    %11 = arith.select %8, %6, %10 : vector<128x512xi1>, vector<128x512xf32>
    %12 = arith.truncf %11 : vector<128x512xf32> to vector<128x512xbf16>
    %c0_7 = arith.constant 0 : index
    %c0_8 = arith.constant 0 : index
    %13 = vector.load %arg4[%c0_7, %c0_8] : memref<512x256xbf16, #tpu.memory_space<vmem>>, vector<512x256xbf16>
    %cst_9 = arith.constant dense<0.000000e+00> : vector<128x256xf32>
    %14 = tpu.matmul %12, %13, %cst_9 {dimension_numbers = #tpu.dot_dimension_numbers<[1], [0], [0], [1], [0, 0, 1, 1], [], []>} : vector<128x512xbf16>, vector<512x256xbf16>, vector<128x256xf32> -> vector<128x256xf32>
    %c0_10 = arith.constant 0 : index
    %c0_11 = arith.constant 0 : index
    %15 = vector.load %arg5[%c0_10, %c0_11] : memref<1x256xf32, #tpu.memory_space<vmem>>, vector<1x256xf32>
    %16 = vector.broadcast %15 : vector<1x256xf32> to vector<128x256xf32>
    %17 = arith.addf %14, %16 : vector<128x256xf32>
    %cst_12 = arith.constant 0.000000e+00 : f32
    %18 = vector.broadcast %cst_12 : f32 to vector<128x256xf32>
    %19 = arith.cmpf ogt, %17, %18 : vector<128x256xf32>
    %cst_13 = arith.constant 0.00999999977 : f32
    %20 = vector.broadcast %cst_13 : f32 to vector<128x256xf32>
    %21 = arith.mulf %20, %17 : vector<128x256xf32>
    %22 = arith.select %19, %17, %21 : vector<128x256xi1>, vector<128x256xf32>
    %c0_14 = arith.constant 0 : index
    %c0_15 = arith.constant 0 : index
    %23 = vector.load %arg6[%c0_14, %c0_15] : memref<8x256xbf16, #tpu.memory_space<vmem>>, vector<8x256xbf16>
    %24 = arith.truncf %22 : vector<128x256xf32> to vector<128x256xbf16>
    %cst_16 = arith.constant dense<0.000000e+00> : vector<8x128xf32>
    %25 = tpu.matmul %23, %24, %cst_16 {dimension_numbers = #tpu.dot_dimension_numbers<[1], [1], [0], [0], [0, 0, 1, 0], [], []>} : vector<8x256xbf16>, vector<128x256xbf16>, vector<8x128xf32> -> vector<8x128xf32>
    %26 = vector.extract_strided_slice %25 {offsets = [0, 0], sizes = [1, 128], strides = [1, 1]} : vector<8x128xf32> to vector<1x128xf32>
    %c0_17 = arith.constant 0 : index
    %c0_18 = arith.constant 0 : index
    %27 = memref.load %arg7[%c0_17, %c0_18] : memref<1x1xf32, #tpu.memory_space<smem>>
    %28 = vector.broadcast %27 : f32 to vector<1x128xf32>
    %29 = arith.addf %26, %28 : vector<1x128xf32>
    %cst_19 = arith.constant 0.000000e+00 : f32
    %30 = vector.broadcast %cst_19 : f32 to vector<1x128xf32>
    %31 = arith.subf %30, %29 : vector<1x128xf32>
    %32 = math.exp %31 : vector<1x128xf32>
    %cst_20 = arith.constant 1.000000e+00 : f32
    %33 = vector.broadcast %cst_20 : f32 to vector<1x128xf32>
    %34 = arith.addf %33, %32 : vector<1x128xf32>
    %35 = tpu.reciprocal %34 {approx = true} : vector<1x128xf32> -> vector<1x128xf32>
    %c0_21 = arith.constant 0 : index
    %c0_22 = arith.constant 0 : index
    %c0_23 = arith.constant 0 : index
    %36 = vector.load %arg8[%c0_21, %c0_22, %c0_23] : memref<1x1x128xf32, #tpu.memory_space<vmem>>, vector<1x1x128xf32>
    %37 = vector.shape_cast %36 : vector<1x1x128xf32> to vector<1x128xf32>
    %38 = vector.shape_cast %35 : vector<1x128xf32> to vector<1x1x128xf32>
    tpu.vector_store %arg8[%c0_21, %c0_22, %c0_23], %38 {strides = array<i32>} : memref<1x1x128xf32, #tpu.memory_space<vmem>>, vector<1x1x128xf32>,
    return
  }
  func.func @transform_0(%arg0: i32) -> (i32, i32) {
    %c0_i32 = arith.constant 0 : i32
    %c0_i32_0 = arith.constant 0 : i32
    return %arg0, %c0_i32 : i32, i32
  }
  func.func @transform_1(%arg0: i32) -> (i32, i32) {
    %c0_i32 = arith.constant 0 : i32
    %c0_i32_0 = arith.constant 0 : i32
    %c0_i32_1 = arith.constant 0 : i32
    return %c0_i32, %c0_i32_0 : i32, i32
  }
  func.func @transform_2(%arg0: i32) -> (i32, i32) {
    %c0_i32 = arith.constant 0 : i32
    %c0_i32_0 = arith.constant 0 : i32
    %c0_i32_1 = arith.constant 0 : i32
    return %c0_i32, %c0_i32_0 : i32, i32
  }
  func.func @transform_3(%arg0: i32) -> (i32, i32) {
    %c0_i32 = arith.constant 0 : i32
    %c0_i32_0 = arith.constant 0 : i32
    %c0_i32_1 = arith.constant 0 : i32
    return %c0_i32, %c0_i32_0 : i32, i32
  }
  func.func @transform_4(%arg0: i32) -> (i32, i32) {
    %c0_i32 = arith.constant 0 : i32
    %c0_i32_0 = arith.constant 0 : i32
    %c0_i32_1 = arith.constant 0 : i32
    return %c0_i32, %c0_i32_0 : i32, i32
  }
  func.func @transform_5(%arg0: i32) -> (i32, i32) {
    %c0_i32 = arith.constant 0 : i32
    %c0_i32_0 = arith.constant 0 : i32
    %c0_i32_1 = arith.constant 0 : i32
    return %c0_i32, %c0_i32_0 : i32, i32
  }
  func.func @transform_6(%arg0: i32) -> (i32, i32) {
    %c0_i32 = arith.constant 0 : i32
    %c0_i32_0 = arith.constant 0 : i32
    %c0_i32_1 = arith.constant 0 : i32
    return %c0_i32, %c0_i32_0 : i32, i32
  }
  func.func @transform_7(%arg0: i32) -> (i32, i32, i32) {
    %c0_i32 = arith.constant 0 : i32
    %c0_i32_0 = arith.constant 0 : i32
    %c0_i32_1 = arith.constant 0 : i32
    return %arg0, %c0_i32, %c0_i32_0 : i32, i32, i32
  }
}

</mosaic_0001>

<llo_original>
// kernel: tpu_custom_call.1
$region0: #{tpu_custom_call.1}
  #allocation0 [shape = 'u32[]', space=smem, size = 0x4, offset = 0x4, fixed_abs, tag = 'smem constant byte address 0x4 - core index']
  #allocation1 [shape = 'u32[144,128]{1,0:T(1,128)}', space=vmem, size = 0x12000, scoped, tag = 'internal scratch']
  #allocation2 [shape = 'f32[1,1]{1,0:T(1,128)S(6)}', space=smem, size = 0x200, scoped, tag = 'scoped memory for tpu_custom_call.1']
  %s0 = inlined_call_operand.hbm [shape: f32[2,784], index: 0, kind: input, shape index: {}]
  %s1 = inlined_call_operand.hbm [shape: bf16[784,512], index: 1, kind: input, shape index: {}]
  %s2 = inlined_call_operand.vmem [shape: f32[1,512], index: 2, kind: input, shape index: {}]
  %s3 = inlined_call_operand.hbm [shape: bf16[512,256], index: 3, kind: input, shape index: {}]
  %s4 = inlined_call_operand.vmem [shape: f32[1,256], index: 4, kind: input, shape index: {}]
  %s5 = inlined_call_operand.vmem [shape: bf16[8,256], index: 5, kind: input, shape index: {}]
  %s6 = inlined_call_operand.<no memory space> [shape: f32[1,1], index: 6, kind: input, shape index: {}]
  %s7 = inlined_call_operand.hbm [shape: f32[1,1,128], index: 7, kind: output, shape index: {}]
  %s8 = sld [smem:[#allocation0]]
  $region50: #{tpu_custom_call.1} parent=0
    _
  %s10 = ssub.s32 1, %s8
  %s11 = scalar_select 0, %s10, %s8
  %12 = sst [smem:[#allocation2]] %s6
  $region1: #{tpu_custom_call.1} parent=0
    #allocation3 [shape = 'u8[458752]{0}', space=vmem, size = 0x70000, scoped, tag = 'input window, operand 0, single buffered']
    #allocation4 [shape = 's32[1]{0}', space=sflag, size = 0x4, scoped, tag = 'scoped memory for tpu_custom_call.1']
    #allocation5 [shape = 's32[1]{0}', space=sflag, size = 0x4, scoped, tag = 'scoped memory for tpu_custom_call.1']
    #allocation6 [shape = 'u8[802816]{0}', space=vmem, size = 0xc4000, scoped, tag = 'input window, operand 1, single buffered']
    #allocation7 [shape = 's32[1]{0}', space=sflag, size = 0x4, scoped, tag = 'scoped memory for tpu_custom_call.1']
    #allocation8 [shape = 'u8[262144]{0}', space=vmem, size = 0x40000, scoped, tag = 'input window, operand 3, single buffered']
    #allocation9 [shape = 'u8[512]{0}', space=vmem, size = 0x400, scoped, tag = 'output window, operand 0, single buffered']
    %13 = vsyncpa [#allocation4], 0
    %14 = vsyncpa [#allocation7], 0
    %15 = vsyncpa [#allocation5], 0
    // Predicated region
    $region2: #{tpu_custom_call.1} parent=1 // pred_check
      _
    $region3: #{tpu_custom_call.1} parent=1 // pred_check_branch
      %17 = sbr.rel (0) target = $region5
    $region4: #{tpu_custom_call.1} parent=1 // pred_region
      %s19 = ssub.s32 14336, 224
      %20 = vsyncadd [#allocation4], %s19
      %s21 = sshll.u32 [#allocation3], 4
      %s22 = int_to_ptr.vmem [resolvable:$true] %s21
      %27 = dma.hbm_to_vmem [thread:$0]  %s0, 224, %s22, [#allocation4], 224, 224, 14
    $region5: #{tpu_custom_call.1} parent=1 // pred_fallthru
      _
    // Predicated region
    $region6: #{tpu_custom_call.1} parent=1 // pred_check
      _
    $region7: #{tpu_custom_call.1} parent=1 // pred_check_branch
      %29 = sbr.rel (0) target = $region9
    $region8: #{tpu_custom_call.1} parent=1 // pred_region
      %s31 = ssub.s32 25088, 25088
      %32 = vsyncadd [#allocation7], %s31
      %s33 = sshll.u32 [#allocation6], 4
      %s34 = int_to_ptr.vmem [resolvable:$true] %s33
      %39 = dma.hbm_to_vmem [thread:$0]  %s1, 25088, %s34, [#allocation7], 256, 256, 16
    $region9: #{tpu_custom_call.1} parent=1 // pred_fallthru
      _
    // Predicated region
    $region10: #{tpu_custom_call.1} parent=1 // pred_check
      _
    $region11: #{tpu_custom_call.1} parent=1 // pred_check_branch
      %41 = sbr.rel (0) target = $region13
    $region12: #{tpu_custom_call.1} parent=1 // pred_region
      _
    $region13: #{tpu_custom_call.1} parent=1 // pred_fallthru
      _
    // Predicated region
    $region14: #{tpu_custom_call.1} parent=1 // pred_check
      _
    $region15: #{tpu_custom_call.1} parent=1 // pred_check_branch
      %43 = sbr.rel (0) target = $region17
    $region16: #{tpu_custom_call.1} parent=1 // pred_region
      %s45 = ssub.s32 8192, 8192
      %46 = vsyncadd [#allocation7], %s45
      %s47 = sshll.u32 [#allocation8], 4
      %s48 = int_to_ptr.vmem [resolvable:$true] %s47
      %53 = dma.hbm_to_vmem [thread:$0]  %s3, 8192, %s48, [#allocation7], 128, 128, 8
    $region17: #{tpu_custom_call.1} parent=1 // pred_fallthru
      _
    // Predicated region
    $region18: #{tpu_custom_call.1} parent=1 // pred_check
      _
    $region19: #{tpu_custom_call.1} parent=1 // pred_check_branch
      %55 = sbr.rel (0) target = $region21
    $region20: #{tpu_custom_call.1} parent=1 // pred_region
      _
    $region21: #{tpu_custom_call.1} parent=1 // pred_fallthru
      _
    // Predicated region
    $region22: #{tpu_custom_call.1} parent=1 // pred_check
      _
    $region23: #{tpu_custom_call.1} parent=1 // pred_check_branch
      %57 = sbr.rel (0) target = $region25
    $region24: #{tpu_custom_call.1} parent=1 // pred_region
      _
    $region25: #{tpu_custom_call.1} parent=1 // pred_fallthru
      _
    // Predicated region
    $region26: #{tpu_custom_call.1} parent=1 // pred_check
      _
    $region27: #{tpu_custom_call.1} parent=1 // pred_check_branch
      %59 = sbr.rel (0) target = $region29
    $region28: #{tpu_custom_call.1} parent=1 // pred_region
      _
    $region29: #{tpu_custom_call.1} parent=1 // pred_fallthru
      _
    // Predicated region
    $region30: #{tpu_custom_call.1} parent=1 // pred_check
      _
    $region31: #{tpu_custom_call.1} parent=1 // pred_check_branch
      %61 = sbr.rel (0) target = $region33
    $region32: #{tpu_custom_call.1} parent=1 // pred_region
      %62 = dma.done [#allocation4], 14336
    $region33: #{tpu_custom_call.1} parent=1 // pred_fallthru
      _
    // Predicated region
    $region34: #{tpu_custom_call.1} parent=1 // pred_check
      _
    $region35: #{tpu_custom_call.1} parent=1 // pred_check_branch
      %64 = sbr.rel (0) target = $region37
    $region36: #{tpu_custom_call.1} parent=1 // pred_region
      %65 = dma.done [#allocation7], 25088
    $region37: #{tpu_custom_call.1} parent=1 // pred_fallthru
      _
    // Predicated region
    $region38: #{tpu_custom_call.1} parent=1 // pred_check
      _
    $region39: #{tpu_custom_call.1} parent=1 // pred_check_branch
      %67 = sbr.rel (0) target = $region41
    $region40: #{tpu_custom_call.1} parent=1 // pred_region
      %68 = dma.done [#allocation7], 8192
    $region41: #{tpu_custom_call.1} parent=1 // pred_fallthru
      _
    %v70 = vld [vmem:[#allocation3] sm:$0xff]
    %v71 = vld [vmem:[#allocation3 + $0x8] sm:$0x3f]
    %v72 = vld [vmem:[#allocation3 + $0xe] sm:$0xff]
    %v73 = vld [vmem:[#allocation3 + $0x16] sm:$0x3f]
    %v74 = vld [vmem:[#allocation3 + $0x1c] sm:$0xff]
    %v75 = vld [vmem:[#allocation3 + $0x24] sm:$0x3f]
    %v76 = vld [vmem:[#allocation3 + $0x2a] sm:$0xff]
    %v77 = vld [vmem:[#allocation3 + $0x32] sm:$0x3f]
    %v78 = vld [vmem:[#allocation3 + $0x38] sm:$0xff]
    %v79 = vld [vmem:[#allocation3 + $0x40] sm:$0x3f]
    %v80 = vld [vmem:[#allocation3 + $0x46] sm:$0xff]
    %v81 = vld [vmem:[#allocation3 + $0x4e] sm:$0x3f]
    %v82 = vld [vmem:[#allocation3 + $0x54] sm:$0xff]
    %v83 = vld [vmem:[#allocation3 + $0x5c] sm:$0x3f]
    %v84 = vld [vmem:[#allocation3 + $0x62] sm:$0xff]
    %v85 = vld [vmem:[#allocation3 + $0x6a] sm:$0x3f]
    %v86 = vld [vmem:[#allocation3 + $0x70] sm:$0xff]
    %v87 = vld [vmem:[#allocation3 + $0x78] sm:$0x3f]
    %v88 = vld [vmem:[#allocation3 + $0x7e] sm:$0xff]
    %v89 = vld [vmem:[#allocation3 + $0x86] sm:$0x3f]
    %v90 = vld [vmem:[#allocation3 + $0x8c] sm:$0xff]
    %v91 = vld [vmem:[#allocation3 + $0x94] sm:$0x3f]
    %v92 = vld [vmem:[#allocation3 + $0x9a] sm:$0xff]
    %v93 = vld [vmem:[#allocation3 + $0xa2] sm:$0x3f]
    %v94 = vld [vmem:[#allocation3 + $0xa8] sm:$0xff]
    %v95 = vld [vmem:[#allocation3 + $0xb0] sm:$0x3f]
    %v96 = vld [vmem:[#allocation3 + $0xb6] sm:$0xff]
    %v97 = vld [vmem:[#allocation3 + $0xbe] sm:$0x3f]
    %v98 = vld [vmem:[#allocation3 + $0xc4] sm:$0xff]
    %v99 = vld [vmem:[#allocation3 + $0xcc] sm:$0x3f]
    %v100 = vld [vmem:[#allocation3 + $0xd2] sm:$0xff]
    %v101 = vld [vmem:[#allocation3 + $0xda] sm:$0x3f]
    %v102 = vld [vmem:[#allocation3 + $0xe0] sm:$0xff]
    %v103 = vld [vmem:[#allocation3 + $0xe8] sm:$0x3f]
    %v104 = vld [vmem:[#allocation3 + $0xee] sm:$0xff]
    %v105 = vld [vmem:[#allocation3 + $0xf6] sm:$0x3f]
    %v106 = vld [vmem:[#allocation3 + $0xfc] sm:$0xff]
    %v107 = vld [vmem:[#allocation3 + $0x104] sm:$0x3f]
    %v108 = vld [vmem:[#allocation3 + $0x10a] sm:$0xff]
    %v109 = vld [vmem:[#allocation3 + $0x112] sm:$0x3f]
    %v110 = vld [vmem:[#allocation3 + $0x118] sm:$0xff]
    %v111 = vld [vmem:[#allocation3 + $0x120] sm:$0x3f]
    %v112 = vld [vmem:[#allocation3 + $0x126] sm:$0xff]
    %v113 = vld [vmem:[#allocation3 + $0x12e] sm:$0x3f]
    %v114 = vld [vmem:[#allocation3 + $0x134] sm:$0xff]
    %v115 = vld [vmem:[#allocation3 + $0x13c] sm:$0x3f]
    %v116 = vld [vmem:[#allocation3 + $0x142] sm:$0xff]
    %v117 = vld [vmem:[#allocation3 + $0x14a] sm:$0x3f]
    %v118 = vld [vmem:[#allocation3 + $0x150] sm:$0xff]
    %v119 = vld [vmem:[#allocation3 + $0x158] sm:$0x3f]
    %v120 = vld [vmem:[#allocation3 + $0x15e] sm:$0xff]
    %v121 = vld [vmem:[#allocation3 + $0x166] sm:$0x3f]
    %v122 = vld [vmem:[#allocation3 + $0x16c] sm:$0xff]
    %v123 = vld [vmem:[#allocation3 + $0x174] sm:$0x3f]
    %v124 = vld [vmem:[#allocation3 + $0x17a] sm:$0xff]
    %v125 = vld [vmem:[#allocation3 + $0x182] sm:$0x3f]
    %v126 = vld [vmem:[#allocation3 + $0x188] sm:$0xff]
    %v127 = vld [vmem:[#allocation3 + $0x190] sm:$0x3f]
    %v128 = vld [vmem:[#allocation3 + $0x196] sm:$0xff]
    %v129 = vld [vmem:[#allocation3 + $0x19e] sm:$0x3f]
    %v130 = vld [vmem:[#allocation3 + $0x1a4] sm:$0xff]
    %v131 = vld [vmem:[#allocation3 + $0x1ac] sm:$0x3f]
    %v132 = vld [vmem:[#allocation3 + $0x1b2] sm:$0xff]
    %v133 = vld [vmem:[#allocation3 + $0x1ba] sm:$0x3f]
    %v134 = vld [vmem:[#allocation3 + $0x1c0] sm:$0xff]
    %v135 = vld [vmem:[#allocation3 + $0x1c8] sm:$0x3f]
    %v136 = vld [vmem:[#allocation3 + $0x1ce] sm:$0xff]
    %v137 = vld [vmem:[#allocation3 + $0x1d6] sm:$0x3f]
    %v138 = vld [vmem:[#allocation3 + $0x1dc] sm:$0xff]
    %v139 = vld [vmem:[#allocation3 + $0x1e4] sm:$0x3f]
    %v140 = vld [vmem:[#allocation3 + $0x1ea] sm:$0xff]
    %v141 = vld [vmem:[#allocation3 + $0x1f2] sm:$0x3f]
    %v142 = vld [vmem:[#allocation3 + $0x1f8] sm:$0xff]
    %v143 = vld [vmem:[#allocation3 + $0x200] sm:$0x3f]
    %v144 = vld [vmem:[#allocation3 + $0x206] sm:$0xff]
    %v145 = vld [vmem:[#allocation3 + $0x20e] sm:$0x3f]
    %v146 = vld [vmem:[#allocation3 + $0x214] sm:$0xff]
    %v147 = vld [vmem:[#allocation3 + $0x21c] sm:$0x3f]
    %v148 = vld [vmem:[#allocation3 + $0x222] sm:$0xff]
    %v149 = vld [vmem:[#allocation3 + $0x22a] sm:$0x3f]
    %v150 = vld [vmem:[#allocation3 + $0x230] sm:$0xff]
    %v151 = vld [vmem:[#allocation3 + $0x238] sm:$0x3f]
    %v152 = vld [vmem:[#allocation3 + $0x23e] sm:$0xff]
    %v153 = vld [vmem:[#allocation3 + $0x246] sm:$0x3f]
    %v154 = vld [vmem:[#allocation3 + $0x24c] sm:$0xff]
    %v155 = vld [vmem:[#allocation3 + $0x254] sm:$0x3f]
    %v156 = vld [vmem:[#allocation3 + $0x25a] sm:$0xff]
    %v157 = vld [vmem:[#allocation3 + $0x262] sm:$0x3f]
    %v158 = vld [vmem:[#allocation3 + $0x268] sm:$0xff]
    %v159 = vld [vmem:[#allocation3 + $0x270] sm:$0x3f]
    %v160 = vld [vmem:[#allocation3 + $0x276] sm:$0xff]
    %v161 = vld [vmem:[#allocation3 + $0x27e] sm:$0x3f]
    %v162 = vld [vmem:[#allocation3 + $0x284] sm:$0xff]
    %v163 = vld [vmem:[#allocation3 + $0x28c] sm:$0x3f]
    %v164 = vld [vmem:[#allocation3 + $0x292] sm:$0xff]
    %v165 = vld [vmem:[#allocation3 + $0x29a] sm:$0x3f]
    %v166 = vld [vmem:[#allocation3 + $0x2a0] sm:$0xff]
    %v167 = vld [vmem:[#allocation3 + $0x2a8] sm:$0x3f]
    %v168 = vld [vmem:[#allocation3 + $0x2ae] sm:$0xff]
    %v169 = vld [vmem:[#allocation3 + $0x2b6] sm:$0x3f]
    %v170 = vld [vmem:[#allocation3 + $0x2bc] sm:$0xff]
    %v171 = vld [vmem:[#allocation3 + $0x2c4] sm:$0x3f]
    %v172 = vld [vmem:[#allocation3 + $0x2ca] sm:$0xff]
    %v173 = vld [vmem:[#allocation3 + $0x2d2] sm:$0x3f]
    %v174 = vld [vmem:[#allocation3 + $0x2d8] sm:$0xff]
    %v175 = vld [vmem:[#allocation3 + $0x2e0] sm:$0x3f]
    %v176 = vld [vmem:[#allocation3 + $0x2e6] sm:$0xff]
    %v177 = vld [vmem:[#allocation3 + $0x2ee] sm:$0x3f]
    %v178 = vld [vmem:[#allocation3 + $0x2f4] sm:$0xff]
    %v179 = vld [vmem:[#allocation3 + $0x2fc] sm:$0x3f]
    %v180 = vld [vmem:[#allocation3 + $0x302] sm:$0xff]
    %v181 = vld [vmem:[#allocation3 + $0x30a] sm:$0x3f]
    %v182 = vld [vmem:[#allocation3 + $0x310] sm:$0xff]
    %v183 = vld [vmem:[#allocation3 + $0x318] sm:$0x3f]
    %v184 = vld [vmem:[#allocation3 + $0x31e] sm:$0xff]
    %v185 = vld [vmem:[#allocation3 + $0x326] sm:$0x3f]
    %v186 = vld [vmem:[#allocation3 + $0x32c] sm:$0xff]
    %v187 = vld [vmem:[#allocation3 + $0x334] sm:$0x3f]
    %v188 = vld [vmem:[#allocation3 + $0x33a] sm:$0xff]
    %v189 = vld [vmem:[#allocation3 + $0x342] sm:$0x3f]
    %v190 = vld [vmem:[#allocation3 + $0x348] sm:$0xff]
    %v191 = vld [vmem:[#allocation3 + $0x350] sm:$0x3f]
    %v192 = vld [vmem:[#allocation3 + $0x356] sm:$0xff]
    %v193 = vld [vmem:[#allocation3 + $0x35e] sm:$0x3f]
    %v194 = vld [vmem:[#allocation3 + $0x364] sm:$0xff]
    %v195 = vld [vmem:[#allocation3 + $0x36c] sm:$0x3f]
    %v196 = vld [vmem:[#allocation3 + $0x372] sm:$0xff]
    %v197 = vld [vmem:[#allocation3 + $0x37a] sm:$0x3f]
    %v326 = vcombine.low %v70, %v72
    %v327 = vcombine.high %v70, %v72
    %v328 = vcombine.low %v74, %v76
    %v329 = vcombine.high %v74, %v76
    %v331 = vunpack.c.l.s4 1983009808
    %v332 = vunpack.c.0.s8 %v331
    %v333 = vlaneseq
    %v334 = vshrl.u32 %v333, 7
    %v335 = vsub.s32 %v332, %v334
    %v336 = vrot.slane %v326, %v335
    %v338 = vunpack.c.l.s4 1983009808
    %v339 = vunpack.c.0.s8 %v338
    %v340 = vlaneseq
    %v341 = vshrl.u32 %v340, 7
    %v342 = vsub.s32 %v339, %v341
    %v343 = vrot.slane %v327, %v342
    %v345 = vunpack.c.l.s4 1983009808
    %v346 = vunpack.c.0.s8 %v345
    %v347 = vlaneseq
    %v348 = vshrl.u32 %v347, 7
    %v349 = vsub.s32 %v346, %v348
    %v350 = vrot.slane %v328, %v349
    %v352 = vunpack.c.l.s4 1983009808
    %v353 = vunpack.c.0.s8 %v352
    %v354 = vlaneseq
    %v355 = vshrl.u32 %v354, 7
    %v356 = vsub.s32 %v353, %v355
    %v357 = vrot.slane %v329, %v356
    %v358 = vcombine.low %v336, %v350
    %v359 = vcombine.high %v336, %v350
    %v360 = vcombine.low %v343, %v357
    %v361 = vcombine.high %v343, %v357
    %v362 = vcombine.low %v71, %v73
    %v363 = vcombine.high %v71, %v73
    %v364 = vcombine.low %v75, %v77
    %v365 = vcombine.high %v75, %v77
    %v367 = vunpack.c.l.s4 1983009808
    %v368 = vunpack.c.0.s8 %v367
    %v369 = vlaneseq
    %v370 = vshrl.u32 %v369, 7
    %v371 = vsub.s32 %v368, %v370
    %v372 = vrot.slane %v362, %v371
    %v374 = vunpack.c.l.s4 1983009808
    %v375 = vunpack.c.0.s8 %v374
    %v376 = vlaneseq
    %v377 = vshrl.u32 %v376, 7
    %v378 = vsub.s32 %v375, %v377
    %v379 = vrot.slane %v363, %v378
    %v381 = vunpack.c.l.s4 1983009808
    %v382 = vunpack.c.0.s8 %v381
    %v383 = vlaneseq
    %v384 = vshrl.u32 %v383, 7
    %v385 = vsub.s32 %v382, %v384
    %v386 = vrot.slane %v364, %v385
    %v388 = vunpack.c.l.s4 1983009808
    %v389 = vunpack.c.0.s8 %v388
    %v390 = vlaneseq
    %v391 = vshrl.u32 %v390, 7
    %v392 = vsub.s32 %v389, %v391
    %v393 = vrot.slane %v365, %v392
    %v394 = vcombine.low %v372, %v386
    %v395 = vcombine.high %v372, %v386
    %v396 = vcombine.low %v379, %v393
    %v397 = vcombine.low %v78, %v80
    %v398 = vcombine.high %v78, %v80
    %v399 = vcombine.low %v82, %v84
    %v400 = vcombine.high %v82, %v84
    %v402 = vunpack.c.l.s4 1983009808
    %v403 = vunpack.c.0.s8 %v402
    %v404 = vlaneseq
    %v405 = vshrl.u32 %v404, 7
    %v406 = vsub.s32 %v403, %v405
    %v407 = vrot.slane %v397, %v406
    %v409 = vunpack.c.l.s4 1983009808
    %v410 = vunpack.c.0.s8 %v409
    %v411 = vlaneseq
    %v412 = vshrl.u32 %v411, 7
    %v413 = vsub.s32 %v410, %v412
    %v414 = vrot.slane %v398, %v413
    %v416 = vunpack.c.l.s4 1983009808
    %v417 = vunpack.c.0.s8 %v416
    %v418 = vlaneseq
    %v419 = vshrl.u32 %v418, 7
    %v420 = vsub.s32 %v417, %v419
    %v421 = vrot.slane %v399, %v420
    %v423 = vunpack.c.l.s4 1983009808
    %v424 = vunpack.c.0.s8 %v423
    %v425 = vlaneseq
    %v426 = vshrl.u32 %v425, 7
    %v427 = vsub.s32 %v424, %v426
    %v428 = vrot.slane %v400, %v427
    %v429 = vcombine.low %v407, %v421
    %v430 = vcombine.high %v407, %v421
    %v431 = vcombine.low %v414, %v428
    %v432 = vcombine.high %v414, %v428
    %v433 = vcombine.low %v79, %v81
    %v434 = vcombine.high %v79, %v81
    %v435 = vcombine.low %v83, %v85
    %v436 = vcombine.high %v83, %v85
    %v438 = vunpack.c.l.s4 1983009808
    %v439 = vunpack.c.0.s8 %v438
    %v440 = vlaneseq
    %v441 = vshrl.u32 %v440, 7
    %v442 = vsub.s32 %v439, %v441
    %v443 = vrot.slane %v433, %v442
    %v445 = vunpack.c.l.s4 1983009808
    %v446 = vunpack.c.0.s8 %v445
    %v447 = vlaneseq
    %v448 = vshrl.u32 %v447, 7
    %v449 = vsub.s32 %v446, %v448
    %v450 = vrot.slane %v434, %v449
    %v452 = vunpack.c.l.s4 1983009808
    %v453 = vunpack.c.0.s8 %v452
    %v454 = vlaneseq
    %v455 = vshrl.u32 %v454, 7
    %v456 = vsub.s32 %v453, %v455
    %v457 = vrot.slane %v435, %v456
    %v459 = vunpack.c.l.s4 1983009808
    %v460 = vunpack.c.0.s8 %v459
    %v461 = vlaneseq
    %v462 = vshrl.u32 %v461, 7
    %v463 = vsub.s32 %v460, %v462
    %v464 = vrot.slane %v436, %v463
    %v465 = vcombine.low %v443, %v457
    %v466 = vcombine.high %v443, %v457
    %v467 = vcombine.low %v450, %v464
    %v468 = vcombine.low %v86, %v88
    %v469 = vcombine.high %v86, %v88
    %v470 = vcombine.low %v90, %v92
    %v471 = vcombine.high %v90, %v92
    %v473 = vunpack.c.l.s4 1983009808
    %v474 = vunpack.c.0.s8 %v473
    %v475 = vlaneseq
    %v476 = vshrl.u32 %v475, 7
    %v477 = vsub.s32 %v474, %v476
    %v478 = vrot.slane %v468, %v477
    %v480 = vunpack.c.l.s4 1983009808
    %v481 = vunpack.c.0.s8 %v480
    %v482 = vlaneseq
    %v483 = vshrl.u32 %v482, 7
    %v484 = vsub.s32 %v481, %v483
    %v485 = vrot.slane %v469, %v484
    %v487 = vunpack.c.l.s4 1983009808
    %v488 = vunpack.c.0.s8 %v487
    %v489 = vlaneseq
    %v490 = vshrl.u32 %v489, 7
    %v491 = vsub.s32 %v488, %v490
    %v492 = vrot.slane %v470, %v491
    %v494 = vunpack.c.l.s4 1983009808
    %v495 = vunpack.c.0.s8 %v494
    %v496 = vlaneseq
    %v497 = vshrl.u32 %v496, 7
    %v498 = vsub.s32 %v495, %v497
    %v499 = vrot.slane %v471, %v498
    %v500 = vcombine.low %v478, %v492
    %v501 = vcombine.high %v478, %v492
    %v502 = vcombine.low %v485, %v499
    %v503 = vcombine.high %v485, %v499
    %v504 = vcombine.low %v87, %v89
    %v505 = vcombine.high %v87, %v89
    %v506 = vcombine.low %v91, %v93
    %v507 = vcombine.high %v91, %v93
    %v509 = vunpack.c.l.s4 1983009808
    %v510 = vunpack.c.0.s8 %v509
    %v511 = vlaneseq
    %v512 = vshrl.u32 %v511, 7
    %v513 = vsub.s32 %v510, %v512
    %v514 = vrot.slane %v504, %v513
    %v516 = vunpack.c.l.s4 1983009808
    %v517 = vunpack.c.0.s8 %v516
    %v518 = vlaneseq
    %v519 = vshrl.u32 %v518, 7
    %v520 = vsub.s32 %v517, %v519
    %v521 = vrot.slane %v505, %v520
    %v523 = vunpack.c.l.s4 1983009808
    %v524 = vunpack.c.0.s8 %v523
    %v525 = vlaneseq
    %v526 = vshrl.u32 %v525, 7
    %v527 = vsub.s32 %v524, %v526
    %v528 = vrot.slane %v506, %v527
    %v530 = vunpack.c.l.s4 1983009808
    %v531 = vunpack.c.0.s8 %v530
    %v532 = vlaneseq
    %v533 = vshrl.u32 %v532, 7
    %v534 = vsub.s32 %v531, %v533
    %v535 = vrot.slane %v507, %v534
    %v536 = vcombine.low %v514, %v528
    %v537 = vcombine.high %v514, %v528
    %v538 = vcombine.low %v521, %v535
    %v539 = vcombine.low %v94, %v96
    %v540 = vcombine.high %v94, %v96
    %v541 = vcombine.low %v98, %v100
    %v542 = vcombine.high %v98, %v100
    %v544 = vunpack.c.l.s4 1983009808
    %v545 = vunpack.c.0.s8 %v544
    %v546 = vlaneseq
    %v547 = vshrl.u32 %v546, 7
    %v548 = vsub.s32 %v545, %v547
    %v549 = vrot.slane %v539, %v548
    %v551 = vunpack.c.l.s4 1983009808
    %v552 = vunpack.c.0.s8 %v551
    %v553 = vlaneseq
    %v554 = vshrl.u32 %v553, 7
    %v555 = vsub.s32 %v552, %v554
    %v556 = vrot.slane %v540, %v555
    %v558 = vunpack.c.l.s4 1983009808
    %v559 = vunpack.c.0.s8 %v558
    %v560 = vlaneseq
    %v561 = vshrl.u32 %v560, 7
    %v562 = vsub.s32 %v559, %v561
    %v563 = vrot.slane %v541, %v562
    %v565 = vunpack.c.l.s4 1983009808
    %v566 = vunpack.c.0.s8 %v565
    %v567 = vlaneseq
    %v568 = vshrl.u32 %v567, 7
    %v569 = vsub.s32 %v566, %v568
    %v570 = vrot.slane %v542, %v569
    %v571 = vcombine.low %v549, %v563
    %v572 = vcombine.high %v549, %v563
    %v573 = vcombine.low %v556, %v570
    %v574 = vcombine.high %v556, %v570
    %v575 = vcombine.low %v95, %v97
    %v576 = vcombine.high %v95, %v97
    %v577 = vcombine.low %v99, %v101
    %v578 = vcombine.high %v99, %v101
    %v580 = vunpack.c.l.s4 1983009808
    %v581 = vunpack.c.0.s8 %v580
    %v582 = vlaneseq
    %v583 = vshrl.u32 %v582, 7
    %v584 = vsub.s32 %v581, %v583
    %v585 = vrot.slane %v575, %v584
    %v587 = vunpack.c.l.s4 1983009808
    %v588 = vunpack.c.0.s8 %v587
    %v589 = vlaneseq
    %v590 = vshrl.u32 %v589, 7
    %v591 = vsub.s32 %v588, %v590
    %v592 = vrot.slane %v576, %v591
    %v594 = vunpack.c.l.s4 1983009808
    %v595 = vunpack.c.0.s8 %v594
    %v596 = vlaneseq
    %v597 = vshrl.u32 %v596, 7
    %v598 = vsub.s32 %v595, %v597
    %v599 = vrot.slane %v577, %v598
    %v601 = vunpack.c.l.s4 1983009808
    %v602 = vunpack.c.0.s8 %v601
    %v603 = vlaneseq
    %v604 = vshrl.u32 %v603, 7
    %v605 = vsub.s32 %v602, %v604
    %v606 = vrot.slane %v578, %v605
    %v607 = vcombine.low %v585, %v599
    %v608 = vcombine.high %v585, %v599
    %v609 = vcombine.low %v592, %v606
    %v610 = vcombine.low %v102, %v104
    %v611 = vcombine.high %v102, %v104
    %v612 = vcombine.low %v106, %v108
    %v613 = vcombine.high %v106, %v108
    %v615 = vunpack.c.l.s4 1983009808
    %v616 = vunpack.c.0.s8 %v615
    %v617 = vlaneseq
    %v618 = vshrl.u32 %v617, 7
    %v619 = vsub.s32 %v616, %v618
    %v620 = vrot.slane %v610, %v619
    %v622 = vunpack.c.l.s4 1983009808
    %v623 = vunpack.c.0.s8 %v622
    %v624 = vlaneseq
    %v625 = vshrl.u32 %v624, 7
    %v626 = vsub.s32 %v623, %v625
    %v627 = vrot.slane %v611, %v626
    %v629 = vunpack.c.l.s4 1983009808
    %v630 = vunpack.c.0.s8 %v629
    %v631 = vlaneseq
    %v632 = vshrl.u32 %v631, 7
    %v633 = vsub.s32 %v630, %v632
    %v634 = vrot.slane %v612, %v633
    %v636 = vunpack.c.l.s4 1983009808
    %v637 = vunpack.c.0.s8 %v636
    %v638 = vlaneseq
    %v639 = vshrl.u32 %v638, 7
    %v640 = vsub.s32 %v637, %v639
    %v641 = vrot.slane %v613, %v640
    %v642 = vcombine.low %v620, %v634
    %v643 = vcombine.high %v620, %v634
    %v644 = vcombine.low %v627, %v641
    %v645 = vcombine.high %v627, %v641
    %v646 = vcombine.low %v103, %v105
    %v647 = vcombine.high %v103, %v105
    %v648 = vcombine.low %v107, %v109
    %v649 = vcombine.high %v107, %v109
    %v651 = vunpack.c.l.s4 1983009808
    %v652 = vunpack.c.0.s8 %v651
    %v653 = vlaneseq
    %v654 = vshrl.u32 %v653, 7
    %v655 = vsub.s32 %v652, %v654
    %v656 = vrot.slane %v646, %v655
    %v658 = vunpack.c.l.s4 1983009808
    %v659 = vunpack.c.0.s8 %v658
    %v660 = vlaneseq
    %v661 = vshrl.u32 %v660, 7
    %v662 = vsub.s32 %v659, %v661
    %v663 = vrot.slane %v647, %v662
    %v665 = vunpack.c.l.s4 1983009808
    %v666 = vunpack.c.0.s8 %v665
    %v667 = vlaneseq
    %v668 = vshrl.u32 %v667, 7
    %v669 = vsub.s32 %v666, %v668
    %v670 = vrot.slane %v648, %v669
    %v672 = vunpack.c.l.s4 1983009808
    %v673 = vunpack.c.0.s8 %v672
    %v674 = vlaneseq
    %v675 = vshrl.u32 %v674, 7
    %v676 = vsub.s32 %v673, %v675
    %v677 = vrot.slane %v649, %v676
    %v678 = vcombine.low %v656, %v670
    %v679 = vcombine.high %v656, %v670
    %v680 = vcombine.low %v663, %v677
    %v681 = vcombine.low %v110, %v112
    %v682 = vcombine.high %v110, %v112
    %v683 = vcombine.low %v114, %v116
    %v684 = vcombine.high %v114, %v116
    %v686 = vunpack.c.l.s4 1983009808
    %v687 = vunpack.c.0.s8 %v686
    %v688 = vlaneseq
    %v689 = vshrl.u32 %v688, 7
    %v690 = vsub.s32 %v687, %v689
    %v691 = vrot.slane %v681, %v690
    %v693 = vunpack.c.l.s4 1983009808
    %v694 = vunpack.c.0.s8 %v693
    %v695 = vlaneseq
    %v696 = vshrl.u32 %v695, 7
    %v697 = vsub.s32 %v694, %v696
    %v698 = vrot.slane %v682, %v697
    %v700 = vunpack.c.l.s4 1983009808
    %v701 = vunpack.c.0.s8 %v700
    %v702 = vlaneseq
    %v703 = vshrl.u32 %v702, 7
    %v704 = vsub.s32 %v701, %v703
    %v705 = vrot.slane %v683, %v704
    %v707 = vunpack.c.l.s4 1983009808
    %v708 = vunpack.c.0.s8 %v707
    %v709 = vlaneseq
    %v710 = vshrl.u32 %v709, 7
    %v711 = vsub.s32 %v708, %v710
    %v712 = vrot.slane %v684, %v711
    %v713 = vcombine.low %v691, %v705
    %v714 = vcombine.high %v691, %v705
    %v715 = vcombine.low %v698, %v712
    %v716 = vcombine.high %v698, %v712
    %v717 = vcombine.low %v111, %v113
    %v718 = vcombine.high %v111, %v113
    %v719 = vcombine.low %v115, %v117
    %v720 = vcombine.high %v115, %v117
    %v722 = vunpack.c.l.s4 1983009808
    %v723 = vunpack.c.0.s8 %v722
    %v724 = vlaneseq
    %v725 = vshrl.u32 %v724, 7
    %v726 = vsub.s32 %v723, %v725
    %v727 = vrot.slane %v717, %v726
    %v729 = vunpack.c.l.s4 1983009808
    %v730 = vunpack.c.0.s8 %v729
    %v731 = vlaneseq
    %v732 = vshrl.u32 %v731, 7
    %v733 = vsub.s32 %v730, %v732
    %v734 = vrot.slane %v718, %v733
    %v736 = vunpack.c.l.s4 1983009808
    %v737 = vunpack.c.0.s8 %v736
    %v738 = vlaneseq
    %v739 = vshrl.u32 %v738, 7
    %v740 = vsub.s32 %v737, %v739
    %v741 = vrot.slane %v719, %v740
    %v743 = vunpack.c.l.s4 1983009808
    %v744 = vunpack.c.0.s8 %v743
    %v745 = vlaneseq
    %v746 = vshrl.u32 %v745, 7
    %v747 = vsub.s32 %v744, %v746
    %v748 = vrot.slane %v720, %v747
    %v749 = vcombine.low %v727, %v741
    %v750 = vcombine.high %v727, %v741
    %v751 = vcombine.low %v734, %v748
    %v752 = vcombine.low %v118, %v120
    %v753 = vcombine.high %v118, %v120
    %v754 = vcombine.low %v122, %v124
    %v755 = vcombine.high %v122, %v124
    %v757 = vunpack.c.l.s4 1983009808
    %v758 = vunpack.c.0.s8 %v757
    %v759 = vlaneseq
    %v760 = vshrl.u32 %v759, 7
    %v761 = vsub.s32 %v758, %v760
    %v762 = vrot.slane %v752, %v761
    %v764 = vunpack.c.l.s4 1983009808
    %v765 = vunpack.c.0.s8 %v764
    %v766 = vlaneseq
    %v767 = vshrl.u32 %v766, 7
    %v768 = vsub.s32 %v765, %v767
    %v769 = vrot.slane %v753, %v768
    %v771 = vunpack.c.l.s4 1983009808
    %v772 = vunpack.c.0.s8 %v771
    %v773 = vlaneseq
    %v774 = vshrl.u32 %v773, 7
    %v775 = vsub.s32 %v772, %v774
    %v776 = vrot.slane %v754, %v775
    %v778 = vunpack.c.l.s4 1983009808
    %v779 = vunpack.c.0.s8 %v778
    %v780 = vlaneseq
    %v781 = vshrl.u32 %v780, 7
    %v782 = vsub.s32 %v779, %v781
    %v783 = vrot.slane %v755, %v782
    %v784 = vcombine.low %v762, %v776
    %v785 = vcombine.high %v762, %v776
    %v786 = vcombine.low %v769, %v783
    %v787 = vcombine.high %v769, %v783
    %v788 = vcombine.low %v119, %v121
    %v789 = vcombine.high %v119, %v121
    %v790 = vcombine.low %v123, %v125
    %v791 = vcombine.high %v123, %v125
    %v793 = vunpack.c.l.s4 1983009808
    %v794 = vunpack.c.0.s8 %v793
    %v795 = vlaneseq
    %v796 = vshrl.u32 %v795, 7
    %v797 = vsub.s32 %v794, %v796
    %v798 = vrot.slane %v788, %v797
    %v800 = vunpack.c.l.s4 1983009808
    %v801 = vunpack.c.0.s8 %v800
    %v802 = vlaneseq
    %v803 = vshrl.u32 %v802, 7
    %v804 = vsub.s32 %v801, %v803
    %v805 = vrot.slane %v789, %v804
    %v807 = vunpack.c.l.s4 1983009808
    %v808 = vunpack.c.0.s8 %v807
    %v809 = vlaneseq
    %v810 = vshrl.u32 %v809, 7
    %v811 = vsub.s32 %v808, %v810
    %v812 = vrot.slane %v790, %v811
    %v814 = vunpack.c.l.s4 1983009808
    %v815 = vunpack.c.0.s8 %v814
    %v816 = vlaneseq
    %v817 = vshrl.u32 %v816, 7
    %v818 = vsub.s32 %v815, %v817
    %v819 = vrot.slane %v791, %v818
    %v820 = vcombine.low %v798, %v812
    %v821 = vcombine.high %v798, %v812
    %v822 = vcombine.low %v805, %v819
    %v823 = vcombine.low %v126, %v128
    %v824 = vcombine.high %v126, %v128
    %v825 = vcombine.low %v130, %v132
    %v826 = vcombine.high %v130, %v132
    %v828 = vunpack.c.l.s4 1983009808
    %v829 = vunpack.c.0.s8 %v828
    %v830 = vlaneseq
    %v831 = vshrl.u32 %v830, 7
    %v832 = vsub.s32 %v829, %v831
    %v833 = vrot.slane %v823, %v832
    %v835 = vunpack.c.l.s4 1983009808
    %v836 = vunpack.c.0.s8 %v835
    %v837 = vlaneseq
    %v838 = vshrl.u32 %v837, 7
    %v839 = vsub.s32 %v836, %v838
    %v840 = vrot.slane %v824, %v839
    %v842 = vunpack.c.l.s4 1983009808
    %v843 = vunpack.c.0.s8 %v842
    %v844 = vlaneseq
    %v845 = vshrl.u32 %v844, 7
    %v846 = vsub.s32 %v843, %v845
    %v847 = vrot.slane %v825, %v846
    %v849 = vunpack.c.l.s4 1983009808
    %v850 = vunpack.c.0.s8 %v849
    %v851 = vlaneseq
    %v852 = vshrl.u32 %v851, 7
    %v853 = vsub.s32 %v850, %v852
    %v854 = vrot.slane %v826, %v853
    %v855 = vcombine.low %v833, %v847
    %v856 = vcombine.high %v833, %v847
    %v857 = vcombine.low %v840, %v854
    %v858 = vcombine.high %v840, %v854
    %v859 = vcombine.low %v127, %v129
    %v860 = vcombine.high %v127, %v129
    %v861 = vcombine.low %v131, %v133
    %v862 = vcombine.high %v131, %v133
    %v864 = vunpack.c.l.s4 1983009808
    %v865 = vunpack.c.0.s8 %v864
    %v866 = vlaneseq
    %v867 = vshrl.u32 %v866, 7
    %v868 = vsub.s32 %v865, %v867
    %v869 = vrot.slane %v859, %v868
    %v871 = vunpack.c.l.s4 1983009808
    %v872 = vunpack.c.0.s8 %v871
    %v873 = vlaneseq
    %v874 = vshrl.u32 %v873, 7
    %v875 = vsub.s32 %v872, %v874
    %v876 = vrot.slane %v860, %v875
    %v878 = vunpack.c.l.s4 1983009808
    %v879 = vunpack.c.0.s8 %v878
    %v880 = vlaneseq
    %v881 = vshrl.u32 %v880, 7
    %v882 = vsub.s32 %v879, %v881
    %v883 = vrot.slane %v861, %v882
    %v885 = vunpack.c.l.s4 1983009808
    %v886 = vunpack.c.0.s8 %v885
    %v887 = vlaneseq
    %v888 = vshrl.u32 %v887, 7
    %v889 = vsub.s32 %v886, %v888
    %v890 = vrot.slane %v862, %v889
    %v891 = vcombine.low %v869, %v883
    %v892 = vcombine.high %v869, %v883
    %v893 = vcombine.low %v876, %v890
    %v894 = vcombine.low %v134, %v136
    %v895 = vcombine.high %v134, %v136
    %v896 = vcombine.low %v138, %v140
    %v897 = vcombine.high %v138, %v140
    %v899 = vunpack.c.l.s4 1983009808
    %v900 = vunpack.c.0.s8 %v899
    %v901 = vlaneseq
    %v902 = vshrl.u32 %v901, 7
    %v903 = vsub.s32 %v900, %v902
    %v904 = vrot.slane %v894, %v903
    %v906 = vunpack.c.l.s4 1983009808
    %v907 = vunpack.c.0.s8 %v906
    %v908 = vlaneseq
    %v909 = vshrl.u32 %v908, 7
    %v910 = vsub.s32 %v907, %v909
    %v911 = vrot.slane %v895, %v910
    %v913 = vunpack.c.l.s4 1983009808
    %v914 = vunpack.c.0.s8 %v913
    %v915 = vlaneseq
    %v916 = vshrl.u32 %v915, 7
    %v917 = vsub.s32 %v914, %v916
    %v918 = vrot.slane %v896, %v917
    %v920 = vunpack.c.l.s4 1983009808
    %v921 = vunpack.c.0.s8 %v920
    %v922 = vlaneseq
    %v923 = vshrl.u32 %v922, 7
    %v924 = vsub.s32 %v921, %v923
    %v925 = vrot.slane %v897, %v924
    %v926 = vcombine.low %v904, %v918
    %v927 = vcombine.high %v904, %v918
    %v928 = vcombine.low %v911, %v925
    %v929 = vcombine.high %v911, %v925
    %v930 = vcombine.low %v135, %v137
    %v931 = vcombine.high %v135, %v137
    %v932 = vcombine.low %v139, %v141
    %v933 = vcombine.high %v139, %v141
    %v935 = vunpack.c.l.s4 1983009808
    %v936 = vunpack.c.0.s8 %v935
    %v937 = vlaneseq
    %v938 = vshrl.u32 %v937, 7
    %v939 = vsub.s32 %v936, %v938
    %v940 = vrot.slane %v930, %v939
    %v942 = vunpack.c.l.s4 1983009808
    %v943 = vunpack.c.0.s8 %v942
    %v944 = vlaneseq
    %v945 = vshrl.u32 %v944, 7
    %v946 = vsub.s32 %v943, %v945
    %v947 = vrot.slane %v931, %v946
    %v949 = vunpack.c.l.s4 1983009808
    %v950 = vunpack.c.0.s8 %v949
    %v951 = vlaneseq
    %v952 = vshrl.u32 %v951, 7
    %v953 = vsub.s32 %v950, %v952
    %v954 = vrot.slane %v932, %v953
    %v956 = vunpack.c.l.s4 1983009808
    %v957 = vunpack.c.0.s8 %v956
    %v958 = vlaneseq
    %v959 = vshrl.u32 %v958, 7
    %v960 = vsub.s32 %v957, %v959
    %v961 = vrot.slane %v933, %v960
    %v962 = vcombine.low %v940, %v954
    %v963 = vcombine.high %v940, %v954
    %v964 = vcombine.low %v947, %v961
    %v965 = vcombine.low %v142, %v144
    %v966 = vcombine.high %v142, %v144
    %v967 = vcombine.low %v146, %v148
    %v968 = vcombine.high %v146, %v148
    %v970 = vunpack.c.l.s4 1983009808
    %v971 = vunpack.c.0.s8 %v970
    %v972 = vlaneseq
    %v973 = vshrl.u32 %v972, 7
    %v974 = vsub.s32 %v971, %v973
    %v975 = vrot.slane %v965, %v974
    %v977 = vunpack.c.l.s4 1983009808
    %v978 = vunpack.c.0.s8 %v977
    %v979 = vlaneseq
    %v980 = vshrl.u32 %v979, 7
    %v981 = vsub.s32 %v978, %v980
    %v982 = vrot.slane %v966, %v981
    %v984 = vunpack.c.l.s4 1983009808
    %v985 = vunpack.c.0.s8 %v984
    %v986 = vlaneseq
    %v987 = vshrl.u32 %v986, 7
    %v988 = vsub.s32 %v985, %v987
    %v989 = vrot.slane %v967, %v988
    %v991 = vunpack.c.l.s4 1983009808
    %v992 = vunpack.c.0.s8 %v991
    %v993 = vlaneseq
    %v994 = vshrl.u32 %v993, 7
    %v995 = vsub.s32 %v992, %v994
    %v996 = vrot.slane %v968, %v995
    %v997 = vcombine.low %v975, %v989
    %v998 = vcombine.high %v975, %v989
    %v999 = vcombine.low %v982, %v996
    %v1000 = vcombine.high %v982, %v996
    %v1001 = vcombine.low %v143, %v145
    %v1002 = vcombine.high %v143, %v145
    %v1003 = vcombine.low %v147, %v149
    %v1004 = vcombine.high %v147, %v149
    %v1006 = vunpack.c.l.s4 1983009808
    %v1007 = vunpack.c.0.s8 %v1006
    %v1008 = vlaneseq
    %v1009 = vshrl.u32 %v1008, 7
    %v1010 = vsub.s32 %v1007, %v1009
    %v1011 = vrot.slane %v1001, %v1010
    %v1013 = vunpack.c.l.s4 1983009808
    %v1014 = vunpack.c.0.s8 %v1013
    %v1015 = vlaneseq
    %v1016 = vshrl.u32 %v1015, 7
    %v1017 = vsub.s32 %v1014, %v1016
    %v1018 = vrot.slane %v1002, %v1017
    %v1020 = vunpack.c.l.s4 1983009808
    %v1021 = vunpack.c.0.s8 %v1020
    %v1022 = vlaneseq
    %v1023 = vshrl.u32 %v1022, 7
    %v1024 = vsub.s32 %v1021, %v1023
    %v1025 = vrot.slane %v1003, %v1024
    %v1027 = vunpack.c.l.s4 1983009808
    %v1028 = vunpack.c.0.s8 %v1027
    %v1029 = vlaneseq
    %v1030 = vshrl.u32 %v1029, 7
    %v1031 = vsub.s32 %v1028, %v1030
    %v1032 = vrot.slane %v1004, %v1031
    %v1033 = vcombine.low %v1011, %v1025
    %v1034 = vcombine.high %v1011, %v1025
    %v1035 = vcombine.low %v1018, %v1032
    %v1036 = vcombine.low %v150, %v152
    %v1037 = vcombine.high %v150, %v152
    %v1038 = vcombine.low %v154, %v156
    %v1039 = vcombine.high %v154, %v156
    %v1041 = vunpack.c.l.s4 1983009808
    %v1042 = vunpack.c.0.s8 %v1041
    %v1043 = vlaneseq
    %v1044 = vshrl.u32 %v1043, 7
    %v1045 = vsub.s32 %v1042, %v1044
    %v1046 = vrot.slane %v1036, %v1045
    %v1048 = vunpack.c.l.s4 1983009808
    %v1049 = vunpack.c.0.s8 %v1048
    %v1050 = vlaneseq
    %v1051 = vshrl.u32 %v1050, 7
    %v1052 = vsub.s32 %v1049, %v1051
    %v1053 = vrot.slane %v1037, %v1052
    %v1055 = vunpack.c.l.s4 1983009808
    %v1056 = vunpack.c.0.s8 %v1055
    %v1057 = vlaneseq
    %v1058 = vshrl.u32 %v1057, 7
    %v1059 = vsub.s32 %v1056, %v1058
    %v1060 = vrot.slane %v1038, %v1059
    %v1062 = vunpack.c.l.s4 1983009808
    %v1063 = vunpack.c.0.s8 %v1062
    %v1064 = vlaneseq
    %v1065 = vshrl.u32 %v1064, 7
    %v1066 = vsub.s32 %v1063, %v1065
    %v1067 = vrot.slane %v1039, %v1066
    %v1068 = vcombine.low %v1046, %v1060
    %v1069 = vcombine.high %v1046, %v1060
    %v1070 = vcombine.low %v1053, %v1067
    %v1071 = vcombine.high %v1053, %v1067
    %v1072 = vcombine.low %v151, %v153
    %v1073 = vcombine.high %v151, %v153
    %v1074 = vcombine.low %v155, %v157
    %v1075 = vcombine.high %v155, %v157
    %v1077 = vunpack.c.l.s4 1983009808
    %v1078 = vunpack.c.0.s8 %v1077
    %v1079 = vlaneseq
    %v1080 = vshrl.u32 %v1079, 7
    %v1081 = vsub.s32 %v1078, %v1080
    %v1082 = vrot.slane %v1072, %v1081
    %v1084 = vunpack.c.l.s4 1983009808
    %v1085 = vunpack.c.0.s8 %v1084
    %v1086 = vlaneseq
    %v1087 = vshrl.u32 %v1086, 7
    %v1088 = vsub.s32 %v1085, %v1087
    %v1089 = vrot.slane %v1073, %v1088
    %v1091 = vunpack.c.l.s4 1983009808
    %v1092 = vunpack.c.0.s8 %v1091
    %v1093 = vlaneseq
    %v1094 = vshrl.u32 %v1093, 7
    %v1095 = vsub.s32 %v1092, %v1094
    %v1096 = vrot.slane %v1074, %v1095
    %v1098 = vunpack.c.l.s4 1983009808
    %v1099 = vunpack.c.0.s8 %v1098
    %v1100 = vlaneseq
    %v1101 = vshrl.u32 %v1100, 7
    %v1102 = vsub.s32 %v1099, %v1101
    %v1103 = vrot.slane %v1075, %v1102
    %v1104 = vcombine.low %v1082, %v1096
    %v1105 = vcombine.high %v1082, %v1096
    %v1106 = vcombine.low %v1089, %v1103
    %v1107 = vcombine.low %v158, %v160
    %v1108 = vcombine.high %v158, %v160
    %v1109 = vcombine.low %v162, %v164
    %v1110 = vcombine.high %v162, %v164
    %v1112 = vunpack.c.l.s4 1983009808
    %v1113 = vunpack.c.0.s8 %v1112
    %v1114 = vlaneseq
    %v1115 = vshrl.u32 %v1114, 7
    %v1116 = vsub.s32 %v1113, %v1115
    %v1117 = vrot.slane %v1107, %v1116
    %v1119 = vunpack.c.l.s4 1983009808
    %v1120 = vunpack.c.0.s8 %v1119
    %v1121 = vlaneseq
    %v1122 = vshrl.u32 %v1121, 7
    %v1123 = vsub.s32 %v1120, %v1122
    %v1124 = vrot.slane %v1108, %v1123
    %v1126 = vunpack.c.l.s4 1983009808
    %v1127 = vunpack.c.0.s8 %v1126
    %v1128 = vlaneseq
    %v1129 = vshrl.u32 %v1128, 7
    %v1130 = vsub.s32 %v1127, %v1129
    %v1131 = vrot.slane %v1109, %v1130
    %v1133 = vunpack.c.l.s4 1983009808
    %v1134 = vunpack.c.0.s8 %v1133
    %v1135 = vlaneseq
    %v1136 = vshrl.u32 %v1135, 7
    %v1137 = vsub.s32 %v1134, %v1136
    %v1138 = vrot.slane %v1110, %v1137
    %v1139 = vcombine.low %v1117, %v1131
    %v1140 = vcombine.high %v1117, %v1131
    %v1141 = vcombine.low %v1124, %v1138
    %v1142 = vcombine.high %v1124, %v1138
    %v1143 = vcombine.low %v159, %v161
    %v1144 = vcombine.high %v159, %v161
    %v1145 = vcombine.low %v163, %v165
    %v1146 = vcombine.high %v163, %v165
    %v1148 = vunpack.c.l.s4 1983009808
    %v1149 = vunpack.c.0.s8 %v1148
    %v1150 = vlaneseq
    %v1151 = vshrl.u32 %v1150, 7
    %v1152 = vsub.s32 %v1149, %v1151
    %v1153 = vrot.slane %v1143, %v1152
    %v1155 = vunpack.c.l.s4 1983009808
    %v1156 = vunpack.c.0.s8 %v1155
    %v1157 = vlaneseq
    %v1158 = vshrl.u32 %v1157, 7
    %v1159 = vsub.s32 %v1156, %v1158
    %v1160 = vrot.slane %v1144, %v1159
    %v1162 = vunpack.c.l.s4 1983009808
    %v1163 = vunpack.c.0.s8 %v1162
    %v1164 = vlaneseq
    %v1165 = vshrl.u32 %v1164, 7
    %v1166 = vsub.s32 %v1163, %v1165
    %v1167 = vrot.slane %v1145, %v1166
    %v1169 = vunpack.c.l.s4 1983009808
    %v1170 = vunpack.c.0.s8 %v1169
    %v1171 = vlaneseq
    %v1172 = vshrl.u32 %v1171, 7
    %v1173 = vsub.s32 %v1170, %v1172
    %v1174 = vrot.slane %v1146, %v1173
    %v1175 = vcombine.low %v1153, %v1167
    %v1176 = vcombine.high %v1153, %v1167
    %v1177 = vcombine.low %v1160, %v1174
    %v1178 = vcombine.low %v166, %v168
    %v1179 = vcombine.high %v166, %v168
    %v1180 = vcombine.low %v170, %v172
    %v1181 = vcombine.high %v170, %v172
    %v1183 = vunpack.c.l.s4 1983009808
    %v1184 = vunpack.c.0.s8 %v1183
    %v1185 = vlaneseq
    %v1186 = vshrl.u32 %v1185, 7
    %v1187 = vsub.s32 %v1184, %v1186
    %v1188 = vrot.slane %v1178, %v1187
    %v1190 = vunpack.c.l.s4 1983009808
    %v1191 = vunpack.c.0.s8 %v1190
    %v1192 = vlaneseq
    %v1193 = vshrl.u32 %v1192, 7
    %v1194 = vsub.s32 %v1191, %v1193
    %v1195 = vrot.slane %v1179, %v1194
    %v1197 = vunpack.c.l.s4 1983009808
    %v1198 = vunpack.c.0.s8 %v1197
    %v1199 = vlaneseq
    %v1200 = vshrl.u32 %v1199, 7
    %v1201 = vsub.s32 %v1198, %v1200
    %v1202 = vrot.slane %v1180, %v1201
    %v1204 = vunpack.c.l.s4 1983009808
    %v1205 = vunpack.c.0.s8 %v1204
    %v1206 = vlaneseq
    %v1207 = vshrl.u32 %v1206, 7
    %v1208 = vsub.s32 %v1205, %v1207
    %v1209 = vrot.slane %v1181, %v1208
    %v1210 = vcombine.low %v1188, %v1202
    %v1211 = vcombine.high %v1188, %v1202
    %v1212 = vcombine.low %v1195, %v1209
    %v1213 = vcombine.high %v1195, %v1209
    %v1214 = vcombine.low %v167, %v169
    %v1215 = vcombine.high %v167, %v169
    %v1216 = vcombine.low %v171, %v173
    %v1217 = vcombine.high %v171, %v173
    %v1219 = vunpack.c.l.s4 1983009808
    %v1220 = vunpack.c.0.s8 %v1219
    %v1221 = vlaneseq
    %v1222 = vshrl.u32 %v1221, 7
    %v1223 = vsub.s32 %v1220, %v1222
    %v1224 = vrot.slane %v1214, %v1223
    %v1226 = vunpack.c.l.s4 1983009808
    %v1227 = vunpack.c.0.s8 %v1226
    %v1228 = vlaneseq
    %v1229 = vshrl.u32 %v1228, 7
    %v1230 = vsub.s32 %v1227, %v1229
    %v1231 = vrot.slane %v1215, %v1230
    %v1233 = vunpack.c.l.s4 1983009808
    %v1234 = vunpack.c.0.s8 %v1233
    %v1235 = vlaneseq
    %v1236 = vshrl.u32 %v1235, 7
    %v1237 = vsub.s32 %v1234, %v1236
    %v1238 = vrot.slane %v1216, %v1237
    %v1240 = vunpack.c.l.s4 1983009808
    %v1241 = vunpack.c.0.s8 %v1240
    %v1242 = vlaneseq
    %v1243 = vshrl.u32 %v1242, 7
    %v1244 = vsub.s32 %v1241, %v1243
    %v1245 = vrot.slane %v1217, %v1244
    %v1246 = vcombine.low %v1224, %v1238
    %v1247 = vcombine.high %v1224, %v1238
    %v1248 = vcombine.low %v1231, %v1245
    %v1249 = vcombine.low %v174, %v176
    %v1250 = vcombine.high %v174, %v176
    %v1251 = vcombine.low %v178, %v180
    %v1252 = vcombine.high %v178, %v180
    %v1254 = vunpack.c.l.s4 1983009808
    %v1255 = vunpack.c.0.s8 %v1254
    %v1256 = vlaneseq
    %v1257 = vshrl.u32 %v1256, 7
    %v1258 = vsub.s32 %v1255, %v1257
    %v1259 = vrot.slane %v1249, %v1258
    %v1261 = vunpack.c.l.s4 1983009808
    %v1262 = vunpack.c.0.s8 %v1261
    %v1263 = vlaneseq
    %v1264 = vshrl.u32 %v1263, 7
    %v1265 = vsub.s32 %v1262, %v1264
    %v1266 = vrot.slane %v1250, %v1265
    %v1268 = vunpack.c.l.s4 1983009808
    %v1269 = vunpack.c.0.s8 %v1268
    %v1270 = vlaneseq
    %v1271 = vshrl.u32 %v1270, 7
    %v1272 = vsub.s32 %v1269, %v1271
    %v1273 = vrot.slane %v1251, %v1272
    %v1275 = vunpack.c.l.s4 1983009808
    %v1276 = vunpack.c.0.s8 %v1275
    %v1277 = vlaneseq
    %v1278 = vshrl.u32 %v1277, 7
    %v1279 = vsub.s32 %v1276, %v1278
    %v1280 = vrot.slane %v1252, %v1279
    %v1281 = vcombine.low %v1259, %v1273
    %v1282 = vcombine.high %v1259, %v1273
    %v1283 = vcombine.low %v1266, %v1280
    %v1284 = vcombine.high %v1266, %v1280
    %v1285 = vcombine.low %v175, %v177
    %v1286 = vcombine.high %v175, %v177
    %v1287 = vcombine.low %v179, %v181
    %v1288 = vcombine.high %v179, %v181
    %v1290 = vunpack.c.l.s4 1983009808
    %v1291 = vunpack.c.0.s8 %v1290
    %v1292 = vlaneseq
    %v1293 = vshrl.u32 %v1292, 7
    %v1294 = vsub.s32 %v1291, %v1293
    %v1295 = vrot.slane %v1285, %v1294
    %v1297 = vunpack.c.l.s4 1983009808
    %v1298 = vunpack.c.0.s8 %v1297
    %v1299 = vlaneseq
    %v1300 = vshrl.u32 %v1299, 7
    %v1301 = vsub.s32 %v1298, %v1300
    %v1302 = vrot.slane %v1286, %v1301
    %v1304 = vunpack.c.l.s4 1983009808
    %v1305 = vunpack.c.0.s8 %v1304
    %v1306 = vlaneseq
    %v1307 = vshrl.u32 %v1306, 7
    %v1308 = vsub.s32 %v1305, %v1307
    %v1309 = vrot.slane %v1287, %v1308
    %v1311 = vunpack.c.l.s4 1983009808
    %v1312 = vunpack.c.0.s8 %v1311
    %v1313 = vlaneseq
    %v1314 = vshrl.u32 %v1313, 7
    %v1315 = vsub.s32 %v1312, %v1314
    %v1316 = vrot.slane %v1288, %v1315
    %v1317 = vcombine.low %v1295, %v1309
    %v1318 = vcombine.high %v1295, %v1309
    %v1319 = vcombine.low %v1302, %v1316
    %v1320 = vcombine.low %v182, %v184
    %v1321 = vcombine.high %v182, %v184
    %v1322 = vcombine.low %v186, %v188
    %v1323 = vcombine.high %v186, %v188
    %v1325 = vunpack.c.l.s4 1983009808
    %v1326 = vunpack.c.0.s8 %v1325
    %v1327 = vlaneseq
    %v1328 = vshrl.u32 %v1327, 7
    %v1329 = vsub.s32 %v1326, %v1328
    %v1330 = vrot.slane %v1320, %v1329
    %v1332 = vunpack.c.l.s4 1983009808
    %v1333 = vunpack.c.0.s8 %v1332
    %v1334 = vlaneseq
    %v1335 = vshrl.u32 %v1334, 7
    %v1336 = vsub.s32 %v1333, %v1335
    %v1337 = vrot.slane %v1321, %v1336
    %v1339 = vunpack.c.l.s4 1983009808
    %v1340 = vunpack.c.0.s8 %v1339
    %v1341 = vlaneseq
    %v1342 = vshrl.u32 %v1341, 7
    %v1343 = vsub.s32 %v1340, %v1342
    %v1344 = vrot.slane %v1322, %v1343
    %v1346 = vunpack.c.l.s4 1983009808
    %v1347 = vunpack.c.0.s8 %v1346
    %v1348 = vlaneseq
    %v1349 = vshrl.u32 %v1348, 7
    %v1350 = vsub.s32 %v1347, %v1349
    %v1351 = vrot.slane %v1323, %v1350
    %v1352 = vcombine.low %v1330, %v1344
    %v1353 = vcombine.high %v1330, %v1344
    %v1354 = vcombine.low %v1337, %v1351
    %v1355 = vcombine.high %v1337, %v1351
    %v1356 = vcombine.low %v183, %v185
    %v1357 = vcombine.high %v183, %v185
    %v1358 = vcombine.low %v187, %v189
    %v1359 = vcombine.high %v187, %v189
    %v1361 = vunpack.c.l.s4 1983009808
    %v1362 = vunpack.c.0.s8 %v1361
    %v1363 = vlaneseq
    %v1364 = vshrl.u32 %v1363, 7
    %v1365 = vsub.s32 %v1362, %v1364
    %v1366 = vrot.slane %v1356, %v1365
    %v1368 = vunpack.c.l.s4 1983009808
    %v1369 = vunpack.c.0.s8 %v1368
    %v1370 = vlaneseq
    %v1371 = vshrl.u32 %v1370, 7
    %v1372 = vsub.s32 %v1369, %v1371
    %v1373 = vrot.slane %v1357, %v1372
    %v1375 = vunpack.c.l.s4 1983009808
    %v1376 = vunpack.c.0.s8 %v1375
    %v1377 = vlaneseq
    %v1378 = vshrl.u32 %v1377, 7
    %v1379 = vsub.s32 %v1376, %v1378
    %v1380 = vrot.slane %v1358, %v1379
    %v1382 = vunpack.c.l.s4 1983009808
    %v1383 = vunpack.c.0.s8 %v1382
    %v1384 = vlaneseq
    %v1385 = vshrl.u32 %v1384, 7
    %v1386 = vsub.s32 %v1383, %v1385
    %v1387 = vrot.slane %v1359, %v1386
    %v1388 = vcombine.low %v1366, %v1380
    %v1389 = vcombine.high %v1366, %v1380
    %v1390 = vcombine.low %v1373, %v1387
    %v1391 = vcombine.low %v190, %v192
    %v1392 = vcombine.high %v190, %v192
    %v1393 = vcombine.low %v194, %v196
    %v1394 = vcombine.high %v194, %v196
    %v1396 = vunpack.c.l.s4 1983009808
    %v1397 = vunpack.c.0.s8 %v1396
    %v1398 = vlaneseq
    %v1399 = vshrl.u32 %v1398, 7
    %v1400 = vsub.s32 %v1397, %v1399
    %v1401 = vrot.slane %v1391, %v1400
    %v1403 = vunpack.c.l.s4 1983009808
    %v1404 = vunpack.c.0.s8 %v1403
    %v1405 = vlaneseq
    %v1406 = vshrl.u32 %v1405, 7
    %v1407 = vsub.s32 %v1404, %v1406
    %v1408 = vrot.slane %v1392, %v1407
    %v1410 = vunpack.c.l.s4 1983009808
    %v1411 = vunpack.c.0.s8 %v1410
    %v1412 = vlaneseq
    %v1413 = vshrl.u32 %v1412, 7
    %v1414 = vsub.s32 %v1411, %v1413
    %v1415 = vrot.slane %v1393, %v1414
    %v1417 = vunpack.c.l.s4 1983009808
    %v1418 = vunpack.c.0.s8 %v1417
    %v1419 = vlaneseq
    %v1420 = vshrl.u32 %v1419, 7
    %v1421 = vsub.s32 %v1418, %v1420
    %v1422 = vrot.slane %v1394, %v1421
    %v1423 = vcombine.low %v1401, %v1415
    %v1424 = vcombine.high %v1401, %v1415
    %v1425 = vcombine.low %v1408, %v1422
    %v1426 = vcombine.high %v1408, %v1422
    %v1427 = vcombine.low %v191, %v193
    %v1428 = vcombine.high %v191, %v193
    %v1429 = vcombine.low %v195, %v197
    %v1430 = vcombine.high %v195, %v197
    %v1432 = vunpack.c.l.s4 1983009808
    %v1433 = vunpack.c.0.s8 %v1432
    %v1434 = vlaneseq
    %v1435 = vshrl.u32 %v1434, 7
    %v1436 = vsub.s32 %v1433, %v1435
    %v1437 = vrot.slane %v1427, %v1436
    %v1439 = vunpack.c.l.s4 1983009808
    %v1440 = vunpack.c.0.s8 %v1439
    %v1441 = vlaneseq
    %v1442 = vshrl.u32 %v1441, 7
    %v1443 = vsub.s32 %v1440, %v1442
    %v1444 = vrot.slane %v1428, %v1443
    %v1446 = vunpack.c.l.s4 1983009808
    %v1447 = vunpack.c.0.s8 %v1446
    %v1448 = vlaneseq
    %v1449 = vshrl.u32 %v1448, 7
    %v1450 = vsub.s32 %v1447, %v1449
    %v1451 = vrot.slane %v1429, %v1450
    %v1453 = vunpack.c.l.s4 1983009808
    %v1454 = vunpack.c.0.s8 %v1453
    %v1455 = vlaneseq
    %v1456 = vshrl.u32 %v1455, 7
    %v1457 = vsub.s32 %v1454, %v1456
    %v1458 = vrot.slane %v1430, %v1457
    %v1459 = vcombine.low %v1437, %v1451
    %v1460 = vcombine.high %v1437, %v1451
    %v1461 = vcombine.low %v1444, %v1458
    %v1574 = vpack.c.bf16 %v429, %v358
    %v1575 = vpack.c.bf16 %v430, %v359
    %v1576 = vpack.c.bf16 %v431, %v360
    %v1577 = vpack.c.bf16 %v432, %v361
    %v1578 = vpack.c.bf16 %v465, %v394
    %v1579 = vpack.c.bf16 %v466, %v395
    %v1580 = vpack.c.bf16 %v467, %v396
    %v1581 = vpack.c.bf16 %v571, %v500
    %v1582 = vpack.c.bf16 %v572, %v501
    %v1583 = vpack.c.bf16 %v573, %v502
    %v1584 = vpack.c.bf16 %v574, %v503
    %v1585 = vpack.c.bf16 %v607, %v536
    %v1586 = vpack.c.bf16 %v608, %v537
    %v1587 = vpack.c.bf16 %v609, %v538
    %v1588 = vpack.c.bf16 %v713, %v642
    %v1589 = vpack.c.bf16 %v714, %v643
    %v1590 = vpack.c.bf16 %v715, %v644
    %v1591 = vpack.c.bf16 %v716, %v645
    %v1592 = vpack.c.bf16 %v749, %v678
    %v1593 = vpack.c.bf16 %v750, %v679
    %v1594 = vpack.c.bf16 %v751, %v680
    %v1595 = vpack.c.bf16 %v855, %v784
    %v1596 = vpack.c.bf16 %v856, %v785
    %v1597 = vpack.c.bf16 %v857, %v786
    %v1598 = vpack.c.bf16 %v858, %v787
    %v1599 = vpack.c.bf16 %v891, %v820
    %v1600 = vpack.c.bf16 %v892, %v821
    %v1601 = vpack.c.bf16 %v893, %v822
    %v1602 = vpack.c.bf16 %v997, %v926
    %v1603 = vpack.c.bf16 %v998, %v927
    %v1604 = vpack.c.bf16 %v999, %v928
    %v1605 = vpack.c.bf16 %v1000, %v929
    %v1606 = vpack.c.bf16 %v1033, %v962
    %v1607 = vpack.c.bf16 %v1034, %v963
    %v1608 = vpack.c.bf16 %v1035, %v964
    %v1609 = vpack.c.bf16 %v1139, %v1068
    %v1610 = vpack.c.bf16 %v1140, %v1069
    %v1611 = vpack.c.bf16 %v1141, %v1070
    %v1612 = vpack.c.bf16 %v1142, %v1071
    %v1613 = vpack.c.bf16 %v1175, %v1104
    %v1614 = vpack.c.bf16 %v1176, %v1105
    %v1615 = vpack.c.bf16 %v1177, %v1106
    %v1616 = vpack.c.bf16 %v1281, %v1210
    %v1617 = vpack.c.bf16 %v1282, %v1211
    %v1618 = vpack.c.bf16 %v1283, %v1212
    %v1619 = vpack.c.bf16 %v1284, %v1213
    %v1620 = vpack.c.bf16 %v1317, %v1246
    %v1621 = vpack.c.bf16 %v1318, %v1247
    %v1622 = vpack.c.bf16 %v1319, %v1248
    %v1623 = vpack.c.bf16 %v1423, %v1352
    %v1624 = vpack.c.bf16 %v1424, %v1353
    %v1625 = vpack.c.bf16 %v1425, %v1354
    %v1626 = vpack.c.bf16 %v1426, %v1355
    %v1627 = vpack.c.bf16 %v1459, %v1388
    %v1628 = vpack.c.bf16 %v1460, %v1389
    %v1629 = vpack.c.bf16 %v1461, %v1390
    %v1630 = vld [vmem:[#allocation6] sm:$0xff]
    %v1631 = vld [vmem:[#allocation6 + $0x8] sm:$0xff]
    %v1632 = vld [vmem:[#allocation6 + $0x10] sm:$0xff]
    %v1633 = vld [vmem:[#allocation6 + $0x18] sm:$0xff]
    %v1634 = vld [vmem:[#allocation6 + $0x20] sm:$0xff]
    %v1635 = vld [vmem:[#allocation6 + $0x28] sm:$0xff]
    %v1636 = vld [vmem:[#allocation6 + $0x30] sm:$0xff]
    %v1637 = vld [vmem:[#allocation6 + $0x38] sm:$0xff]
    %v1638 = vld [vmem:[#allocation6 + $0x40] sm:$0xff]
    %v1639 = vld [vmem:[#allocation6 + $0x48] sm:$0xff]
    %v1640 = vld [vmem:[#allocation6 + $0x50] sm:$0xff]
    %v1641 = vld [vmem:[#allocation6 + $0x58] sm:$0xff]
    %v1642 = vld [vmem:[#allocation6 + $0x60] sm:$0xff]
    %v1643 = vld [vmem:[#allocation6 + $0x68] sm:$0xff]
    %v1644 = vld [vmem:[#allocation6 + $0x70] sm:$0xff]
    %v1645 = vld [vmem:[#allocation6 + $0x78] sm:$0xff]
    %v1646 = vld [vmem:[#allocation6 + $0x80] sm:$0xff]
    %v1647 = vld [vmem:[#allocation6 + $0x88] sm:$0xff]
    %v1648 = vld [vmem:[#allocation6 + $0x90] sm:$0xff]
    %v1649 = vld [vmem:[#allocation6 + $0x98] sm:$0xff]
    %v1650 = vld [vmem:[#allocation6 + $0xa0] sm:$0xff]
    %v1651 = vld [vmem:[#allocation6 + $0xa8] sm:$0xff]
    %v1652 = vld [vmem:[#allocation6 + $0xb0] sm:$0xff]
    %v1653 = vld [vmem:[#allocation6 + $0xb8] sm:$0xff]
    %v1654 = vld [vmem:[#allocation6 + $0xc0] sm:$0xff]
    %v1655 = vld [vmem:[#allocation6 + $0xc8] sm:$0xff]
    %v1656 = vld [vmem:[#allocation6 + $0xd0] sm:$0xff]
    %v1657 = vld [vmem:[#allocation6 + $0xd8] sm:$0xff]
    %v1658 = vld [vmem:[#allocation6 + $0xe0] sm:$0xff]
    %v1659 = vld [vmem:[#allocation6 + $0xe8] sm:$0xff]
    %v1660 = vld [vmem:[#allocation6 + $0xf0] sm:$0xff]
    %v1661 = vld [vmem:[#allocation6 + $0xf8] sm:$0xff]
    %v1662 = vld [vmem:[#allocation6 + $0x100] sm:$0xff]
    %v1663 = vld [vmem:[#allocation6 + $0x108] sm:$0xff]
    %v1664 = vld [vmem:[#allocation6 + $0x110] sm:$0xff]
    %v1665 = vld [vmem:[#allocation6 + $0x118] sm:$0xff]
    %v1666 = vld [vmem:[#allocation6 + $0x120] sm:$0xff]
    %v1667 = vld [vmem:[#allocation6 + $0x128] sm:$0xff]
    %v1668 = vld [vmem:[#allocation6 + $0x130] sm:$0xff]
    %v1669 = vld [vmem:[#allocation6 + $0x138] sm:$0xff]
    %v1670 = vld [vmem:[#allocation6 + $0x140] sm:$0xff]
    %v1671 = vld [vmem:[#allocation6 + $0x148] sm:$0xff]
    %v1672 = vld [vmem:[#allocation6 + $0x150] sm:$0xff]
    %v1673 = vld [vmem:[#allocation6 + $0x158] sm:$0xff]
    %v1674 = vld [vmem:[#allocation6 + $0x160] sm:$0xff]
    %v1675 = vld [vmem:[#allocation6 + $0x168] sm:$0xff]
    %v1676 = vld [vmem:[#allocation6 + $0x170] sm:$0xff]
    %v1677 = vld [vmem:[#allocation6 + $0x178] sm:$0xff]
    %v1678 = vld [vmem:[#allocation6 + $0x180] sm:$0xff]
    %v1679 = vld [vmem:[#allocation6 + $0x188] sm:$0xff]
    %v1680 = vld [vmem:[#allocation6 + $0x190] sm:$0xff]
    %v1681 = vld [vmem:[#allocation6 + $0x198] sm:$0xff]
    %v1682 = vld [vmem:[#allocation6 + $0x1a0] sm:$0xff]
    %v1683 = vld [vmem:[#allocation6 + $0x1a8] sm:$0xff]
    %v1684 = vld [vmem:[#allocation6 + $0x1b0] sm:$0xff]
    %v1685 = vld [vmem:[#allocation6 + $0x1b8] sm:$0xff]
    %v1686 = vld [vmem:[#allocation6 + $0x1c0] sm:$0xff]
    %v1687 = vld [vmem:[#allocation6 + $0x1c8] sm:$0xff]
    %v1688 = vld [vmem:[#allocation6 + $0x1d0] sm:$0xff]
    %v1689 = vld [vmem:[#allocation6 + $0x1d8] sm:$0xff]
    %v1690 = vld [vmem:[#allocation6 + $0x1e0] sm:$0xff]
    %v1691 = vld [vmem:[#allocation6 + $0x1e8] sm:$0xff]
    %v1692 = vld [vmem:[#allocation6 + $0x1f0] sm:$0xff]
    %v1693 = vld [vmem:[#allocation6 + $0x1f8] sm:$0xff]
    %v1694 = vld [vmem:[#allocation6 + $0x200] sm:$0xff]
    %v1695 = vld [vmem:[#allocation6 + $0x208] sm:$0xff]
    %v1696 = vld [vmem:[#allocation6 + $0x210] sm:$0xff]
    %v1697 = vld [vmem:[#allocation6 + $0x218] sm:$0xff]
    %v1698 = vld [vmem:[#allocation6 + $0x220] sm:$0xff]
    %v1699 = vld [vmem:[#allocation6 + $0x228] sm:$0xff]
    %v1700 = vld [vmem:[#allocation6 + $0x230] sm:$0xff]
    %v1701 = vld [vmem:[#allocation6 + $0x238] sm:$0xff]
    %v1702 = vld [vmem:[#allocation6 + $0x240] sm:$0xff]
    %v1703 = vld [vmem:[#allocation6 + $0x248] sm:$0xff]
    %v1704 = vld [vmem:[#allocation6 + $0x250] sm:$0xff]
    %v1705 = vld [vmem:[#allocation6 + $0x258] sm:$0xff]
    %v1706 = vld [vmem:[#allocation6 + $0x260] sm:$0xff]
    %v1707 = vld [vmem:[#allocation6 + $0x268] sm:$0xff]
    %v1708 = vld [vmem:[#allocation6 + $0x270] sm:$0xff]
    %v1709 = vld [vmem:[#allocation6 + $0x278] sm:$0xff]
    %v1710 = vld [vmem:[#allocation6 + $0x280] sm:$0xff]
    %v1711 = vld [vmem:[#allocation6 + $0x288] sm:$0xff]
    %v1712 = vld [vmem:[#allocation6 + $0x290] sm:$0xff]
    %v1713 = vld [vmem:[#allocation6 + $0x298] sm:$0xff]
    %v1714 = vld [vmem:[#allocation6 + $0x2a0] sm:$0xff]
    %v1715 = vld [vmem:[#allocation6 + $0x2a8] sm:$0xff]
    %v1716 = vld [vmem:[#allocation6 + $0x2b0] sm:$0xff]
    %v1717 = vld [vmem:[#allocation6 + $0x2b8] sm:$0xff]
    %v1718 = vld [vmem:[#allocation6 + $0x2c0] sm:$0xff]
    %v1719 = vld [vmem:[#allocation6 + $0x2c8] sm:$0xff]
    %v1720 = vld [vmem:[#allocation6 + $0x2d0] sm:$0xff]
    %v1721 = vld [vmem:[#allocation6 + $0x2d8] sm:$0xff]
    %v1722 = vld [vmem:[#allocation6 + $0x2e0] sm:$0xff]
    %v1723 = vld [vmem:[#allocation6 + $0x2e8] sm:$0xff]
    %v1724 = vld [vmem:[#allocation6 + $0x2f0] sm:$0xff]
    %v1725 = vld [vmem:[#allocation6 + $0x2f8] sm:$0xff]
    %v1726 = vld [vmem:[#allocation6 + $0x300] sm:$0xff]
    %v1727 = vld [vmem:[#allocation6 + $0x308] sm:$0xff]
    %v1728 = vld [vmem:[#allocation6 + $0x310] sm:$0xff]
    %v1729 = vld [vmem:[#allocation6 + $0x318] sm:$0xff]
    %v1730 = vld [vmem:[#allocation6 + $0x320] sm:$0xff]
    %v1731 = vld [vmem:[#allocation6 + $0x328] sm:$0xff]
    %v1732 = vld [vmem:[#allocation6 + $0x330] sm:$0xff]
    %v1733 = vld [vmem:[#allocation6 + $0x338] sm:$0xff]
    %v1734 = vld [vmem:[#allocation6 + $0x340] sm:$0xff]
    %v1735 = vld [vmem:[#allocation6 + $0x348] sm:$0xff]
    %v1736 = vld [vmem:[#allocation6 + $0x350] sm:$0xff]
    %v1737 = vld [vmem:[#allocation6 + $0x358] sm:$0xff]
    %v1738 = vld [vmem:[#allocation6 + $0x360] sm:$0xff]
    %v1739 = vld [vmem:[#allocation6 + $0x368] sm:$0xff]
    %v1740 = vld [vmem:[#allocation6 + $0x370] sm:$0xff]
    %v1741 = vld [vmem:[#allocation6 + $0x378] sm:$0xff]
    %v1742 = vld [vmem:[#allocation6 + $0x380] sm:$0xff]
    %v1743 = vld [vmem:[#allocation6 + $0x388] sm:$0xff]
    %v1744 = vld [vmem:[#allocation6 + $0x390] sm:$0xff]
    %v1745 = vld [vmem:[#allocation6 + $0x398] sm:$0xff]
    %v1746 = vld [vmem:[#allocation6 + $0x3a0] sm:$0xff]
    %v1747 = vld [vmem:[#allocation6 + $0x3a8] sm:$0xff]
    %v1748 = vld [vmem:[#allocation6 + $0x3b0] sm:$0xff]
    %v1749 = vld [vmem:[#allocation6 + $0x3b8] sm:$0xff]
    %v1750 = vld [vmem:[#allocation6 + $0x3c0] sm:$0xff]
    %v1751 = vld [vmem:[#allocation6 + $0x3c8] sm:$0xff]
    %v1752 = vld [vmem:[#allocation6 + $0x3d0] sm:$0xff]
    %v1753 = vld [vmem:[#allocation6 + $0x3d8] sm:$0xff]
    %v1754 = vld [vmem:[#allocation6 + $0x3e0] sm:$0xff]
    %v1755 = vld [vmem:[#allocation6 + $0x3e8] sm:$0xff]
    %v1756 = vld [vmem:[#allocation6 + $0x3f0] sm:$0xff]
    %v1757 = vld [vmem:[#allocation6 + $0x3f8] sm:$0xff]
    %v1758 = vld [vmem:[#allocation6 + $0x400] sm:$0xff]
    %v1759 = vld [vmem:[#allocation6 + $0x408] sm:$0xff]
    %v1760 = vld [vmem:[#allocation6 + $0x410] sm:$0xff]
    %v1761 = vld [vmem:[#allocation6 + $0x418] sm:$0xff]
    %v1762 = vld [vmem:[#allocation6 + $0x420] sm:$0xff]
    %v1763 = vld [vmem:[#allocation6 + $0x428] sm:$0xff]
    %v1764 = vld [vmem:[#allocation6 + $0x430] sm:$0xff]
    %v1765 = vld [vmem:[#allocation6 + $0x438] sm:$0xff]
    %v1766 = vld [vmem:[#allocation6 + $0x440] sm:$0xff]
    %v1767 = vld [vmem:[#allocation6 + $0x448] sm:$0xff]
    %v1768 = vld [vmem:[#allocation6 + $0x450] sm:$0xff]
    %v1769 = vld [vmem:[#allocation6 + $0x458] sm:$0xff]
    %v1770 = vld [vmem:[#allocation6 + $0x460] sm:$0xff]
    %v1771 = vld [vmem:[#allocation6 + $0x468] sm:$0xff]
    %v1772 = vld [vmem:[#allocation6 + $0x470] sm:$0xff]
    %v1773 = vld [vmem:[#allocation6 + $0x478] sm:$0xff]
    %v1774 = vld [vmem:[#allocation6 + $0x480] sm:$0xff]
    %v1775 = vld [vmem:[#allocation6 + $0x488] sm:$0xff]
    %v1776 = vld [vmem:[#allocation6 + $0x490] sm:$0xff]
    %v1777 = vld [vmem:[#allocation6 + $0x498] sm:$0xff]
    %v1778 = vld [vmem:[#allocation6 + $0x4a0] sm:$0xff]
    %v1779 = vld [vmem:[#allocation6 + $0x4a8] sm:$0xff]
    %v1780 = vld [vmem:[#allocation6 + $0x4b0] sm:$0xff]
    %v1781 = vld [vmem:[#allocation6 + $0x4b8] sm:$0xff]
    %v1782 = vld [vmem:[#allocation6 + $0x4c0] sm:$0xff]
    %v1783 = vld [vmem:[#allocation6 + $0x4c8] sm:$0xff]
    %v1784 = vld [vmem:[#allocation6 + $0x4d0] sm:$0xff]
    %v1785 = vld [vmem:[#allocation6 + $0x4d8] sm:$0xff]
    %v1786 = vld [vmem:[#allocation6 + $0x4e0] sm:$0xff]
    %v1787 = vld [vmem:[#allocation6 + $0x4e8] sm:$0xff]
    %v1788 = vld [vmem:[#allocation6 + $0x4f0] sm:$0xff]
    %v1789 = vld [vmem:[#allocation6 + $0x4f8] sm:$0xff]
    %v1790 = vld [vmem:[#allocation6 + $0x500] sm:$0xff]
    %v1791 = vld [vmem:[#allocation6 + $0x508] sm:$0xff]
    %v1792 = vld [vmem:[#allocation6 + $0x510] sm:$0xff]
    %v1793 = vld [vmem:[#allocation6 + $0x518] sm:$0xff]
    %v1794 = vld [vmem:[#allocation6 + $0x520] sm:$0xff]
    %v1795 = vld [vmem:[#allocation6 + $0x528] sm:$0xff]
    %v1796 = vld [vmem:[#allocation6 + $0x530] sm:$0xff]
    %v1797 = vld [vmem:[#allocation6 + $0x538] sm:$0xff]
    %v1798 = vld [vmem:[#allocation6 + $0x540] sm:$0xff]
    %v1799 = vld [vmem:[#allocation6 + $0x548] sm:$0xff]
    %v1800 = vld [vmem:[#allocation6 + $0x550] sm:$0xff]
    %v1801 = vld [vmem:[#allocation6 + $0x558] sm:$0xff]
    %v1802 = vld [vmem:[#allocation6 + $0x560] sm:$0xff]
    %v1803 = vld [vmem:[#allocation6 + $0x568] sm:$0xff]
    %v1804 = vld [vmem:[#allocation6 + $0x570] sm:$0xff]
    %v1805 = vld [vmem:[#allocation6 + $0x578] sm:$0xff]
    %v1806 = vld [vmem:[#allocation6 + $0x580] sm:$0xff]
    %v1807 = vld [vmem:[#allocation6 + $0x588] sm:$0xff]
    %v1808 = vld [vmem:[#allocation6 + $0x590] sm:$0xff]
    %v1809 = vld [vmem:[#allocation6 + $0x598] sm:$0xff]
    %v1810 = vld [vmem:[#allocation6 + $0x5a0] sm:$0xff]
    %v1811 = vld [vmem:[#allocation6 + $0x5a8] sm:$0xff]
    %v1812 = vld [vmem:[#allocation6 + $0x5b0] sm:$0xff]
    %v1813 = vld [vmem:[#allocation6 + $0x5b8] sm:$0xff]
    %v1814 = vld [vmem:[#allocation6 + $0x5c0] sm:$0xff]
    %v1815 = vld [vmem:[#allocation6 + $0x5c8] sm:$0xff]
    %v1816 = vld [vmem:[#allocation6 + $0x5d0] sm:$0xff]
    %v1817 = vld [vmem:[#allocation6 + $0x5d8] sm:$0xff]
    %v1818 = vld [vmem:[#allocation6 + $0x5e0] sm:$0xff]
    %v1819 = vld [vmem:[#allocation6 + $0x5e8] sm:$0xff]
    %v1820 = vld [vmem:[#allocation6 + $0x5f0] sm:$0xff]
    %v1821 = vld [vmem:[#allocation6 + $0x5f8] sm:$0xff]
    %v1822 = vld [vmem:[#allocation6 + $0x600] sm:$0xff]
    %v1823 = vld [vmem:[#allocation6 + $0x608] sm:$0xff]
    %v1824 = vld [vmem:[#allocation6 + $0x610] sm:$0xff]
    %v1825 = vld [vmem:[#allocation6 + $0x618] sm:$0xff]
    %v1826 = vld [vmem:[%s2] sm:$0xf]
    %v1828 = vlaneseq
    %v1829 = vshrl.u32 %v1828, 7
    %v1830 = vsub.s32 0, %v1829
    %v1831 = vrot.slane %v1826, %v1830
    %v1832 = vlaneseq
    %v1833 = vshrl.u32 %v1832, 7
    %v1834 = vsub.s32 1, %v1833
    %v1835 = vrot.slane %v1826, %v1834
    %v1836 = vlaneseq
    %v1837 = vshrl.u32 %v1836, 7
    %v1838 = vsub.s32 2, %v1837
    %v1839 = vrot.slane %v1826, %v1838
    %v1840 = vlaneseq
    %v1841 = vshrl.u32 %v1840, 7
    %v1842 = vsub.s32 3, %v1841
    %v1843 = vrot.slane %v1826, %v1842
    %v2044 = vunpack.c.l.b16 %v1630
    %v2045 = vunpack.c.h.b16 %v1630
    %v2046 = vunpack.c.l.b16 %v1631
    %v2047 = vunpack.c.h.b16 %v1631
    %v2048 = vunpack.c.l.b16 %v1632
    %v2049 = vunpack.c.h.b16 %v1632
    %v2050 = vunpack.c.l.b16 %v1633
    %v2051 = vunpack.c.h.b16 %v1633
    %v2052 = vunpack.c.l.b16 %v1634
    %v2053 = vunpack.c.h.b16 %v1634
    %v2054 = vunpack.c.l.b16 %v1635
    %v2055 = vunpack.c.h.b16 %v1635
    %v2056 = vunpack.c.l.b16 %v1636
    %v2057 = vunpack.c.h.b16 %v1636
    %v2058 = vunpack.c.l.b16 %v1637
    %v2059 = vunpack.c.h.b16 %v1637
    %v2060 = vunpack.c.l.b16 %v1638
    %v2061 = vunpack.c.h.b16 %v1638
    %v2062 = vunpack.c.l.b16 %v1639
    %v2063 = vunpack.c.h.b16 %v1639
    %v2064 = vunpack.c.l.b16 %v1640
    %v2065 = vunpack.c.h.b16 %v1640
    %v2066 = vunpack.c.l.b16 %v1641
    %v2067 = vunpack.c.h.b16 %v1641
    %v2068 = vunpack.c.l.b16 %v1642
    %v2069 = vunpack.c.h.b16 %v1642
    %v2070 = vunpack.c.l.b16 %v1643
    %v2071 = vunpack.c.h.b16 %v1643
    %v2072 = vunpack.c.l.b16 %v1644
    %v2073 = vunpack.c.h.b16 %v1644
    %v2074 = vunpack.c.l.b16 %v1645
    %v2075 = vunpack.c.h.b16 %v1645
    %v2076 = vunpack.c.l.b16 %v1646
    %v2077 = vunpack.c.h.b16 %v1646
    %v2078 = vunpack.c.l.b16 %v1647
    %v2079 = vunpack.c.h.b16 %v1647
    %v2080 = vunpack.c.l.b16 %v1648
    %v2081 = vunpack.c.h.b16 %v1648
    %v2082 = vunpack.c.l.b16 %v1649
    %v2083 = vunpack.c.h.b16 %v1649
    %v2084 = vunpack.c.l.b16 %v1650
    %v2085 = vunpack.c.h.b16 %v1650
    %v2086 = vunpack.c.l.b16 %v1651
    %v2087 = vunpack.c.h.b16 %v1651
    %v2088 = vunpack.c.l.b16 %v1652
    %v2089 = vunpack.c.h.b16 %v1652
    %v2090 = vunpack.c.l.b16 %v1653
    %v2091 = vunpack.c.h.b16 %v1653
    %v2092 = vunpack.c.l.b16 %v1654
    %v2093 = vunpack.c.h.b16 %v1654
    %v2094 = vunpack.c.l.b16 %v1655
    %v2095 = vunpack.c.h.b16 %v1655
    %v2096 = vunpack.c.l.b16 %v1656
    %v2097 = vunpack.c.h.b16 %v1656
    %v2098 = vunpack.c.l.b16 %v1657
    %v2099 = vunpack.c.h.b16 %v1657
    %v2100 = vunpack.c.l.b16 %v1658
    %v2101 = vunpack.c.h.b16 %v1658
    %v2102 = vunpack.c.l.b16 %v1659
    %v2103 = vunpack.c.h.b16 %v1659
    %v2104 = vunpack.c.l.b16 %v1660
    %v2105 = vunpack.c.h.b16 %v1660
    %v2106 = vunpack.c.l.b16 %v1661
    %v2107 = vunpack.c.h.b16 %v1661
    %v2108 = vunpack.c.l.b16 %v1662
    %v2109 = vunpack.c.h.b16 %v1662
    %v2110 = vunpack.c.l.b16 %v1663
    %v2111 = vunpack.c.h.b16 %v1663
    %v2112 = vunpack.c.l.b16 %v1664
    %v2113 = vunpack.c.h.b16 %v1664
    %v2114 = vunpack.c.l.b16 %v1665
    %v2115 = vunpack.c.h.b16 %v1665
    %v2116 = vunpack.c.l.b16 %v1666
    %v2117 = vunpack.c.h.b16 %v1666
    %v2118 = vunpack.c.l.b16 %v1667
    %v2119 = vunpack.c.h.b16 %v1667
    %v2120 = vunpack.c.l.b16 %v1668
    %v2121 = vunpack.c.h.b16 %v1668
    %v2122 = vunpack.c.l.b16 %v1669
    %v2123 = vunpack.c.h.b16 %v1669
    %v2124 = vunpack.c.l.b16 %v1670
    %v2125 = vunpack.c.h.b16 %v1670
    %v2126 = vunpack.c.l.b16 %v1671
    %v2127 = vunpack.c.h.b16 %v1671
    %v2128 = vunpack.c.l.b16 %v1672
    %v2129 = vunpack.c.h.b16 %v1672
    %v2130 = vunpack.c.l.b16 %v1673
    %v2131 = vunpack.c.h.b16 %v1673
    %v2132 = vunpack.c.l.b16 %v1674
    %v2133 = vunpack.c.h.b16 %v1674
    %v2134 = vunpack.c.l.b16 %v1675
    %v2135 = vunpack.c.h.b16 %v1675
    %v2136 = vunpack.c.l.b16 %v1676
    %v2137 = vunpack.c.h.b16 %v1676
    %v2138 = vunpack.c.l.b16 %v1677
    %v2139 = vunpack.c.h.b16 %v1677
    %v2140 = vunpack.c.l.b16 %v1678
    %v2141 = vunpack.c.h.b16 %v1678
    %v2142 = vunpack.c.l.b16 %v1679
    %v2143 = vunpack.c.h.b16 %v1679
    %v2144 = vunpack.c.l.b16 %v1680
    %v2145 = vunpack.c.h.b16 %v1680
    %v2146 = vunpack.c.l.b16 %v1681
    %v2147 = vunpack.c.h.b16 %v1681
    %v2148 = vunpack.c.l.b16 %v1682
    %v2149 = vunpack.c.h.b16 %v1682
    %v2150 = vunpack.c.l.b16 %v1683
    %v2151 = vunpack.c.h.b16 %v1683
    %v2152 = vunpack.c.l.b16 %v1684
    %v2153 = vunpack.c.h.b16 %v1684
    %v2154 = vunpack.c.l.b16 %v1685
    %v2155 = vunpack.c.h.b16 %v1685
    %v2156 = vunpack.c.l.b16 %v1686
    %v2157 = vunpack.c.h.b16 %v1686
    %v2158 = vunpack.c.l.b16 %v1687
    %v2159 = vunpack.c.h.b16 %v1687
    %v2160 = vunpack.c.l.b16 %v1688
    %v2161 = vunpack.c.h.b16 %v1688
    %v2162 = vunpack.c.l.b16 %v1689
    %v2163 = vunpack.c.h.b16 %v1689
    %v2164 = vunpack.c.l.b16 %v1690
    %v2165 = vunpack.c.h.b16 %v1690
    %v2166 = vunpack.c.l.b16 %v1691
    %v2167 = vunpack.c.h.b16 %v1691
    %v2168 = vunpack.c.l.b16 %v1692
    %v2169 = vunpack.c.h.b16 %v1692
    %v2170 = vunpack.c.l.b16 %v1693
    %v2171 = vunpack.c.h.b16 %v1693
    %v2172 = vunpack.c.l.b16 %v1694
    %v2173 = vunpack.c.h.b16 %v1694
    %v2174 = vunpack.c.l.b16 %v1695
    %v2175 = vunpack.c.h.b16 %v1695
    %v2176 = vunpack.c.l.b16 %v1696
    %v2177 = vunpack.c.h.b16 %v1696
    %v2178 = vunpack.c.l.b16 %v1697
    %v2179 = vunpack.c.h.b16 %v1697
    %v2180 = vunpack.c.l.b16 %v1698
    %v2181 = vunpack.c.h.b16 %v1698
    %v2182 = vunpack.c.l.b16 %v1699
    %v2183 = vunpack.c.h.b16 %v1699
    %v2184 = vunpack.c.l.b16 %v1700
    %v2185 = vunpack.c.h.b16 %v1700
    %v2186 = vunpack.c.l.b16 %v1701
    %v2187 = vunpack.c.h.b16 %v1701
    %v2188 = vunpack.c.l.b16 %v1702
    %v2189 = vunpack.c.h.b16 %v1702
    %v2190 = vunpack.c.l.b16 %v1703
    %v2191 = vunpack.c.h.b16 %v1703
    %v2192 = vunpack.c.l.b16 %v1704
    %v2193 = vunpack.c.h.b16 %v1704
    %v2194 = vunpack.c.l.b16 %v1705
    %v2195 = vunpack.c.h.b16 %v1705
    %v2196 = vunpack.c.l.b16 %v1706
    %v2197 = vunpack.c.h.b16 %v1706
    %v2198 = vunpack.c.l.b16 %v1707
    %v2199 = vunpack.c.h.b16 %v1707
    %v2200 = vunpack.c.l.b16 %v1708
    %v2201 = vunpack.c.h.b16 %v1708
    %v2202 = vunpack.c.l.b16 %v1709
    %v2203 = vunpack.c.h.b16 %v1709
    %v2204 = vunpack.c.l.b16 %v1710
    %v2205 = vunpack.c.h.b16 %v1710
    %v2206 = vunpack.c.l.b16 %v1711
    %v2207 = vunpack.c.h.b16 %v1711
    %v2208 = vunpack.c.l.b16 %v1712
    %v2209 = vunpack.c.h.b16 %v1712
    %v2210 = vunpack.c.l.b16 %v1713
    %v2211 = vunpack.c.h.b16 %v1713
    %v2212 = vunpack.c.l.b16 %v1714
    %v2213 = vunpack.c.h.b16 %v1714
    %v2214 = vunpack.c.l.b16 %v1715
    %v2215 = vunpack.c.h.b16 %v1715
    %v2216 = vunpack.c.l.b16 %v1716
    %v2217 = vunpack.c.h.b16 %v1716
    %v2218 = vunpack.c.l.b16 %v1717
    %v2219 = vunpack.c.h.b16 %v1717
    %v2220 = vunpack.c.l.b16 %v1718
    %v2221 = vunpack.c.h.b16 %v1718
    %v2222 = vunpack.c.l.b16 %v1719
    %v2223 = vunpack.c.h.b16 %v1719
    %v2224 = vunpack.c.l.b16 %v1720
    %v2225 = vunpack.c.h.b16 %v1720
    %v2226 = vunpack.c.l.b16 %v1721
    %v2227 = vunpack.c.h.b16 %v1721
    %v2228 = vunpack.c.l.b16 %v1722
    %v2229 = vunpack.c.h.b16 %v1722
    %v2230 = vunpack.c.l.b16 %v1723
    %v2231 = vunpack.c.h.b16 %v1723
    %v2232 = vunpack.c.l.b16 %v1724
    %v2233 = vunpack.c.h.b16 %v1724
    %v2234 = vunpack.c.l.b16 %v1725
    %v2235 = vunpack.c.h.b16 %v1725
    %v2236 = vunpack.c.l.b16 %v1726
    %v2237 = vunpack.c.h.b16 %v1726
    %v2238 = vunpack.c.l.b16 %v1727
    %v2239 = vunpack.c.h.b16 %v1727
    %v2240 = vunpack.c.l.b16 %v1728
    %v2241 = vunpack.c.h.b16 %v1728
    %v2242 = vunpack.c.l.b16 %v1729
    %v2243 = vunpack.c.h.b16 %v1729
    %v2244 = vunpack.c.l.b16 %v1730
    %v2245 = vunpack.c.h.b16 %v1730
    %v2246 = vunpack.c.l.b16 %v1731
    %v2247 = vunpack.c.h.b16 %v1731
    %v2248 = vunpack.c.l.b16 %v1732
    %v2249 = vunpack.c.h.b16 %v1732
    %v2250 = vunpack.c.l.b16 %v1733
    %v2251 = vunpack.c.h.b16 %v1733
    %v2252 = vunpack.c.l.b16 %v1734
    %v2253 = vunpack.c.h.b16 %v1734
    %v2254 = vunpack.c.l.b16 %v1735
    %v2255 = vunpack.c.h.b16 %v1735
    %v2256 = vunpack.c.l.b16 %v1736
    %v2257 = vunpack.c.h.b16 %v1736
    %v2258 = vunpack.c.l.b16 %v1737
    %v2259 = vunpack.c.h.b16 %v1737
    %v2260 = vunpack.c.l.b16 %v1738
    %v2261 = vunpack.c.h.b16 %v1738
    %v2262 = vunpack.c.l.b16 %v1739
    %v2263 = vunpack.c.h.b16 %v1739
    %v2264 = vunpack.c.l.b16 %v1740
    %v2265 = vunpack.c.h.b16 %v1740
    %v2266 = vunpack.c.l.b16 %v1741
    %v2267 = vunpack.c.h.b16 %v1741
    %v2268 = vunpack.c.l.b16 %v1742
    %v2269 = vunpack.c.h.b16 %v1742
    %v2270 = vunpack.c.l.b16 %v1743
    %v2271 = vunpack.c.h.b16 %v1743
    %v2272 = vunpack.c.l.b16 %v1744
    %v2273 = vunpack.c.h.b16 %v1744
    %v2274 = vunpack.c.l.b16 %v1745
    %v2275 = vunpack.c.h.b16 %v1745
    %v2276 = vunpack.c.l.b16 %v1746
    %v2277 = vunpack.c.h.b16 %v1746
    %v2278 = vunpack.c.l.b16 %v1747
    %v2279 = vunpack.c.h.b16 %v1747
    %v2280 = vunpack.c.l.b16 %v1748
    %v2281 = vunpack.c.h.b16 %v1748
    %v2282 = vunpack.c.l.b16 %v1749
    %v2283 = vunpack.c.h.b16 %v1749
    %v2284 = vunpack.c.l.b16 %v1750
    %v2285 = vunpack.c.h.b16 %v1750
    %v2286 = vunpack.c.l.b16 %v1751
    %v2287 = vunpack.c.h.b16 %v1751
    %v2288 = vunpack.c.l.b16 %v1752
    %v2289 = vunpack.c.h.b16 %v1752
    %v2290 = vunpack.c.l.b16 %v1753
    %v2291 = vunpack.c.h.b16 %v1753
    %v2292 = vunpack.c.l.b16 %v1754
    %v2293 = vunpack.c.h.b16 %v1754
    %v2294 = vunpack.c.l.b16 %v1755
    %v2295 = vunpack.c.h.b16 %v1755
    %v2296 = vunpack.c.l.b16 %v1756
    %v2297 = vunpack.c.h.b16 %v1756
    %v2298 = vunpack.c.l.b16 %v1757
    %v2299 = vunpack.c.h.b16 %v1757
    %v2300 = vunpack.c.l.b16 %v1758
    %v2301 = vunpack.c.h.b16 %v1758
    %v2302 = vunpack.c.l.b16 %v1759
    %v2303 = vunpack.c.h.b16 %v1759
    %v2304 = vunpack.c.l.b16 %v1760
    %v2305 = vunpack.c.h.b16 %v1760
    %v2306 = vunpack.c.l.b16 %v1761
    %v2307 = vunpack.c.h.b16 %v1761
    %v2308 = vunpack.c.l.b16 %v1762
    %v2309 = vunpack.c.h.b16 %v1762
    %v2310 = vunpack.c.l.b16 %v1763
    %v2311 = vunpack.c.h.b16 %v1763
    %v2312 = vunpack.c.l.b16 %v1764
    %v2313 = vunpack.c.h.b16 %v1764
    %v2314 = vunpack.c.l.b16 %v1765
    %v2315 = vunpack.c.h.b16 %v1765
    %v2316 = vunpack.c.l.b16 %v1766
    %v2317 = vunpack.c.h.b16 %v1766
    %v2318 = vunpack.c.l.b16 %v1767
    %v2319 = vunpack.c.h.b16 %v1767
    %v2320 = vunpack.c.l.b16 %v1768
    %v2321 = vunpack.c.h.b16 %v1768
    %v2322 = vunpack.c.l.b16 %v1769
    %v2323 = vunpack.c.h.b16 %v1769
    %v2324 = vunpack.c.l.b16 %v1770
    %v2325 = vunpack.c.h.b16 %v1770
    %v2326 = vunpack.c.l.b16 %v1771
    %v2327 = vunpack.c.h.b16 %v1771
    %v2328 = vunpack.c.l.b16 %v1772
    %v2329 = vunpack.c.h.b16 %v1772
    %v2330 = vunpack.c.l.b16 %v1773
    %v2331 = vunpack.c.h.b16 %v1773
    %v2332 = vunpack.c.l.b16 %v1774
    %v2333 = vunpack.c.h.b16 %v1774
    %v2334 = vunpack.c.l.b16 %v1775
    %v2335 = vunpack.c.h.b16 %v1775
    %v2336 = vunpack.c.l.b16 %v1776
    %v2337 = vunpack.c.h.b16 %v1776
    %v2338 = vunpack.c.l.b16 %v1777
    %v2339 = vunpack.c.h.b16 %v1777
    %v2340 = vunpack.c.l.b16 %v1778
    %v2341 = vunpack.c.h.b16 %v1778
    %v2342 = vunpack.c.l.b16 %v1779
    %v2343 = vunpack.c.h.b16 %v1779
    %v2344 = vunpack.c.l.b16 %v1780
    %v2345 = vunpack.c.h.b16 %v1780
    %v2346 = vunpack.c.l.b16 %v1781
    %v2347 = vunpack.c.h.b16 %v1781
    %v2348 = vunpack.c.l.b16 %v1782
    %v2349 = vunpack.c.h.b16 %v1782
    %v2350 = vunpack.c.l.b16 %v1783
    %v2351 = vunpack.c.h.b16 %v1783
    %v2352 = vunpack.c.l.b16 %v1784
    %v2353 = vunpack.c.h.b16 %v1784
    %v2354 = vunpack.c.l.b16 %v1785
    %v2355 = vunpack.c.h.b16 %v1785
    %v2356 = vunpack.c.l.b16 %v1786
    %v2357 = vunpack.c.h.b16 %v1786
    %v2358 = vunpack.c.l.b16 %v1787
    %v2359 = vunpack.c.h.b16 %v1787
    %v2360 = vunpack.c.l.b16 %v1788
    %v2361 = vunpack.c.h.b16 %v1788
    %v2362 = vunpack.c.l.b16 %v1789
    %v2363 = vunpack.c.h.b16 %v1789
    %v2364 = vunpack.c.l.b16 %v1790
    %v2365 = vunpack.c.h.b16 %v1790
    %v2366 = vunpack.c.l.b16 %v1791
    %v2367 = vunpack.c.h.b16 %v1791
    %v2368 = vunpack.c.l.b16 %v1792
    %v2369 = vunpack.c.h.b16 %v1792
    %v2370 = vunpack.c.l.b16 %v1793
    %v2371 = vunpack.c.h.b16 %v1793
    %v2372 = vunpack.c.l.b16 %v1794
    %v2373 = vunpack.c.h.b16 %v1794
    %v2374 = vunpack.c.l.b16 %v1795
    %v2375 = vunpack.c.h.b16 %v1795
    %v2376 = vunpack.c.l.b16 %v1796
    %v2377 = vunpack.c.h.b16 %v1796
    %v2378 = vunpack.c.l.b16 %v1797
    %v2379 = vunpack.c.h.b16 %v1797
    %v2380 = vunpack.c.l.b16 %v1798
    %v2381 = vunpack.c.h.b16 %v1798
    %v2382 = vunpack.c.l.b16 %v1799
    %v2383 = vunpack.c.h.b16 %v1799
    %v2384 = vunpack.c.l.b16 %v1800
    %v2385 = vunpack.c.h.b16 %v1800
    %v2386 = vunpack.c.l.b16 %v1801
    %v2387 = vunpack.c.h.b16 %v1801
    %v2388 = vunpack.c.l.b16 %v1802
    %v2389 = vunpack.c.h.b16 %v1802
    %v2390 = vunpack.c.l.b16 %v1803
    %v2391 = vunpack.c.h.b16 %v1803
    %v2392 = vunpack.c.l.b16 %v1804
    %v2393 = vunpack.c.h.b16 %v1804
    %v2394 = vunpack.c.l.b16 %v1805
    %v2395 = vunpack.c.h.b16 %v1805
    %v2396 = vunpack.c.l.b16 %v1806
    %v2397 = vunpack.c.h.b16 %v1806
    %v2398 = vunpack.c.l.b16 %v1807
    %v2399 = vunpack.c.h.b16 %v1807
    %v2400 = vunpack.c.l.b16 %v1808
    %v2401 = vunpack.c.h.b16 %v1808
    %v2402 = vunpack.c.l.b16 %v1809
    %v2403 = vunpack.c.h.b16 %v1809
    %v2404 = vunpack.c.l.b16 %v1810
    %v2405 = vunpack.c.h.b16 %v1810
    %v2406 = vunpack.c.l.b16 %v1811
    %v2407 = vunpack.c.h.b16 %v1811
    %v2408 = vunpack.c.l.b16 %v1812
    %v2409 = vunpack.c.h.b16 %v1812
    %v2410 = vunpack.c.l.b16 %v1813
    %v2411 = vunpack.c.h.b16 %v1813
    %v2412 = vunpack.c.l.b16 %v1814
    %v2413 = vunpack.c.h.b16 %v1814
    %v2414 = vunpack.c.l.b16 %v1815
    %v2415 = vunpack.c.h.b16 %v1815
    %v2416 = vunpack.c.l.b16 %v1816
    %v2417 = vunpack.c.h.b16 %v1816
    %v2418 = vunpack.c.l.b16 %v1817
    %v2419 = vunpack.c.h.b16 %v1817
    %v2420 = vunpack.c.l.b16 %v1818
    %v2421 = vunpack.c.h.b16 %v1818
    %v2422 = vunpack.c.l.b16 %v1819
    %v2423 = vunpack.c.h.b16 %v1819
    %v2424 = vunpack.c.l.b16 %v1820
    %v2425 = vunpack.c.h.b16 %v1820
    %v2426 = vunpack.c.l.b16 %v1821
    %v2427 = vunpack.c.h.b16 %v1821
    %v2428 = vunpack.c.l.b16 %v1822
    %v2429 = vunpack.c.h.b16 %v1822
    %v2430 = vunpack.c.l.b16 %v1823
    %v2431 = vunpack.c.h.b16 %v1823
    %v2432 = vunpack.c.l.b16 %v1824
    %v2433 = vunpack.c.h.b16 %v1824
    %v2434 = vunpack.c.l.b16 %v1825
    %v2435 = vunpack.c.h.b16 %v1825
    %v2436 = vpack.c.b16 %v2048, %v2044
    %v2437 = vpack.c.b16 %v2049, %v2045
    %v2438 = vpack.c.b16 %v2050, %v2046
    %v2439 = vpack.c.b16 %v2051, %v2047
    %v2440 = vpack.c.b16 %v2056, %v2052
    %v2441 = vpack.c.b16 %v2057, %v2053
    %v2442 = vpack.c.b16 %v2058, %v2054
    %v2443 = vpack.c.b16 %v2059, %v2055
    %v2444 = vpack.c.b16 %v2064, %v2060
    %v2445 = vpack.c.b16 %v2065, %v2061
    %v2446 = vpack.c.b16 %v2066, %v2062
    %v2447 = vpack.c.b16 %v2067, %v2063
    %v2448 = vpack.c.b16 %v2072, %v2068
    %v2449 = vpack.c.b16 %v2073, %v2069
    %v2450 = vpack.c.b16 %v2074, %v2070
    %v2451 = vpack.c.b16 %v2075, %v2071
    %v2452 = vpack.c.b16 %v2080, %v2076
    %v2453 = vpack.c.b16 %v2081, %v2077
    %v2454 = vpack.c.b16 %v2082, %v2078
    %v2455 = vpack.c.b16 %v2083, %v2079
    %v2456 = vpack.c.b16 %v2088, %v2084
    %v2457 = vpack.c.b16 %v2089, %v2085
    %v2458 = vpack.c.b16 %v2090, %v2086
    %v2459 = vpack.c.b16 %v2091, %v2087
    %v2460 = vpack.c.b16 %v2096, %v2092
    %v2461 = vpack.c.b16 %v2097, %v2093
    %v2462 = vpack.c.b16 %v2098, %v2094
    %v2463 = vpack.c.b16 %v2099, %v2095
    %v2464 = vpack.c.b16 %v2104, %v2100
    %v2465 = vpack.c.b16 %v2105, %v2101
    %v2466 = vpack.c.b16 %v2106, %v2102
    %v2467 = vpack.c.b16 %v2107, %v2103
    %v2468 = vpack.c.b16 %v2112, %v2108
    %v2469 = vpack.c.b16 %v2113, %v2109
    %v2470 = vpack.c.b16 %v2114, %v2110
    %v2471 = vpack.c.b16 %v2115, %v2111
    %v2472 = vpack.c.b16 %v2120, %v2116
    %v2473 = vpack.c.b16 %v2121, %v2117
    %v2474 = vpack.c.b16 %v2122, %v2118
    %v2475 = vpack.c.b16 %v2123, %v2119
    %v2476 = vpack.c.b16 %v2128, %v2124
    %v2477 = vpack.c.b16 %v2129, %v2125
    %v2478 = vpack.c.b16 %v2130, %v2126
    %v2479 = vpack.c.b16 %v2131, %v2127
    %v2480 = vpack.c.b16 %v2136, %v2132
    %v2481 = vpack.c.b16 %v2137, %v2133
    %v2482 = vpack.c.b16 %v2138, %v2134
    %v2483 = vpack.c.b16 %v2139, %v2135
    %v2484 = vpack.c.b16 %v2144, %v2140
    %v2485 = vpack.c.b16 %v2145, %v2141
    %v2486 = vpack.c.b16 %v2146, %v2142
    %v2487 = vpack.c.b16 %v2147, %v2143
    %v2488 = vpack.c.b16 %v2152, %v2148
    %v2489 = vpack.c.b16 %v2153, %v2149
    %v2490 = vpack.c.b16 %v2154, %v2150
    %v2491 = vpack.c.b16 %v2155, %v2151
    %v2492 = vpack.c.b16 %v2160, %v2156
    %v2493 = vpack.c.b16 %v2161, %v2157
    %v2494 = vpack.c.b16 %v2162, %v2158
    %v2495 = vpack.c.b16 %v2163, %v2159
    %v2496 = vpack.c.b16 %v2168, %v2164
    %v2497 = vpack.c.b16 %v2169, %v2165
    %v2498 = vpack.c.b16 %v2170, %v2166
    %v2499 = vpack.c.b16 %v2171, %v2167
    %v2500 = vpack.c.b16 %v2176, %v2172
    %v2501 = vpack.c.b16 %v2177, %v2173
    %v2502 = vpack.c.b16 %v2178, %v2174
    %v2503 = vpack.c.b16 %v2179, %v2175
    %v2504 = vpack.c.b16 %v2184, %v2180
    %v2505 = vpack.c.b16 %v2185, %v2181
    %v2506 = vpack.c.b16 %v2186, %v2182
    %v2507 = vpack.c.b16 %v2187, %v2183
    %v2508 = vpack.c.b16 %v2192, %v2188
    %v2509 = vpack.c.b16 %v2193, %v2189
    %v2510 = vpack.c.b16 %v2194, %v2190
    %v2511 = vpack.c.b16 %v2195, %v2191
    %v2512 = vpack.c.b16 %v2200, %v2196
    %v2513 = vpack.c.b16 %v2201, %v2197
    %v2514 = vpack.c.b16 %v2202, %v2198
    %v2515 = vpack.c.b16 %v2203, %v2199
    %v2516 = vpack.c.b16 %v2208, %v2204
    %v2517 = vpack.c.b16 %v2209, %v2205
    %v2518 = vpack.c.b16 %v2210, %v2206
    %v2519 = vpack.c.b16 %v2211, %v2207
    %v2520 = vpack.c.b16 %v2216, %v2212
    %v2521 = vpack.c.b16 %v2217, %v2213
    %v2522 = vpack.c.b16 %v2218, %v2214
    %v2523 = vpack.c.b16 %v2219, %v2215
    %v2524 = vpack.c.b16 %v2224, %v2220
    %v2525 = vpack.c.b16 %v2225, %v2221
    %v2526 = vpack.c.b16 %v2226, %v2222
    %v2527 = vpack.c.b16 %v2227, %v2223
    %v2528 = vpack.c.b16 %v2232, %v2228
    %v2529 = vpack.c.b16 %v2233, %v2229
    %v2530 = vpack.c.b16 %v2234, %v2230
    %v2531 = vpack.c.b16 %v2235, %v2231
    %v2532 = vpack.c.b16 %v2240, %v2236
    %v2533 = vpack.c.b16 %v2241, %v2237
    %v2534 = vpack.c.b16 %v2242, %v2238
    %v2535 = vpack.c.b16 %v2243, %v2239
    %v2536 = vpack.c.b16 %v2248, %v2244
    %v2537 = vpack.c.b16 %v2249, %v2245
    %v2538 = vpack.c.b16 %v2250, %v2246
    %v2539 = vpack.c.b16 %v2251, %v2247
    %v2540 = vpack.c.b16 %v2256, %v2252
    %v2541 = vpack.c.b16 %v2257, %v2253
    %v2542 = vpack.c.b16 %v2258, %v2254
    %v2543 = vpack.c.b16 %v2259, %v2255
    %v2544 = vpack.c.b16 %v2264, %v2260
    %v2545 = vpack.c.b16 %v2265, %v2261
    %v2546 = vpack.c.b16 %v2266, %v2262
    %v2547 = vpack.c.b16 %v2267, %v2263
    %v2548 = vpack.c.b16 %v2272, %v2268
    %v2549 = vpack.c.b16 %v2273, %v2269
    %v2550 = vpack.c.b16 %v2274, %v2270
    %v2551 = vpack.c.b16 %v2275, %v2271
    %v2552 = vpack.c.b16 %v2280, %v2276
    %v2553 = vpack.c.b16 %v2281, %v2277
    %v2554 = vpack.c.b16 %v2282, %v2278
    %v2555 = vpack.c.b16 %v2283, %v2279
    %v2556 = vpack.c.b16 %v2288, %v2284
    %v2557 = vpack.c.b16 %v2289, %v2285
    %v2558 = vpack.c.b16 %v2290, %v2286
    %v2559 = vpack.c.b16 %v2291, %v2287
    %v2560 = vpack.c.b16 %v2296, %v2292
    %v2561 = vpack.c.b16 %v2297, %v2293
    %v2562 = vpack.c.b16 %v2298, %v2294
    %v2563 = vpack.c.b16 %v2299, %v2295
    %v2564 = vpack.c.b16 %v2304, %v2300
    %v2565 = vpack.c.b16 %v2305, %v2301
    %v2566 = vpack.c.b16 %v2306, %v2302
    %v2567 = vpack.c.b16 %v2307, %v2303
    %v2568 = vpack.c.b16 %v2312, %v2308
    %v2569 = vpack.c.b16 %v2313, %v2309
    %v2570 = vpack.c.b16 %v2314, %v2310
    %v2571 = vpack.c.b16 %v2315, %v2311
    %v2572 = vpack.c.b16 %v2320, %v2316
    %v2573 = vpack.c.b16 %v2321, %v2317
    %v2574 = vpack.c.b16 %v2322, %v2318
    %v2575 = vpack.c.b16 %v2323, %v2319
    %v2576 = vpack.c.b16 %v2328, %v2324
    %v2577 = vpack.c.b16 %v2329, %v2325
    %v2578 = vpack.c.b16 %v2330, %v2326
    %v2579 = vpack.c.b16 %v2331, %v2327
    %v2580 = vpack.c.b16 %v2336, %v2332
    %v2581 = vpack.c.b16 %v2337, %v2333
    %v2582 = vpack.c.b16 %v2338, %v2334
    %v2583 = vpack.c.b16 %v2339, %v2335
    %v2584 = vpack.c.b16 %v2344, %v2340
    %v2585 = vpack.c.b16 %v2345, %v2341
    %v2586 = vpack.c.b16 %v2346, %v2342
    %v2587 = vpack.c.b16 %v2347, %v2343
    %v2588 = vpack.c.b16 %v2352, %v2348
    %v2589 = vpack.c.b16 %v2353, %v2349
    %v2590 = vpack.c.b16 %v2354, %v2350
    %v2591 = vpack.c.b16 %v2355, %v2351
    %v2592 = vpack.c.b16 %v2360, %v2356
    %v2593 = vpack.c.b16 %v2361, %v2357
    %v2594 = vpack.c.b16 %v2362, %v2358
    %v2595 = vpack.c.b16 %v2363, %v2359
    %v2596 = vpack.c.b16 %v2368, %v2364
    %v2597 = vpack.c.b16 %v2369, %v2365
    %v2598 = vpack.c.b16 %v2370, %v2366
    %v2599 = vpack.c.b16 %v2371, %v2367
    %v2600 = vpack.c.b16 %v2376, %v2372
    %v2601 = vpack.c.b16 %v2377, %v2373
    %v2602 = vpack.c.b16 %v2378, %v2374
    %v2603 = vpack.c.b16 %v2379, %v2375
    %v2604 = vpack.c.b16 %v2384, %v2380
    %v2605 = vpack.c.b16 %v2385, %v2381
    %v2606 = vpack.c.b16 %v2386, %v2382
    %v2607 = vpack.c.b16 %v2387, %v2383
    %v2608 = vpack.c.b16 %v2392, %v2388
    %v2609 = vpack.c.b16 %v2393, %v2389
    %v2610 = vpack.c.b16 %v2394, %v2390
    %v2611 = vpack.c.b16 %v2395, %v2391
    %v2612 = vpack.c.b16 %v2400, %v2396
    %v2613 = vpack.c.b16 %v2401, %v2397
    %v2614 = vpack.c.b16 %v2402, %v2398
    %v2615 = vpack.c.b16 %v2403, %v2399
    %v2616 = vpack.c.b16 %v2408, %v2404
    %v2617 = vpack.c.b16 %v2409, %v2405
    %v2618 = vpack.c.b16 %v2410, %v2406
    %v2619 = vpack.c.b16 %v2411, %v2407
    %v2620 = vpack.c.b16 %v2416, %v2412
    %v2621 = vpack.c.b16 %v2417, %v2413
    %v2622 = vpack.c.b16 %v2418, %v2414
    %v2623 = vpack.c.b16 %v2419, %v2415
    %v2624 = vpack.c.b16 %v2424, %v2420
    %v2625 = vpack.c.b16 %v2425, %v2421
    %v2626 = vpack.c.b16 %v2426, %v2422
    %v2627 = vpack.c.b16 %v2427, %v2423
    %v2628 = vpack.c.b16 %v2432, %v2428
    %v2629 = vpack.c.b16 %v2433, %v2429
    %v2630 = vpack.c.b16 %v2434, %v2430
    %v2631 = vpack.c.b16 %v2435, %v2431
    %vm2828 = vcmask 130048
    %v2830 = vsel %vm2828, %v1580, 0
    %v2833 = vsel %vm2828, %v1587, 0
    %v2836 = vsel %vm2828, %v1594, 0
    %v2839 = vsel %vm2828, %v1601, 0
    %v2842 = vsel %vm2828, %v1608, 0
    %v2845 = vsel %vm2828, %v1615, 0
    %v2848 = vsel %vm2828, %v1622, 0
    %v2851 = vsel %vm2828, %v1629, 0
    %2853 = vmatprep.subr.bf16.mxu0 %v2437
    %2854 = vmatpush1.bf16.msra.mxu0 %v2436
    %2855 = vmatprep.subr.bf16.mxu0 %v2441
    %2856 = vmatpush1.bf16.msra.mxu0 %v2440
    %2857 = vmatprep.subr.bf16.mxu0 %v2445
    %2858 = vmatpush1.bf16.msra.mxu0 %v2444
    %2859 = vmatprep.subr.bf16.mxu0 %v2449
    %2860 = vmatpush1.bf16.msra.mxu0 %v2448
    %2861 = vmatprep.subr.bf16.mxu0 %v2453
    %2862 = vmatpush1.bf16.msra.mxu0 %v2452
    %2863 = vmatprep.subr.bf16.mxu0 %v2457
    %2864 = vmatpush1.bf16.msra.mxu0 %v2456
    %2865 = vmatprep.subr.bf16.mxu0 %v2461
    %2866 = vmatpush1.bf16.msra.mxu0 %v2460
    %2867 = vmatprep.subr.bf16.mxu0 %v2465
    %2868 = vmatpush1.bf16.msra.mxu0 %v2464
    %2869 = vmatprep.subr.bf16.mxu0 %v2469
    %2870 = vmatpush1.bf16.msra.mxu0 %v2468
    %2871 = vmatprep.subr.bf16.mxu0 %v2473
    %2872 = vmatpush1.bf16.msra.mxu0 %v2472
    %2873 = vmatprep.subr.bf16.mxu0 %v2477
    %2874 = vmatpush1.bf16.msra.mxu0 %v2476
    %2875 = vmatprep.subr.bf16.mxu0 %v2481
    %2876 = vmatpush1.bf16.msra.mxu0 %v2480
    %2877 = vmatprep.subr.bf16.mxu0 %v2485
    %2878 = vmatpush1.bf16.msra.mxu0 %v2484
    %2879 = vmatprep.subr.bf16.mxu0 %v2489
    %2880 = vmatpush1.bf16.msra.mxu0 %v2488
    %2881 = vmatprep.subr.bf16.mxu0 %v2493
    %2882 = vmatpush1.bf16.msra.mxu0 %v2492
    %2883 = vmatprep.subr.bf16.mxu0 %v2497
    %2884 = vmatpush1.bf16.msra.mxu0 %v2496
    %2885 = vmatprep.mubr.bf16.mxu0 %v1575
    %2886 = vmatmul.mubr.bf16.gmra.mrb[0].mxu0 %v1574
    %v2887 = vpop.f32.mrb[0].mxu0
    %v2888 = vadd.f32 %v1831, %v2887
    %v2889 = vpop.f32.mrb[0].mxu0
    %v2890 = vadd.f32 %v1835, %v2889
    %v2891 = vpop.f32.mrb[0].mxu0
    %v2892 = vadd.f32 %v1831, %v2891
    %v2893 = vpop.f32.mrb[0].mxu0
    %v2894 = vadd.f32 %v1835, %v2893
    %2895 = vmatprep.mubr.bf16.mxu0 %v1582
    %2896 = vmatmul.mubr.bf16.gmra.mrb[0].mxu0 %v1581
    %v2897 = vpop.f32.mrb[0].mxu0
    %v2898 = vadd.f32 %v1831, %v2897
    %v2899 = vpop.f32.mrb[0].mxu0
    %v2900 = vadd.f32 %v1835, %v2899
    %v2901 = vpop.f32.mrb[0].mxu0
    %v2902 = vadd.f32 %v1831, %v2901
    %v2903 = vpop.f32.mrb[0].mxu0
    %v2904 = vadd.f32 %v1835, %v2903
    %2905 = vmatprep.mubr.bf16.mxu0 %v1589
    %2906 = vmatmul.mubr.bf16.gmra.mrb[0].mxu0 %v1588
    %v2907 = vpop.f32.mrb[0].mxu0
    %v2908 = vadd.f32 %v1831, %v2907
    %v2909 = vpop.f32.mrb[0].mxu0
    %v2910 = vadd.f32 %v1835, %v2909
    %v2911 = vpop.f32.mrb[0].mxu0
    %v2912 = vadd.f32 %v1831, %v2911
    %v2913 = vpop.f32.mrb[0].mxu0
    %v2914 = vadd.f32 %v1835, %v2913
    %2915 = vmatprep.mubr.bf16.mxu0 %v1596
    %2916 = vmatmul.mubr.bf16.gmra.mrb[0].mxu0 %v1595
    %v2917 = vpop.f32.mrb[0].mxu0
    %v2918 = vadd.f32 %v1831, %v2917
    %v2919 = vpop.f32.mrb[0].mxu0
    %v2920 = vadd.f32 %v1835, %v2919
    %v2921 = vpop.f32.mrb[0].mxu0
    %v2922 = vadd.f32 %v1831, %v2921
    %v2923 = vpop.f32.mrb[0].mxu0
    %v2924 = vadd.f32 %v1835, %v2923
    %2925 = vmatprep.mubr.bf16.mxu0 %v1603
    %2926 = vmatmul.mubr.bf16.gmra.mrb[0].mxu0 %v1602
    %v2927 = vpop.f32.mrb[0].mxu0
    %v2928 = vadd.f32 %v1831, %v2927
    %v2929 = vpop.f32.mrb[0].mxu0
    %v2930 = vadd.f32 %v1835, %v2929
    %v2931 = vpop.f32.mrb[0].mxu0
    %v2932 = vadd.f32 %v1831, %v2931
    %v2933 = vpop.f32.mrb[0].mxu0
    %v2934 = vadd.f32 %v1835, %v2933
    %2935 = vmatprep.mubr.bf16.mxu0 %v1610
    %2936 = vmatmul.mubr.bf16.gmra.mrb[0].mxu0 %v1609
    %v2937 = vpop.f32.mrb[0].mxu0
    %v2938 = vadd.f32 %v1831, %v2937
    %v2939 = vpop.f32.mrb[0].mxu0
    %v2940 = vadd.f32 %v1835, %v2939
    %v2941 = vpop.f32.mrb[0].mxu0
    %v2942 = vadd.f32 %v1831, %v2941
    %v2943 = vpop.f32.mrb[0].mxu0
    %v2944 = vadd.f32 %v1835, %v2943
    %2945 = vmatprep.mubr.bf16.mxu0 %v1617
    %2946 = vmatmul.mubr.bf16.gmra.mrb[0].mxu0 %v1616
    %v2947 = vpop.f32.mrb[0].mxu0
    %v2948 = vadd.f32 %v1831, %v2947
    %v2949 = vpop.f32.mrb[0].mxu0
    %v2950 = vadd.f32 %v1835, %v2949
    %v2951 = vpop.f32.mrb[0].mxu0
    %v2952 = vadd.f32 %v1831, %v2951
    %v2953 = vpop.f32.mrb[0].mxu0
    %v2954 = vadd.f32 %v1835, %v2953
    %2955 = vmatprep.mubr.bf16.mxu0 %v1624
    %2956 = vmatmul.mubr.bf16.gmra.mrb[0].mxu0 %v1623
    %v2957 = vpop.f32.mrb[0].mxu0
    %v2958 = vadd.f32 %v1831, %v2957
    %v2959 = vpop.f32.mrb[0].mxu0
    %v2960 = vadd.f32 %v1835, %v2959
    %v2961 = vpop.f32.mrb[0].mxu0
    %v2962 = vadd.f32 %v1831, %v2961
    %v2963 = vpop.f32.mrb[0].mxu0
    %v2964 = vadd.f32 %v1835, %v2963
    %2965 = vdwg.mxu0
    %2966 = vmatprep.subr.bf16.mxu0 %v2501
    %2967 = vmatpush1.bf16.msra.mxu0 %v2500
    %2968 = vmatprep.subr.bf16.mxu0 %v2505
    %2969 = vmatpush1.bf16.msra.mxu0 %v2504
    %2970 = vmatprep.subr.bf16.mxu0 %v2509
    %2971 = vmatpush1.bf16.msra.mxu0 %v2508
    %2972 = vmatprep.subr.bf16.mxu0 %v2513
    %2973 = vmatpush1.bf16.msra.mxu0 %v2512
    %2974 = vmatprep.subr.bf16.mxu0 %v2517
    %2975 = vmatpush1.bf16.msra.mxu0 %v2516
    %2976 = vmatprep.subr.bf16.mxu0 %v2521
    %2977 = vmatpush1.bf16.msra.mxu0 %v2520
    %2978 = vmatprep.subr.bf16.mxu0 %v2525
    %2979 = vmatpush1.bf16.msra.mxu0 %v2524
    %2980 = vmatprep.subr.bf16.mxu0 %v2529
    %2981 = vmatpush1.bf16.msra.mxu0 %v2528
    %2982 = vmatprep.subr.bf16.mxu0 %v2533
    %2983 = vmatpush1.bf16.msra.mxu0 %v2532
    %2984 = vmatprep.subr.bf16.mxu0 %v2537
    %2985 = vmatpush1.bf16.msra.mxu0 %v2536
    %2986 = vmatprep.subr.bf16.mxu0 %v2541
    %2987 = vmatpush1.bf16.msra.mxu0 %v2540
    %2988 = vmatprep.subr.bf16.mxu0 %v2545
    %2989 = vmatpush1.bf16.msra.mxu0 %v2544
    %2990 = vmatprep.subr.bf16.mxu0 %v2549
    %2991 = vmatpush1.bf16.msra.mxu0 %v2548
    %2992 = vmatprep.subr.bf16.mxu0 %v2553
    %2993 = vmatpush1.bf16.msra.mxu0 %v2552
    %2994 = vmatprep.subr.bf16.mxu0 %v2557
    %2995 = vmatpush1.bf16.msra.mxu0 %v2556
    %2996 = vmatprep.subr.bf16.mxu0 %v2561
    %2997 = vmatpush1.bf16.msra.mxu0 %v2560
    %2998 = vmatprep.mubr.bf16.mxu0 %v1577
    %2999 = vmatmul.mubr.bf16.gmra.mrb[0].mxu0 %v1576
    %v3000 = vpop.f32.mrb[0].mxu0
    %v3001 = vadd.f32 %v2888, %v3000
    %v3002 = vpop.f32.mrb[0].mxu0
    %v3003 = vadd.f32 %v2890, %v3002
    %v3004 = vpop.f32.mrb[0].mxu0
    %v3005 = vadd.f32 %v2892, %v3004
    %v3006 = vpop.f32.mrb[0].mxu0
    %v3007 = vadd.f32 %v2894, %v3006
    %3008 = vmatprep.mubr.bf16.mxu0 %v1584
    %3009 = vmatmul.mubr.bf16.gmra.mrb[0].mxu0 %v1583
    %v3010 = vpop.f32.mrb[0].mxu0
    %v3011 = vadd.f32 %v2898, %v3010
    %v3012 = vpop.f32.mrb[0].mxu0
    %v3013 = vadd.f32 %v2900, %v3012
    %v3014 = vpop.f32.mrb[0].mxu0
    %v3015 = vadd.f32 %v2902, %v3014
    %v3016 = vpop.f32.mrb[0].mxu0
    %v3017 = vadd.f32 %v2904, %v3016
    %3018 = vmatprep.mubr.bf16.mxu0 %v1591
    %3019 = vmatmul.mubr.bf16.gmra.mrb[0].mxu0 %v1590
    %v3020 = vpop.f32.mrb[0].mxu0
    %v3021 = vadd.f32 %v2908, %v3020
    %v3022 = vpop.f32.mrb[0].mxu0
    %v3023 = vadd.f32 %v2910, %v3022
    %v3024 = vpop.f32.mrb[0].mxu0
    %v3025 = vadd.f32 %v2912, %v3024
    %v3026 = vpop.f32.mrb[0].mxu0
    %v3027 = vadd.f32 %v2914, %v3026
    %3028 = vmatprep.mubr.bf16.mxu0 %v1598
    %3029 = vmatmul.mubr.bf16.gmra.mrb[0].mxu0 %v1597
    %v3030 = vpop.f32.mrb[0].mxu0
    %v3031 = vadd.f32 %v2918, %v3030
    %v3032 = vpop.f32.mrb[0].mxu0
    %v3033 = vadd.f32 %v2920, %v3032
    %v3034 = vpop.f32.mrb[0].mxu0
    %v3035 = vadd.f32 %v2922, %v3034
    %v3036 = vpop.f32.mrb[0].mxu0
    %v3037 = vadd.f32 %v2924, %v3036
    %3038 = vmatprep.mubr.bf16.mxu0 %v1605
    %3039 = vmatmul.mubr.bf16.gmra.mrb[0].mxu0 %v1604
    %v3040 = vpop.f32.mrb[0].mxu0
    %v3041 = vadd.f32 %v2928, %v3040
    %v3042 = vpop.f32.mrb[0].mxu0
    %v3043 = vadd.f32 %v2930, %v3042
    %v3044 = vpop.f32.mrb[0].mxu0
    %v3045 = vadd.f32 %v2932, %v3044
    %v3046 = vpop.f32.mrb[0].mxu0
    %v3047 = vadd.f32 %v2934, %v3046
    %3048 = vmatprep.mubr.bf16.mxu0 %v1612
    %3049 = vmatmul.mubr.bf16.gmra.mrb[0].mxu0 %v1611
    %v3050 = vpop.f32.mrb[0].mxu0
    %v3051 = vadd.f32 %v2938, %v3050
    %v3052 = vpop.f32.mrb[0].mxu0
    %v3053 = vadd.f32 %v2940, %v3052
    %v3054 = vpop.f32.mrb[0].mxu0
    %v3055 = vadd.f32 %v2942, %v3054
    %v3056 = vpop.f32.mrb[0].mxu0
    %v3057 = vadd.f32 %v2944, %v3056
    %3058 = vmatprep.mubr.bf16.mxu0 %v1619
    %3059 = vmatmul.mubr.bf16.gmra.mrb[0].mxu0 %v1618
    %v3060 = vpop.f32.mrb[0].mxu0
    %v3061 = vadd.f32 %v2948, %v3060
    %v3062 = vpop.f32.mrb[0].mxu0
    %v3063 = vadd.f32 %v2950, %v3062
    %v3064 = vpop.f32.mrb[0].mxu0
    %v3065 = vadd.f32 %v2952, %v3064
    %v3066 = vpop.f32.mrb[0].mxu0
    %v3067 = vadd.f32 %v2954, %v3066
    %3068 = vmatprep.mubr.bf16.mxu0 %v1626
    %3069 = vmatmul.mubr.bf16.gmra.mrb[0].mxu0 %v1625
    %v3070 = vpop.f32.mrb[0].mxu0
    %v3071 = vadd.f32 %v2958, %v3070
    %v3072 = vpop.f32.mrb[0].mxu0
    %v3073 = vadd.f32 %v2960, %v3072
    %v3074 = vpop.f32.mrb[0].mxu0
    %v3075 = vadd.f32 %v2962, %v3074
    %v3076 = vpop.f32.mrb[0].mxu0
    %v3077 = vadd.f32 %v2964, %v3076
    %3078 = vdwg.mxu0
    %3079 = vmatprep.subr.bf16.mxu0 %v2565
    %3080 = vmatpush1.bf16.msra.mxu0 %v2564
    %3081 = vmatprep.subr.bf16.mxu0 %v2569
    %3082 = vmatpush1.bf16.msra.mxu0 %v2568
    %3083 = vmatprep.subr.bf16.mxu0 %v2573
    %3084 = vmatpush1.bf16.msra.mxu0 %v2572
    %3085 = vmatprep.subr.bf16.mxu0 %v2577
    %3086 = vmatpush1.bf16.msra.mxu0 %v2576
    %3087 = vmatprep.subr.bf16.mxu0 %v2581
    %3088 = vmatpush1.bf16.msra.mxu0 %v2580
    %3089 = vmatprep.subr.bf16.mxu0 %v2585
    %3090 = vmatpush1.bf16.msra.mxu0 %v2584
    %3091 = vmatprep.subr.bf16.mxu0 %v2589
    %3092 = vmatpush1.bf16.msra.mxu0 %v2588
    %3093 = vmatprep.subr.bf16.mxu0 %v2593
    %3094 = vmatpush1.bf16.msra.mxu0 %v2592
    %3095 = vmatprep.subr.bf16.mxu0 %v2597
    %3096 = vmatpush1.bf16.msra.mxu0 %v2596
    %3097 = vmatprep.subr.bf16.mxu0 %v2601
    %3098 = vmatpush1.bf16.msra.mxu0 %v2600
    %3099 = vmatprep.subr.bf16.mxu0 %v2605
    %3100 = vmatpush1.bf16.msra.mxu0 %v2604
    %3101 = vmatprep.subr.bf16.mxu0 %v2609
    %3102 = vmatpush1.bf16.msra.mxu0 %v2608
    %3103 = vmatprep.subr.bf16.mxu0 %v2613
    %3104 = vmatpush1.bf16.msra.mxu0 %v2612
    %3105 = vmatprep.subr.bf16.mxu0 %v2617
    %3106 = vmatpush1.bf16.msra.mxu0 %v2616
    %3107 = vmatprep.subr.bf16.mxu0 %v2621
    %3108 = vmatpush1.bf16.msra.mxu0 %v2620
    %3109 = vmatprep.subr.bf16.mxu0 %v2625
    %3110 = vmatpush1.bf16.msra.mxu0 %v2624
    %3111 = vmatprep.mubr.bf16.mxu0 %v1579
    %3112 = vmatmul.mubr.bf16.gmra.mrb[0].mxu0 %v1578
    %v3113 = vpop.f32.mrb[0].mxu0
    %v3114 = vadd.f32 %v3001, %v3113
    %v3115 = vpop.f32.mrb[0].mxu0
    %v3116 = vadd.f32 %v3003, %v3115
    %v3117 = vpop.f32.mrb[0].mxu0
    %v3118 = vadd.f32 %v3005, %v3117
    %v3119 = vpop.f32.mrb[0].mxu0
    %v3120 = vadd.f32 %v3007, %v3119
    %3121 = vmatprep.mubr.bf16.mxu0 %v1586
    %3122 = vmatmul.mubr.bf16.gmra.mrb[0].mxu0 %v1585
    %v3123 = vpop.f32.mrb[0].mxu0
    %v3124 = vadd.f32 %v3011, %v3123
    %v3125 = vpop.f32.mrb[0].mxu0
    %v3126 = vadd.f32 %v3013, %v3125
    %v3127 = vpop.f32.mrb[0].mxu0
    %v3128 = vadd.f32 %v3015, %v3127
    %v3129 = vpop.f32.mrb[0].mxu0
    %v3130 = vadd.f32 %v3017, %v3129
    %3131 = vmatprep.mubr.bf16.mxu0 %v1593
    %3132 = vmatmul.mubr.bf16.gmra.mrb[0].mxu0 %v1592
    %v3133 = vpop.f32.mrb[0].mxu0
    %v3134 = vadd.f32 %v3021, %v3133
    %v3135 = vpop.f32.mrb[0].mxu0
    %v3136 = vadd.f32 %v3023, %v3135
    %v3137 = vpop.f32.mrb[0].mxu0
    %v3138 = vadd.f32 %v3025, %v3137
    %v3139 = vpop.f32.mrb[0].mxu0
    %v3140 = vadd.f32 %v3027, %v3139
    %3141 = vmatprep.mubr.bf16.mxu0 %v1600
    %3142 = vmatmul.mubr.bf16.gmra.mrb[0].mxu0 %v1599
    %v3143 = vpop.f32.mrb[0].mxu0
    %v3144 = vadd.f32 %v3031, %v3143
    %v3145 = vpop.f32.mrb[0].mxu0
    %v3146 = vadd.f32 %v3033, %v3145
    %v3147 = vpop.f32.mrb[0].mxu0
    %v3148 = vadd.f32 %v3035, %v3147
    %v3149 = vpop.f32.mrb[0].mxu0
    %v3150 = vadd.f32 %v3037, %v3149
    %3151 = vmatprep.mubr.bf16.mxu0 %v1607
    %3152 = vmatmul.mubr.bf16.gmra.mrb[0].mxu0 %v1606
    %v3153 = vpop.f32.mrb[0].mxu0
    %v3154 = vadd.f32 %v3041, %v3153
    %v3155 = vpop.f32.mrb[0].mxu0
    %v3156 = vadd.f32 %v3043, %v3155
    %v3157 = vpop.f32.mrb[0].mxu0
    %v3158 = vadd.f32 %v3045, %v3157
    %v3159 = vpop.f32.mrb[0].mxu0
    %v3160 = vadd.f32 %v3047, %v3159
    %3161 = vmatprep.mubr.bf16.mxu0 %v1614
    %3162 = vmatmul.mubr.bf16.gmra.mrb[0].mxu0 %v1613
    %v3163 = vpop.f32.mrb[0].mxu0
    %v3164 = vadd.f32 %v3051, %v3163
    %v3165 = vpop.f32.mrb[0].mxu0
    %v3166 = vadd.f32 %v3053, %v3165
    %v3167 = vpop.f32.mrb[0].mxu0
    %v3168 = vadd.f32 %v3055, %v3167
    %v3169 = vpop.f32.mrb[0].mxu0
    %v3170 = vadd.f32 %v3057, %v3169
    %3171 = vmatprep.mubr.bf16.mxu0 %v1621
    %3172 = vmatmul.mubr.bf16.gmra.mrb[0].mxu0 %v1620
    %v3173 = vpop.f32.mrb[0].mxu0
    %v3174 = vadd.f32 %v3061, %v3173
    %v3175 = vpop.f32.mrb[0].mxu0
    %v3176 = vadd.f32 %v3063, %v3175
    %v3177 = vpop.f32.mrb[0].mxu0
    %v3178 = vadd.f32 %v3065, %v3177
    %v3179 = vpop.f32.mrb[0].mxu0
    %v3180 = vadd.f32 %v3067, %v3179
    %3181 = vmatprep.mubr.bf16.mxu0 %v1628
    %3182 = vmatmul.mubr.bf16.gmra.mrb[0].mxu0 %v1627
    %v3183 = vpop.f32.mrb[0].mxu0
    %v3184 = vadd.f32 %v3071, %v3183
    %v3185 = vpop.f32.mrb[0].mxu0
    %v3186 = vadd.f32 %v3073, %v3185
    %v3187 = vpop.f32.mrb[0].mxu0
    %v3188 = vadd.f32 %v3075, %v3187
    %v3189 = vpop.f32.mrb[0].mxu0
    %v3190 = vadd.f32 %v3077, %v3189
    %3191 = vdwg.mxu0
    %3192 = vmatprep.subr.bf16.mxu0 %v2629
    %3193 = vmatpush1.bf16.msra.mxu0 %v2628
    %3194 = vmatprep.subr.bf16.mxu0 0
    %3195 = vmatpush1.bf16.msra.mxu0 0
    %3196 = vmatprep.subr.bf16.mxu0 0
    %3197 = vmatpush1.bf16.msra.mxu0 0
    %3198 = vmatprep.subr.bf16.mxu0 0
    %3199 = vmatpush1.bf16.msra.mxu0 0
    %3200 = vmatprep.subr.bf16.mxu0 0
    %3201 = vmatpush1.bf16.msra.mxu0 0
    %3202 = vmatprep.subr.bf16.mxu0 0
    %3203 = vmatpush1.bf16.msra.mxu0 0
    %3204 = vmatprep.subr.bf16.mxu0 0
    %3205 = vmatpush1.bf16.msra.mxu0 0
    %3206 = vmatprep.subr.bf16.mxu0 0
    %3207 = vmatpush1.bf16.msra.mxu0 0
    %3208 = vmatprep.subr.bf16.mxu0 0
    %3209 = vmatpush1.bf16.msra.mxu0 0
    %3210 = vmatprep.subr.bf16.mxu0 0
    %3211 = vmatpush1.bf16.msra.mxu0 0
    %3212 = vmatprep.subr.bf16.mxu0 0
    %3213 = vmatpush1.bf16.msra.mxu0 0
    %3214 = vmatprep.subr.bf16.mxu0 0
    %3215 = vmatpush1.bf16.msra.mxu0 0
    %3216 = vmatprep.subr.bf16.mxu0 0
    %3217 = vmatpush1.bf16.msra.mxu0 0
    %3218 = vmatprep.subr.bf16.mxu0 0
    %3219 = vmatpush1.bf16.msra.mxu0 0
    %3220 = vmatprep.subr.bf16.mxu0 0
    %3221 = vmatpush1.bf16.msra.mxu0 0
    %3222 = vmatprep.subr.bf16.mxu0 0
    %3223 = vmatpush1.bf16.msra.mxu0 0
    %3224 = vmatprep.mubr.bf16.mxu0 0
    %3225 = vmatmul.mubr.bf16.gmra.mrb[0].mxu0 %v2830
    %v3226 = vpop.f32.mrb[0].mxu0
    %v3227 = vadd.f32 %v3114, %v3226
    %v3228 = vpop.f32.mrb[0].mxu0
    %v3229 = vadd.f32 %v3116, %v3228
    %v3230 = vpop.f32.mrb[0].mxu0
    %v3231 = vadd.f32 %v3118, %v3230
    %v3232 = vpop.f32.mrb[0].mxu0
    %v3233 = vadd.f32 %v3120, %v3232
    %3234 = vmatprep.mubr.bf16.mxu0 0
    %3235 = vmatmul.mubr.bf16.gmra.mrb[0].mxu0 %v2833
    %v3236 = vpop.f32.mrb[0].mxu0
    %v3237 = vadd.f32 %v3124, %v3236
    %v3238 = vpop.f32.mrb[0].mxu0
    %v3239 = vadd.f32 %v3126, %v3238
    %v3240 = vpop.f32.mrb[0].mxu0
    %v3241 = vadd.f32 %v3128, %v3240
    %v3242 = vpop.f32.mrb[0].mxu0
    %v3243 = vadd.f32 %v3130, %v3242
    %3244 = vmatprep.mubr.bf16.mxu0 0
    %3245 = vmatmul.mubr.bf16.gmra.mrb[0].mxu0 %v2836
    %v3246 = vpop.f32.mrb[0].mxu0
    %v3247 = vadd.f32 %v3134, %v3246
    %v3248 = vpop.f32.mrb[0].mxu0
    %v3249 = vadd.f32 %v3136, %v3248
    %v3250 = vpop.f32.mrb[0].mxu0
    %v3251 = vadd.f32 %v3138, %v3250
    %v3252 = vpop.f32.mrb[0].mxu0
    %v3253 = vadd.f32 %v3140, %v3252
    %3254 = vmatprep.mubr.bf16.mxu0 0
    %3255 = vmatmul.mubr.bf16.gmra.mrb[0].mxu0 %v2839
    %v3256 = vpop.f32.mrb[0].mxu0
    %v3257 = vadd.f32 %v3144, %v3256
    %v3258 = vpop.f32.mrb[0].mxu0
    %v3259 = vadd.f32 %v3146, %v3258
    %v3260 = vpop.f32.mrb[0].mxu0
    %v3261 = vadd.f32 %v3148, %v3260
    %v3262 = vpop.f32.mrb[0].mxu0
    %v3263 = vadd.f32 %v3150, %v3262
    %3264 = vmatprep.mubr.bf16.mxu0 0
    %3265 = vmatmul.mubr.bf16.gmra.mrb[0].mxu0 %v2842
    %v3266 = vpop.f32.mrb[0].mxu0
    %v3267 = vadd.f32 %v3154, %v3266
    %v3268 = vpop.f32.mrb[0].mxu0
    %v3269 = vadd.f32 %v3156, %v3268
    %v3270 = vpop.f32.mrb[0].mxu0
    %v3271 = vadd.f32 %v3158, %v3270
    %v3272 = vpop.f32.mrb[0].mxu0
    %v3273 = vadd.f32 %v3160, %v3272
    %3274 = vmatprep.mubr.bf16.mxu0 0
    %3275 = vmatmul.mubr.bf16.gmra.mrb[0].mxu0 %v2845
    %v3276 = vpop.f32.mrb[0].mxu0
    %v3277 = vadd.f32 %v3164, %v3276
    %v3278 = vpop.f32.mrb[0].mxu0
    %v3279 = vadd.f32 %v3166, %v3278
    %v3280 = vpop.f32.mrb[0].mxu0
    %v3281 = vadd.f32 %v3168, %v3280
    %v3282 = vpop.f32.mrb[0].mxu0
    %v3283 = vadd.f32 %v3170, %v3282
    %3284 = vmatprep.mubr.bf16.mxu0 0
    %3285 = vmatmul.mubr.bf16.gmra.mrb[0].mxu0 %v2848
    %v3286 = vpop.f32.mrb[0].mxu0
    %v3287 = vadd.f32 %v3174, %v3286
    %v3288 = vpop.f32.mrb[0].mxu0
    %v3289 = vadd.f32 %v3176, %v3288
    %v3290 = vpop.f32.mrb[0].mxu0
    %v3291 = vadd.f32 %v3178, %v3290
    %v3292 = vpop.f32.mrb[0].mxu0
    %v3293 = vadd.f32 %v3180, %v3292
    %3294 = vmatprep.mubr.bf16.mxu0 0
    %3295 = vmatmul.mubr.bf16.gmra.mrb[0].mxu0 %v2851
    %v3296 = vpop.f32.mrb[0].mxu0
    %v3297 = vadd.f32 %v3184, %v3296
    %v3298 = vpop.f32.mrb[0].mxu0
    %v3299 = vadd.f32 %v3186, %v3298
    %v3300 = vpop.f32.mrb[0].mxu0
    %v3301 = vadd.f32 %v3188, %v3300
    %v3302 = vpop.f32.mrb[0].mxu0
    %v3303 = vadd.f32 %v3190, %v3302
    %3304 = vdwg.mxu0
    %3305 = vmatprep.subr.bf16.mxu0 %v2439
    %3306 = vmatpush1.bf16.msra.mxu0 %v2438
    %3307 = vmatprep.subr.bf16.mxu0 %v2443
    %3308 = vmatpush1.bf16.msra.mxu0 %v2442
    %3309 = vmatprep.subr.bf16.mxu0 %v2447
    %3310 = vmatpush1.bf16.msra.mxu0 %v2446
    %3311 = vmatprep.subr.bf16.mxu0 %v2451
    %3312 = vmatpush1.bf16.msra.mxu0 %v2450
    %3313 = vmatprep.subr.bf16.mxu0 %v2455
    %3314 = vmatpush1.bf16.msra.mxu0 %v2454
    %3315 = vmatprep.subr.bf16.mxu0 %v2459
    %3316 = vmatpush1.bf16.msra.mxu0 %v2458
    %3317 = vmatprep.subr.bf16.mxu0 %v2463
    %3318 = vmatpush1.bf16.msra.mxu0 %v2462
    %3319 = vmatprep.subr.bf16.mxu0 %v2467
    %3320 = vmatpush1.bf16.msra.mxu0 %v2466
    %3321 = vmatprep.subr.bf16.mxu0 %v2471
    %3322 = vmatpush1.bf16.msra.mxu0 %v2470
    %3323 = vmatprep.subr.bf16.mxu0 %v2475
    %3324 = vmatpush1.bf16.msra.mxu0 %v2474
    %3325 = vmatprep.subr.bf16.mxu0 %v2479
    %3326 = vmatpush1.bf16.msra.mxu0 %v2478
    %3327 = vmatprep.subr.bf16.mxu0 %v2483
    %3328 = vmatpush1.bf16.msra.mxu0 %v2482
    %3329 = vmatprep.subr.bf16.mxu0 %v2487
    %3330 = vmatpush1.bf16.msra.mxu0 %v2486
    %3331 = vmatprep.subr.bf16.mxu0 %v2491
    %3332 = vmatpush1.bf16.msra.mxu0 %v2490
    %3333 = vmatprep.subr.bf16.mxu0 %v2495
    %3334 = vmatpush1.bf16.msra.mxu0 %v2494
    %3335 = vmatprep.subr.bf16.mxu0 %v2499
    %3336 = vmatpush1.bf16.msra.mxu0 %v2498
    %3337 = vmatprep.mubr.bf16.mxu0 %v1575
    %3338 = vmatmul.mubr.bf16.gmra.mrb[0].mxu0 %v1574
    %v3339 = vpop.f32.mrb[0].mxu0
    %v3340 = vadd.f32 %v1839, %v3339
    %v3341 = vpop.f32.mrb[0].mxu0
    %v3342 = vadd.f32 %v1843, %v3341
    %v3343 = vpop.f32.mrb[0].mxu0
    %v3344 = vadd.f32 %v1839, %v3343
    %v3345 = vpop.f32.mrb[0].mxu0
    %v3346 = vadd.f32 %v1843, %v3345
    %3347 = vmatprep.mubr.bf16.mxu0 %v1582
    %3348 = vmatmul.mubr.bf16.gmra.mrb[0].mxu0 %v1581
    %v3349 = vpop.f32.mrb[0].mxu0
    %v3350 = vadd.f32 %v1839, %v3349
    %v3351 = vpop.f32.mrb[0].mxu0
    %v3352 = vadd.f32 %v1843, %v3351
    %v3353 = vpop.f32.mrb[0].mxu0
    %v3354 = vadd.f32 %v1839, %v3353
    %v3355 = vpop.f32.mrb[0].mxu0
    %v3356 = vadd.f32 %v1843, %v3355
    %3357 = vmatprep.mubr.bf16.mxu0 %v1589
    %3358 = vmatmul.mubr.bf16.gmra.mrb[0].mxu0 %v1588
    %v3359 = vpop.f32.mrb[0].mxu0
    %v3360 = vadd.f32 %v1839, %v3359
    %v3361 = vpop.f32.mrb[0].mxu0
    %v3362 = vadd.f32 %v1843, %v3361
    %v3363 = vpop.f32.mrb[0].mxu0
    %v3364 = vadd.f32 %v1839, %v3363
    %v3365 = vpop.f32.mrb[0].mxu0
    %v3366 = vadd.f32 %v1843, %v3365
    %3367 = vmatprep.mubr.bf16.mxu0 %v1596
    %3368 = vmatmul.mubr.bf16.gmra.mrb[0].mxu0 %v1595
    %v3369 = vpop.f32.mrb[0].mxu0
    %v3370 = vadd.f32 %v1839, %v3369
    %v3371 = vpop.f32.mrb[0].mxu0
    %v3372 = vadd.f32 %v1843, %v3371
    %v3373 = vpop.f32.mrb[0].mxu0
    %v3374 = vadd.f32 %v1839, %v3373
    %v3375 = vpop.f32.mrb[0].mxu0
    %v3376 = vadd.f32 %v1843, %v3375
    %3377 = vmatprep.mubr.bf16.mxu0 %v1603
    %3378 = vmatmul.mubr.bf16.gmra.mrb[0].mxu0 %v1602
    %v3379 = vpop.f32.mrb[0].mxu0
    %v3380 = vadd.f32 %v1839, %v3379
    %v3381 = vpop.f32.mrb[0].mxu0
    %v3382 = vadd.f32 %v1843, %v3381
    %v3383 = vpop.f32.mrb[0].mxu0
    %v3384 = vadd.f32 %v1839, %v3383
    %v3385 = vpop.f32.mrb[0].mxu0
    %v3386 = vadd.f32 %v1843, %v3385
    %3387 = vmatprep.mubr.bf16.mxu0 %v1610
    %3388 = vmatmul.mubr.bf16.gmra.mrb[0].mxu0 %v1609
    %v3389 = vpop.f32.mrb[0].mxu0
    %v3390 = vadd.f32 %v1839, %v3389
    %v3391 = vpop.f32.mrb[0].mxu0
    %v3392 = vadd.f32 %v1843, %v3391
    %v3393 = vpop.f32.mrb[0].mxu0
    %v3394 = vadd.f32 %v1839, %v3393
    %v3395 = vpop.f32.mrb[0].mxu0
    %v3396 = vadd.f32 %v1843, %v3395
    %3397 = vmatprep.mubr.bf16.mxu0 %v1617
    %3398 = vmatmul.mubr.bf16.gmra.mrb[0].mxu0 %v1616
    %v3399 = vpop.f32.mrb[0].mxu0
    %v3400 = vadd.f32 %v1839, %v3399
    %v3401 = vpop.f32.mrb[0].mxu0
    %v3402 = vadd.f32 %v1843, %v3401
    %v3403 = vpop.f32.mrb[0].mxu0
    %v3404 = vadd.f32 %v1839, %v3403
    %v3405 = vpop.f32.mrb[0].mxu0
    %v3406 = vadd.f32 %v1843, %v3405
    %3407 = vmatprep.mubr.bf16.mxu0 %v1624
    %3408 = vmatmul.mubr.bf16.gmra.mrb[0].mxu0 %v1623
    %v3409 = vpop.f32.mrb[0].mxu0
    %v3410 = vadd.f32 %v1839, %v3409
    %v3411 = vpop.f32.mrb[0].mxu0
    %v3412 = vadd.f32 %v1843, %v3411
    %v3413 = vpop.f32.mrb[0].mxu0
    %v3414 = vadd.f32 %v1839, %v3413
    %v3415 = vpop.f32.mrb[0].mxu0
    %v3416 = vadd.f32 %v1843, %v3415
    %3417 = vdwg.mxu0
    %3418 = vmatprep.subr.bf16.mxu0 %v2503
    %3419 = vmatpush1.bf16.msra.mxu0 %v2502
    %3420 = vmatprep.subr.bf16.mxu0 %v2507
    %3421 = vmatpush1.bf16.msra.mxu0 %v2506
    %3422 = vmatprep.subr.bf16.mxu0 %v2511
    %3423 = vmatpush1.bf16.msra.mxu0 %v2510
    %3424 = vmatprep.subr.bf16.mxu0 %v2515
    %3425 = vmatpush1.bf16.msra.mxu0 %v2514
    %3426 = vmatprep.subr.bf16.mxu0 %v2519
    %3427 = vmatpush1.bf16.msra.mxu0 %v2518
    %3428 = vmatprep.subr.bf16.mxu0 %v2523
    %3429 = vmatpush1.bf16.msra.mxu0 %v2522
    %3430 = vmatprep.subr.bf16.mxu0 %v2527
    %3431 = vmatpush1.bf16.msra.mxu0 %v2526
    %3432 = vmatprep.subr.bf16.mxu0 %v2531
    %3433 = vmatpush1.bf16.msra.mxu0 %v2530
    %3434 = vmatprep.subr.bf16.mxu0 %v2535
    %3435 = vmatpush1.bf16.msra.mxu0 %v2534
    %3436 = vmatprep.subr.bf16.mxu0 %v2539
    %3437 = vmatpush1.bf16.msra.mxu0 %v2538
    %3438 = vmatprep.subr.bf16.mxu0 %v2543
    %3439 = vmatpush1.bf16.msra.mxu0 %v2542
    %3440 = vmatprep.subr.bf16.mxu0 %v2547
    %3441 = vmatpush1.bf16.msra.mxu0 %v2546
    %3442 = vmatprep.subr.bf16.mxu0 %v2551
    %3443 = vmatpush1.bf16.msra.mxu0 %v2550
    %3444 = vmatprep.subr.bf16.mxu0 %v2555
    %3445 = vmatpush1.bf16.msra.mxu0 %v2554
    %3446 = vmatprep.subr.bf16.mxu0 %v2559
    %3447 = vmatpush1.bf16.msra.mxu0 %v2558
    %3448 = vmatprep.subr.bf16.mxu0 %v2563
    %3449 = vmatpush1.bf16.msra.mxu0 %v2562
    %3450 = vmatprep.mubr.bf16.mxu0 %v1577
    %3451 = vmatmul.mubr.bf16.gmra.mrb[0].mxu0 %v1576
    %v3452 = vpop.f32.mrb[0].mxu0
    %v3453 = vadd.f32 %v3340, %v3452
    %v3454 = vpop.f32.mrb[0].mxu0
    %v3455 = vadd.f32 %v3342, %v3454
    %v3456 = vpop.f32.mrb[0].mxu0
    %v3457 = vadd.f32 %v3344, %v3456
    %v3458 = vpop.f32.mrb[0].mxu0
    %v3459 = vadd.f32 %v3346, %v3458
    %3460 = vmatprep.mubr.bf16.mxu0 %v1584
    %3461 = vmatmul.mubr.bf16.gmra.mrb[0].mxu0 %v1583
    %v3462 = vpop.f32.mrb[0].mxu0
    %v3463 = vadd.f32 %v3350, %v3462
    %v3464 = vpop.f32.mrb[0].mxu0
    %v3465 = vadd.f32 %v3352, %v3464
    %v3466 = vpop.f32.mrb[0].mxu0
    %v3467 = vadd.f32 %v3354, %v3466
    %v3468 = vpop.f32.mrb[0].mxu0
    %v3469 = vadd.f32 %v3356, %v3468
    %3470 = vmatprep.mubr.bf16.mxu0 %v1591
    %3471 = vmatmul.mubr.bf16.gmra.mrb[0].mxu0 %v1590
    %v3472 = vpop.f32.mrb[0].mxu0
    %v3473 = vadd.f32 %v3360, %v3472
    %v3474 = vpop.f32.mrb[0].mxu0
    %v3475 = vadd.f32 %v3362, %v3474
    %v3476 = vpop.f32.mrb[0].mxu0
    %v3477 = vadd.f32 %v3364, %v3476
    %v3478 = vpop.f32.mrb[0].mxu0
    %v3479 = vadd.f32 %v3366, %v3478
    %3480 = vmatprep.mubr.bf16.mxu0 %v1598
    %3481 = vmatmul.mubr.bf16.gmra.mrb[0].mxu0 %v1597
    %v3482 = vpop.f32.mrb[0].mxu0
    %v3483 = vadd.f32 %v3370, %v3482
    %v3484 = vpop.f32.mrb[0].mxu0
    %v3485 = vadd.f32 %v3372, %v3484
    %v3486 = vpop.f32.mrb[0].mxu0
    %v3487 = vadd.f32 %v3374, %v3486
    %v3488 = vpop.f32.mrb[0].mxu0
    %v3489 = vadd.f32 %v3376, %v3488
    %3490 = vmatprep.mubr.bf16.mxu0 %v1605
    %3491 = vmatmul.mubr.bf16.gmra.mrb[0].mxu0 %v1604
    %v3492 = vpop.f32.mrb[0].mxu0
    %v3493 = vadd.f32 %v3380, %v3492
    %v3494 = vpop.f32.mrb[0].mxu0
    %v3495 = vadd.f32 %v3382, %v3494
    %v3496 = vpop.f32.mrb[0].mxu0
    %v3497 = vadd.f32 %v3384, %v3496
    %v3498 = vpop.f32.mrb[0].mxu0
    %v3499 = vadd.f32 %v3386, %v3498
    %3500 = vmatprep.mubr.bf16.mxu0 %v1612
    %3501 = vmatmul.mubr.bf16.gmra.mrb[0].mxu0 %v1611
    %v3502 = vpop.f32.mrb[0].mxu0
    %v3503 = vadd.f32 %v3390, %v3502
    %v3504 = vpop.f32.mrb[0].mxu0
    %v3505 = vadd.f32 %v3392, %v3504
    %v3506 = vpop.f32.mrb[0].mxu0
    %v3507 = vadd.f32 %v3394, %v3506
    %v3508 = vpop.f32.mrb[0].mxu0
    %v3509 = vadd.f32 %v3396, %v3508
    %3510 = vmatprep.mubr.bf16.mxu0 %v1619
    %3511 = vmatmul.mubr.bf16.gmra.mrb[0].mxu0 %v1618
    %v3512 = vpop.f32.mrb[0].mxu0
    %v3513 = vadd.f32 %v3400, %v3512
    %v3514 = vpop.f32.mrb[0].mxu0
    %v3515 = vadd.f32 %v3402, %v3514
    %v3516 = vpop.f32.mrb[0].mxu0
    %v3517 = vadd.f32 %v3404, %v3516
    %v3518 = vpop.f32.mrb[0].mxu0
    %v3519 = vadd.f32 %v3406, %v3518
    %3520 = vmatprep.mubr.bf16.mxu0 %v1626
    %3521 = vmatmul.mubr.bf16.gmra.mrb[0].mxu0 %v1625
    %v3522 = vpop.f32.mrb[0].mxu0
    %v3523 = vadd.f32 %v3410, %v3522
    %v3524 = vpop.f32.mrb[0].mxu0
    %v3525 = vadd.f32 %v3412, %v3524
    %v3526 = vpop.f32.mrb[0].mxu0
    %v3527 = vadd.f32 %v3414, %v3526
    %v3528 = vpop.f32.mrb[0].mxu0
    %v3529 = vadd.f32 %v3416, %v3528
    %3530 = vdwg.mxu0
    %3531 = vmatprep.subr.bf16.mxu0 %v2567
    %3532 = vmatpush1.bf16.msra.mxu0 %v2566
    %3533 = vmatprep.subr.bf16.mxu0 %v2571
    %3534 = vmatpush1.bf16.msra.mxu0 %v2570
    %3535 = vmatprep.subr.bf16.mxu0 %v2575
    %3536 = vmatpush1.bf16.msra.mxu0 %v2574
    %3537 = vmatprep.subr.bf16.mxu0 %v2579
    %3538 = vmatpush1.bf16.msra.mxu0 %v2578
    %3539 = vmatprep.subr.bf16.mxu0 %v2583
    %3540 = vmatpush1.bf16.msra.mxu0 %v2582
    %3541 = vmatprep.subr.bf16.mxu0 %v2587
    %3542 = vmatpush1.bf16.msra.mxu0 %v2586
    %3543 = vmatprep.subr.bf16.mxu0 %v2591
    %3544 = vmatpush1.bf16.msra.mxu0 %v2590
    %3545 = vmatprep.subr.bf16.mxu0 %v2595
    %3546 = vmatpush1.bf16.msra.mxu0 %v2594
    %3547 = vmatprep.subr.bf16.mxu0 %v2599
    %3548 = vmatpush1.bf16.msra.mxu0 %v2598
    %3549 = vmatprep.subr.bf16.mxu0 %v2603
    %3550 = vmatpush1.bf16.msra.mxu0 %v2602
    %3551 = vmatprep.subr.bf16.mxu0 %v2607
    %3552 = vmatpush1.bf16.msra.mxu0 %v2606
    %3553 = vmatprep.subr.bf16.mxu0 %v2611
    %3554 = vmatpush1.bf16.msra.mxu0 %v2610
    %3555 = vmatprep.subr.bf16.mxu0 %v2615
    %3556 = vmatpush1.bf16.msra.mxu0 %v2614
    %3557 = vmatprep.subr.bf16.mxu0 %v2619
    %3558 = vmatpush1.bf16.msra.mxu0 %v2618
    %3559 = vmatprep.subr.bf16.mxu0 %v2623
    %3560 = vmatpush1.bf16.msra.mxu0 %v2622
    %3561 = vmatprep.subr.bf16.mxu0 %v2627
    %3562 = vmatpush1.bf16.msra.mxu0 %v2626
    %3563 = vmatprep.mubr.bf16.mxu0 %v1579
    %3564 = vmatmul.mubr.bf16.gmra.mrb[0].mxu0 %v1578
    %v3565 = vpop.f32.mrb[0].mxu0
    %v3566 = vadd.f32 %v3453, %v3565
    %v3567 = vpop.f32.mrb[0].mxu0
    %v3568 = vadd.f32 %v3455, %v3567
    %v3569 = vpop.f32.mrb[0].mxu0
    %v3570 = vadd.f32 %v3457, %v3569
    %v3571 = vpop.f32.mrb[0].mxu0
    %v3572 = vadd.f32 %v3459, %v3571
    %3573 = vmatprep.mubr.bf16.mxu0 %v1586
    %3574 = vmatmul.mubr.bf16.gmra.mrb[0].mxu0 %v1585
    %v3575 = vpop.f32.mrb[0].mxu0
    %v3576 = vadd.f32 %v3463, %v3575
    %v3577 = vpop.f32.mrb[0].mxu0
    %v3578 = vadd.f32 %v3465, %v3577
    %v3579 = vpop.f32.mrb[0].mxu0
    %v3580 = vadd.f32 %v3467, %v3579
    %v3581 = vpop.f32.mrb[0].mxu0
    %v3582 = vadd.f32 %v3469, %v3581
    %3583 = vmatprep.mubr.bf16.mxu0 %v1593
    %3584 = vmatmul.mubr.bf16.gmra.mrb[0].mxu0 %v1592
    %v3585 = vpop.f32.mrb[0].mxu0
    %v3586 = vadd.f32 %v3473, %v3585
    %v3587 = vpop.f32.mrb[0].mxu0
    %v3588 = vadd.f32 %v3475, %v3587
    %v3589 = vpop.f32.mrb[0].mxu0
    %v3590 = vadd.f32 %v3477, %v3589
    %v3591 = vpop.f32.mrb[0].mxu0
    %v3592 = vadd.f32 %v3479, %v3591
    %3593 = vmatprep.mubr.bf16.mxu0 %v1600
    %3594 = vmatmul.mubr.bf16.gmra.mrb[0].mxu0 %v1599
    %v3595 = vpop.f32.mrb[0].mxu0
    %v3596 = vadd.f32 %v3483, %v3595
    %v3597 = vpop.f32.mrb[0].mxu0
    %v3598 = vadd.f32 %v3485, %v3597
    %v3599 = vpop.f32.mrb[0].mxu0
    %v3600 = vadd.f32 %v3487, %v3599
    %v3601 = vpop.f32.mrb[0].mxu0
    %v3602 = vadd.f32 %v3489, %v3601
    %3603 = vmatprep.mubr.bf16.mxu0 %v1607
    %3604 = vmatmul.mubr.bf16.gmra.mrb[0].mxu0 %v1606
    %v3605 = vpop.f32.mrb[0].mxu0
    %v3606 = vadd.f32 %v3493, %v3605
    %v3607 = vpop.f32.mrb[0].mxu0
    %v3608 = vadd.f32 %v3495, %v3607
    %v3609 = vpop.f32.mrb[0].mxu0
    %v3610 = vadd.f32 %v3497, %v3609
    %v3611 = vpop.f32.mrb[0].mxu0
    %v3612 = vadd.f32 %v3499, %v3611
    %3613 = vmatprep.mubr.bf16.mxu0 %v1614
    %3614 = vmatmul.mubr.bf16.gmra.mrb[0].mxu0 %v1613
    %v3615 = vpop.f32.mrb[0].mxu0
    %v3616 = vadd.f32 %v3503, %v3615
    %v3617 = vpop.f32.mrb[0].mxu0
    %v3618 = vadd.f32 %v3505, %v3617
    %v3619 = vpop.f32.mrb[0].mxu0
    %v3620 = vadd.f32 %v3507, %v3619
    %v3621 = vpop.f32.mrb[0].mxu0
    %v3622 = vadd.f32 %v3509, %v3621
    %3623 = vmatprep.mubr.bf16.mxu0 %v1621
    %3624 = vmatmul.mubr.bf16.gmra.mrb[0].mxu0 %v1620
    %v3625 = vpop.f32.mrb[0].mxu0
    %v3626 = vadd.f32 %v3513, %v3625
    %v3627 = vpop.f32.mrb[0].mxu0
    %v3628 = vadd.f32 %v3515, %v3627
    %v3629 = vpop.f32.mrb[0].mxu0
    %v3630 = vadd.f32 %v3517, %v3629
    %v3631 = vpop.f32.mrb[0].mxu0
    %v3632 = vadd.f32 %v3519, %v3631
    %3633 = vmatprep.mubr.bf16.mxu0 %v1628
    %3634 = vmatmul.mubr.bf16.gmra.mrb[0].mxu0 %v1627
    %v3635 = vpop.f32.mrb[0].mxu0
    %v3636 = vadd.f32 %v3523, %v3635
    %v3637 = vpop.f32.mrb[0].mxu0
    %v3638 = vadd.f32 %v3525, %v3637
    %v3639 = vpop.f32.mrb[0].mxu0
    %v3640 = vadd.f32 %v3527, %v3639
    %v3641 = vpop.f32.mrb[0].mxu0
    %v3642 = vadd.f32 %v3529, %v3641
    %3643 = vdwg.mxu0
    %3644 = vmatprep.subr.bf16.mxu0 %v2631
    %3645 = vmatpush1.bf16.msra.mxu0 %v2630
    %3646 = vmatprep.subr.bf16.mxu0 0
    %3647 = vmatpush1.bf16.msra.mxu0 0
    %3648 = vmatprep.subr.bf16.mxu0 0
    %3649 = vmatpush1.bf16.msra.mxu0 0
    %3650 = vmatprep.subr.bf16.mxu0 0
    %3651 = vmatpush1.bf16.msra.mxu0 0
    %3652 = vmatprep.subr.bf16.mxu0 0
    %3653 = vmatpush1.bf16.msra.mxu0 0
    %3654 = vmatprep.subr.bf16.mxu0 0
    %3655 = vmatpush1.bf16.msra.mxu0 0
    %3656 = vmatprep.subr.bf16.mxu0 0
    %3657 = vmatpush1.bf16.msra.mxu0 0
    %3658 = vmatprep.subr.bf16.mxu0 0
    %3659 = vmatpush1.bf16.msra.mxu0 0
    %3660 = vmatprep.subr.bf16.mxu0 0
    %3661 = vmatpush1.bf16.msra.mxu0 0
    %3662 = vmatprep.subr.bf16.mxu0 0
    %3663 = vmatpush1.bf16.msra.mxu0 0
    %3664 = vmatprep.subr.bf16.mxu0 0
    %3665 = vmatpush1.bf16.msra.mxu0 0
    %3666 = vmatprep.subr.bf16.mxu0 0
    %3667 = vmatpush1.bf16.msra.mxu0 0
    %3668 = vmatprep.subr.bf16.mxu0 0
    %3669 = vmatpush1.bf16.msra.mxu0 0
    %3670 = vmatprep.subr.bf16.mxu0 0
    %3671 = vmatpush1.bf16.msra.mxu0 0
    %3672 = vmatprep.subr.bf16.mxu0 0
    %3673 = vmatpush1.bf16.msra.mxu0 0
    %3674 = vmatprep.subr.bf16.mxu0 0
    %3675 = vmatpush1.bf16.msra.mxu0 0
    %3676 = vmatprep.mubr.bf16.mxu0 0
    %3677 = vmatmul.mubr.bf16.gmra.mrb[0].mxu0 %v2830
    %v3678 = vpop.f32.mrb[0].mxu0
    %v3679 = vadd.f32 %v3566, %v3678
    %v3680 = vpop.f32.mrb[0].mxu0
    %v3681 = vadd.f32 %v3568, %v3680
    %v3682 = vpop.f32.mrb[0].mxu0
    %v3683 = vadd.f32 %v3570, %v3682
    %v3684 = vpop.f32.mrb[0].mxu0
    %v3685 = vadd.f32 %v3572, %v3684
    %3686 = vmatprep.mubr.bf16.mxu0 0
    %3687 = vmatmul.mubr.bf16.gmra.mrb[0].mxu0 %v2833
    %v3688 = vpop.f32.mrb[0].mxu0
    %v3689 = vadd.f32 %v3576, %v3688
    %v3690 = vpop.f32.mrb[0].mxu0
    %v3691 = vadd.f32 %v3578, %v3690
    %v3692 = vpop.f32.mrb[0].mxu0
    %v3693 = vadd.f32 %v3580, %v3692
    %v3694 = vpop.f32.mrb[0].mxu0
    %v3695 = vadd.f32 %v3582, %v3694
    %3696 = vmatprep.mubr.bf16.mxu0 0
    %3697 = vmatmul.mubr.bf16.gmra.mrb[0].mxu0 %v2836
    %v3698 = vpop.f32.mrb[0].mxu0
    %v3699 = vadd.f32 %v3586, %v3698
    %v3700 = vpop.f32.mrb[0].mxu0
    %v3701 = vadd.f32 %v3588, %v3700
    %v3702 = vpop.f32.mrb[0].mxu0
    %v3703 = vadd.f32 %v3590, %v3702
    %v3704 = vpop.f32.mrb[0].mxu0
    %v3705 = vadd.f32 %v3592, %v3704
    %3706 = vmatprep.mubr.bf16.mxu0 0
    %3707 = vmatmul.mubr.bf16.gmra.mrb[0].mxu0 %v2839
    %v3708 = vpop.f32.mrb[0].mxu0
    %v3709 = vadd.f32 %v3596, %v3708
    %v3710 = vpop.f32.mrb[0].mxu0
    %v3711 = vadd.f32 %v3598, %v3710
    %v3712 = vpop.f32.mrb[0].mxu0
    %v3713 = vadd.f32 %v3600, %v3712
    %v3714 = vpop.f32.mrb[0].mxu0
    %v3715 = vadd.f32 %v3602, %v3714
    %3716 = vmatprep.mubr.bf16.mxu0 0
    %3717 = vmatmul.mubr.bf16.gmra.mrb[0].mxu0 %v2842
    %v3718 = vpop.f32.mrb[0].mxu0
    %v3719 = vadd.f32 %v3606, %v3718
    %v3720 = vpop.f32.mrb[0].mxu0
    %v3721 = vadd.f32 %v3608, %v3720
    %v3722 = vpop.f32.mrb[0].mxu0
    %v3723 = vadd.f32 %v3610, %v3722
    %v3724 = vpop.f32.mrb[0].mxu0
    %v3725 = vadd.f32 %v3612, %v3724
    %3726 = vmatprep.mubr.bf16.mxu0 0
    %3727 = vmatmul.mubr.bf16.gmra.mrb[0].mxu0 %v2845
    %v3728 = vpop.f32.mrb[0].mxu0
    %v3729 = vadd.f32 %v3616, %v3728
    %v3730 = vpop.f32.mrb[0].mxu0
    %v3731 = vadd.f32 %v3618, %v3730
    %v3732 = vpop.f32.mrb[0].mxu0
    %v3733 = vadd.f32 %v3620, %v3732
    %v3734 = vpop.f32.mrb[0].mxu0
    %v3735 = vadd.f32 %v3622, %v3734
    %3736 = vmatprep.mubr.bf16.mxu0 0
    %3737 = vmatmul.mubr.bf16.gmra.mrb[0].mxu0 %v2848
    %v3738 = vpop.f32.mrb[0].mxu0
    %v3739 = vadd.f32 %v3626, %v3738
    %v3740 = vpop.f32.mrb[0].mxu0
    %v3741 = vadd.f32 %v3628, %v3740
    %v3742 = vpop.f32.mrb[0].mxu0
    %v3743 = vadd.f32 %v3630, %v3742
    %v3744 = vpop.f32.mrb[0].mxu0
    %v3745 = vadd.f32 %v3632, %v3744
    %3746 = vmatprep.mubr.bf16.mxu0 0
    %3747 = vmatmul.mubr.bf16.gmra.mrb[0].mxu0 %v2851
    %v3748 = vpop.f32.mrb[0].mxu0
    %v3749 = vadd.f32 %v3636, %v3748
    %v3750 = vpop.f32.mrb[0].mxu0
    %v3751 = vadd.f32 %v3638, %v3750
    %v3752 = vpop.f32.mrb[0].mxu0
    %v3753 = vadd.f32 %v3640, %v3752
    %v3754 = vpop.f32.mrb[0].mxu0
    %v3755 = vadd.f32 %v3642, %v3754
    %3756 = vdwg.mxu0
    %vm3757 = vcmp.gt.f32.partialorder %v3227, 0.0
    %vm3758 = vcmp.gt.f32.partialorder %v3229, 0.0
    %vm3759 = vcmp.gt.f32.partialorder %v3679, 0.0
    %vm3760 = vcmp.gt.f32.partialorder %v3681, 0.0
    %vm3761 = vcmp.gt.f32.partialorder %v3231, 0.0
    %vm3762 = vcmp.gt.f32.partialorder %v3233, 0.0
    %vm3763 = vcmp.gt.f32.partialorder %v3683, 0.0
    %vm3764 = vcmp.gt.f32.partialorder %v3685, 0.0
    %vm3765 = vcmp.gt.f32.partialorder %v3237, 0.0
    %vm3766 = vcmp.gt.f32.partialorder %v3239, 0.0
    %vm3767 = vcmp.gt.f32.partialorder %v3689, 0.0
    %vm3768 = vcmp.gt.f32.partialorder %v3691, 0.0
    %vm3769 = vcmp.gt.f32.partialorder %v3241, 0.0
    %vm3770 = vcmp.gt.f32.partialorder %v3243, 0.0
    %vm3771 = vcmp.gt.f32.partialorder %v3693, 0.0
    %vm3772 = vcmp.gt.f32.partialorder %v3695, 0.0
    %vm3773 = vcmp.gt.f32.partialorder %v3247, 0.0
    %vm3774 = vcmp.gt.f32.partialorder %v3249, 0.0
    %vm3775 = vcmp.gt.f32.partialorder %v3699, 0.0
    %vm3776 = vcmp.gt.f32.partialorder %v3701, 0.0
    %vm3777 = vcmp.gt.f32.partialorder %v3251, 0.0
    %vm3778 = vcmp.gt.f32.partialorder %v3253, 0.0
    %vm3779 = vcmp.gt.f32.partialorder %v3703, 0.0
    %vm3780 = vcmp.gt.f32.partialorder %v3705, 0.0
    %vm3781 = vcmp.gt.f32.partialorder %v3257, 0.0
    %vm3782 = vcmp.gt.f32.partialorder %v3259, 0.0
    %vm3783 = vcmp.gt.f32.partialorder %v3709, 0.0
    %vm3784 = vcmp.gt.f32.partialorder %v3711, 0.0
    %vm3785 = vcmp.gt.f32.partialorder %v3261, 0.0
    %vm3786 = vcmp.gt.f32.partialorder %v3263, 0.0
    %vm3787 = vcmp.gt.f32.partialorder %v3713, 0.0
    %vm3788 = vcmp.gt.f32.partialorder %v3715, 0.0
    %vm3789 = vcmp.gt.f32.partialorder %v3267, 0.0
    %vm3790 = vcmp.gt.f32.partialorder %v3269, 0.0
    %vm3791 = vcmp.gt.f32.partialorder %v3719, 0.0
    %vm3792 = vcmp.gt.f32.partialorder %v3721, 0.0
    %vm3793 = vcmp.gt.f32.partialorder %v3271, 0.0
    %vm3794 = vcmp.gt.f32.partialorder %v3273, 0.0
    %vm3795 = vcmp.gt.f32.partialorder %v3723, 0.0
    %vm3796 = vcmp.gt.f32.partialorder %v3725, 0.0
    %vm3797 = vcmp.gt.f32.partialorder %v3277, 0.0
    %vm3798 = vcmp.gt.f32.partialorder %v3279, 0.0
    %vm3799 = vcmp.gt.f32.partialorder %v3729, 0.0
    %vm3800 = vcmp.gt.f32.partialorder %v3731, 0.0
    %vm3801 = vcmp.gt.f32.partialorder %v3281, 0.0
    %vm3802 = vcmp.gt.f32.partialorder %v3283, 0.0
    %vm3803 = vcmp.gt.f32.partialorder %v3733, 0.0
    %vm3804 = vcmp.gt.f32.partialorder %v3735, 0.0
    %vm3805 = vcmp.gt.f32.partialorder %v3287, 0.0
    %vm3806 = vcmp.gt.f32.partialorder %v3289, 0.0
    %vm3807 = vcmp.gt.f32.partialorder %v3739, 0.0
    %vm3808 = vcmp.gt.f32.partialorder %v3741, 0.0
    %vm3809 = vcmp.gt.f32.partialorder %v3291, 0.0
    %vm3810 = vcmp.gt.f32.partialorder %v3293, 0.0
    %vm3811 = vcmp.gt.f32.partialorder %v3743, 0.0
    %vm3812 = vcmp.gt.f32.partialorder %v3745, 0.0
    %vm3813 = vcmp.gt.f32.partialorder %v3297, 0.0
    %vm3814 = vcmp.gt.f32.partialorder %v3299, 0.0
    %vm3815 = vcmp.gt.f32.partialorder %v3749, 0.0
    %vm3816 = vcmp.gt.f32.partialorder %v3751, 0.0
    %vm3817 = vcmp.gt.f32.partialorder %v3301, 0.0
    %vm3818 = vcmp.gt.f32.partialorder %v3303, 0.0
    %vm3819 = vcmp.gt.f32.partialorder %v3753, 0.0
    %vm3820 = vcmp.gt.f32.partialorder %v3755, 0.0
    %v3821 = vmul.f32 %v3227, 0.01
    %v3822 = vmul.f32 %v3229, 0.01
    %v3823 = vmul.f32 %v3679, 0.01
    %v3824 = vmul.f32 %v3681, 0.01
    %v3825 = vmul.f32 %v3231, 0.01
    %v3826 = vmul.f32 %v3233, 0.01
    %v3827 = vmul.f32 %v3683, 0.01
    %v3828 = vmul.f32 %v3685, 0.01
    %v3829 = vmul.f32 %v3237, 0.01
    %v3830 = vmul.f32 %v3239, 0.01
    %v3831 = vmul.f32 %v3689, 0.01
    %v3832 = vmul.f32 %v3691, 0.01
    %v3833 = vmul.f32 %v3241, 0.01
    %v3834 = vmul.f32 %v3243, 0.01
    %v3835 = vmul.f32 %v3693, 0.01
    %v3836 = vmul.f32 %v3695, 0.01
    %v3837 = vmul.f32 %v3247, 0.01
    %v3838 = vmul.f32 %v3249, 0.01
    %v3839 = vmul.f32 %v3699, 0.01
    %v3840 = vmul.f32 %v3701, 0.01
    %v3841 = vmul.f32 %v3251, 0.01
    %v3842 = vmul.f32 %v3253, 0.01
    %v3843 = vmul.f32 %v3703, 0.01
    %v3844 = vmul.f32 %v3705, 0.01
    %v3845 = vmul.f32 %v3257, 0.01
    %v3846 = vmul.f32 %v3259, 0.01
    %v3847 = vmul.f32 %v3709, 0.01
    %v3848 = vmul.f32 %v3711, 0.01
    %v3849 = vmul.f32 %v3261, 0.01
    %v3850 = vmul.f32 %v3263, 0.01
    %v3851 = vmul.f32 %v3713, 0.01
    %v3852 = vmul.f32 %v3715, 0.01
    %v3853 = vmul.f32 %v3267, 0.01
    %v3854 = vmul.f32 %v3269, 0.01
    %v3855 = vmul.f32 %v3719, 0.01
    %v3856 = vmul.f32 %v3721, 0.01
    %v3857 = vmul.f32 %v3271, 0.01
    %v3858 = vmul.f32 %v3273, 0.01
    %v3859 = vmul.f32 %v3723, 0.01
    %v3860 = vmul.f32 %v3725, 0.01
    %v3861 = vmul.f32 %v3277, 0.01
    %v3862 = vmul.f32 %v3279, 0.01
    %v3863 = vmul.f32 %v3729, 0.01
    %v3864 = vmul.f32 %v3731, 0.01
    %v3865 = vmul.f32 %v3281, 0.01
    %v3866 = vmul.f32 %v3283, 0.01
    %v3867 = vmul.f32 %v3733, 0.01
    %v3868 = vmul.f32 %v3735, 0.01
    %v3869 = vmul.f32 %v3287, 0.01
    %v3870 = vmul.f32 %v3289, 0.01
    %v3871 = vmul.f32 %v3739, 0.01
    %v3872 = vmul.f32 %v3741, 0.01
    %v3873 = vmul.f32 %v3291, 0.01
    %v3874 = vmul.f32 %v3293, 0.01
    %v3875 = vmul.f32 %v3743, 0.01
    %v3876 = vmul.f32 %v3745, 0.01
    %v3877 = vmul.f32 %v3297, 0.01
    %v3878 = vmul.f32 %v3299, 0.01
    %v3879 = vmul.f32 %v3749, 0.01
    %v3880 = vmul.f32 %v3751, 0.01
    %v3881 = vmul.f32 %v3301, 0.01
    %v3882 = vmul.f32 %v3303, 0.01
    %v3883 = vmul.f32 %v3753, 0.01
    %v3884 = vmul.f32 %v3755, 0.01
    %v3885 = vsel %vm3757, %v3227, %v3821
    %v3886 = vsel %vm3758, %v3229, %v3822
    %v3887 = vsel %vm3759, %v3679, %v3823
    %v3888 = vsel %vm3760, %v3681, %v3824
    %v3889 = vsel %vm3761, %v3231, %v3825
    %v3890 = vsel %vm3762, %v3233, %v3826
    %v3891 = vsel %vm3763, %v3683, %v3827
    %v3892 = vsel %vm3764, %v3685, %v3828
    %v3893 = vsel %vm3765, %v3237, %v3829
    %v3894 = vsel %vm3766, %v3239, %v3830
    %v3895 = vsel %vm3767, %v3689, %v3831
    %v3896 = vsel %vm3768, %v3691, %v3832
    %v3897 = vsel %vm3769, %v3241, %v3833
    %v3898 = vsel %vm3770, %v3243, %v3834
    %v3899 = vsel %vm3771, %v3693, %v3835
    %v3900 = vsel %vm3772, %v3695, %v3836
    %v3901 = vsel %vm3773, %v3247, %v3837
    %v3902 = vsel %vm3774, %v3249, %v3838
    %v3903 = vsel %vm3775, %v3699, %v3839
    %v3904 = vsel %vm3776, %v3701, %v3840
    %v3905 = vsel %vm3777, %v3251, %v3841
    %v3906 = vsel %vm3778, %v3253, %v3842
    %v3907 = vsel %vm3779, %v3703, %v3843
    %v3908 = vsel %vm3780, %v3705, %v3844
    %v3909 = vsel %vm3781, %v3257, %v3845
    %v3910 = vsel %vm3782, %v3259, %v3846
    %v3911 = vsel %vm3783, %v3709, %v3847
    %v3912 = vsel %vm3784, %v3711, %v3848
    %v3913 = vsel %vm3785, %v3261, %v3849
    %v3914 = vsel %vm3786, %v3263, %v3850
    %v3915 = vsel %vm3787, %v3713, %v3851
    %v3916 = vsel %vm3788, %v3715, %v3852
    %v3917 = vsel %vm3789, %v3267, %v3853
    %v3918 = vsel %vm3790, %v3269, %v3854
    %v3919 = vsel %vm3791, %v3719, %v3855
    %v3920 = vsel %vm3792, %v3721, %v3856
    %v3921 = vsel %vm3793, %v3271, %v3857
    %v3922 = vsel %vm3794, %v3273, %v3858
    %v3923 = vsel %vm3795, %v3723, %v3859
    %v3924 = vsel %vm3796, %v3725, %v3860
    %v3925 = vsel %vm3797, %v3277, %v3861
    %v3926 = vsel %vm3798, %v3279, %v3862
    %v3927 = vsel %vm3799, %v3729, %v3863
    %v3928 = vsel %vm3800, %v3731, %v3864
    %v3929 = vsel %vm3801, %v3281, %v3865
    %v3930 = vsel %vm3802, %v3283, %v3866
    %v3931 = vsel %vm3803, %v3733, %v3867
    %v3932 = vsel %vm3804, %v3735, %v3868
    %v3933 = vsel %vm3805, %v3287, %v3869
    %v3934 = vsel %vm3806, %v3289, %v3870
    %v3935 = vsel %vm3807, %v3739, %v3871
    %v3936 = vsel %vm3808, %v3741, %v3872
    %v3937 = vsel %vm3809, %v3291, %v3873
    %v3938 = vsel %vm3810, %v3293, %v3874
    %v3939 = vsel %vm3811, %v3743, %v3875
    %v3940 = vsel %vm3812, %v3745, %v3876
    %v3941 = vsel %vm3813, %v3297, %v3877
    %v3942 = vsel %vm3814, %v3299, %v3878
    %v3943 = vsel %vm3815, %v3749, %v3879
    %v3944 = vsel %vm3816, %v3751, %v3880
    %v3945 = vsel %vm3817, %v3301, %v3881
    %v3946 = vsel %vm3818, %v3303, %v3882
    %v3947 = vsel %vm3819, %v3753, %v3883
    %v3948 = vsel %vm3820, %v3755, %v3884
    %v3949 = vpack.c.bf16 %v3889, %v3885
    %v3950 = vpack.c.bf16 %v3890, %v3886
    %v3951 = vpack.c.bf16 %v3891, %v3887
    %v3952 = vpack.c.bf16 %v3892, %v3888
    %v3953 = vpack.c.bf16 %v3897, %v3893
    %v3954 = vpack.c.bf16 %v3898, %v3894
    %v3955 = vpack.c.bf16 %v3899, %v3895
    %v3956 = vpack.c.bf16 %v3900, %v3896
    %v3957 = vpack.c.bf16 %v3905, %v3901
    %v3958 = vpack.c.bf16 %v3906, %v3902
    %v3959 = vpack.c.bf16 %v3907, %v3903
    %v3960 = vpack.c.bf16 %v3908, %v3904
    %v3961 = vpack.c.bf16 %v3913, %v3909
    %v3962 = vpack.c.bf16 %v3914, %v3910
    %v3963 = vpack.c.bf16 %v3915, %v3911
    %v3964 = vpack.c.bf16 %v3916, %v3912
    %v3965 = vpack.c.bf16 %v3921, %v3917
    %v3966 = vpack.c.bf16 %v3922, %v3918
    %v3967 = vpack.c.bf16 %v3923, %v3919
    %v3968 = vpack.c.bf16 %v3924, %v3920
    %v3969 = vpack.c.bf16 %v3929, %v3925
    %v3970 = vpack.c.bf16 %v3930, %v3926
    %v3971 = vpack.c.bf16 %v3931, %v3927
    %v3972 = vpack.c.bf16 %v3932, %v3928
    %v3973 = vpack.c.bf16 %v3937, %v3933
    %v3974 = vpack.c.bf16 %v3938, %v3934
    %v3975 = vpack.c.bf16 %v3939, %v3935
    %v3976 = vpack.c.bf16 %v3940, %v3936
    %v3977 = vpack.c.bf16 %v3945, %v3941
    %v3978 = vpack.c.bf16 %v3946, %v3942
    %v3979 = vpack.c.bf16 %v3947, %v3943
    %v3980 = vpack.c.bf16 %v3948, %v3944
    %v3981 = vld [vmem:[#allocation8] sm:$0xff]
    %v3982 = vld [vmem:[#allocation8 + $0x8] sm:$0xff]
    %v3983 = vld [vmem:[#allocation8 + $0x10] sm:$0xff]
    %v3984 = vld [vmem:[#allocation8 + $0x18] sm:$0xff]
    %v3985 = vld [vmem:[#allocation8 + $0x20] sm:$0xff]
    %v3986 = vld [vmem:[#allocation8 + $0x28] sm:$0xff]
    %v3987 = vld [vmem:[#allocation8 + $0x30] sm:$0xff]
    %v3988 = vld [vmem:[#allocation8 + $0x38] sm:$0xff]
    %v3989 = vld [vmem:[#allocation8 + $0x40] sm:$0xff]
    %v3990 = vld [vmem:[#allocation8 + $0x48] sm:$0xff]
    %v3991 = vld [vmem:[#allocation8 + $0x50] sm:$0xff]
    %v3992 = vld [vmem:[#allocation8 + $0x58] sm:$0xff]
    %v3993 = vld [vmem:[#allocation8 + $0x60] sm:$0xff]
    %v3994 = vld [vmem:[#allocation8 + $0x68] sm:$0xff]
    %v3995 = vld [vmem:[#allocation8 + $0x70] sm:$0xff]
    %v3996 = vld [vmem:[#allocation8 + $0x78] sm:$0xff]
    %v3997 = vld [vmem:[#allocation8 + $0x80] sm:$0xff]
    %v3998 = vld [vmem:[#allocation8 + $0x88] sm:$0xff]
    %v3999 = vld [vmem:[#allocation8 + $0x90] sm:$0xff]
    %v4000 = vld [vmem:[#allocation8 + $0x98] sm:$0xff]
    %v4001 = vld [vmem:[#allocation8 + $0xa0] sm:$0xff]
    %v4002 = vld [vmem:[#allocation8 + $0xa8] sm:$0xff]
    %v4003 = vld [vmem:[#allocation8 + $0xb0] sm:$0xff]
    %v4004 = vld [vmem:[#allocation8 + $0xb8] sm:$0xff]
    %v4005 = vld [vmem:[#allocation8 + $0xc0] sm:$0xff]
    %v4006 = vld [vmem:[#allocation8 + $0xc8] sm:$0xff]
    %v4007 = vld [vmem:[#allocation8 + $0xd0] sm:$0xff]
    %v4008 = vld [vmem:[#allocation8 + $0xd8] sm:$0xff]
    %v4009 = vld [vmem:[#allocation8 + $0xe0] sm:$0xff]
    %v4010 = vld [vmem:[#allocation8 + $0xe8] sm:$0xff]
    %v4011 = vld [vmem:[#allocation8 + $0xf0] sm:$0xff]
    %v4012 = vld [vmem:[#allocation8 + $0xf8] sm:$0xff]
    %v4013 = vld [vmem:[#allocation8 + $0x100] sm:$0xff]
    %v4014 = vld [vmem:[#allocation8 + $0x108] sm:$0xff]
    %v4015 = vld [vmem:[#allocation8 + $0x110] sm:$0xff]
    %v4016 = vld [vmem:[#allocation8 + $0x118] sm:$0xff]
    %v4017 = vld [vmem:[#allocation8 + $0x120] sm:$0xff]
    %v4018 = vld [vmem:[#allocation8 + $0x128] sm:$0xff]
    %v4019 = vld [vmem:[#allocation8 + $0x130] sm:$0xff]
    %v4020 = vld [vmem:[#allocation8 + $0x138] sm:$0xff]
    %v4021 = vld [vmem:[#allocation8 + $0x140] sm:$0xff]
    %v4022 = vld [vmem:[#allocation8 + $0x148] sm:$0xff]
    %v4023 = vld [vmem:[#allocation8 + $0x150] sm:$0xff]
    %v4024 = vld [vmem:[#allocation8 + $0x158] sm:$0xff]
    %v4025 = vld [vmem:[#allocation8 + $0x160] sm:$0xff]
    %v4026 = vld [vmem:[#allocation8 + $0x168] sm:$0xff]
    %v4027 = vld [vmem:[#allocation8 + $0x170] sm:$0xff]
    %v4028 = vld [vmem:[#allocation8 + $0x178] sm:$0xff]
    %v4029 = vld [vmem:[#allocation8 + $0x180] sm:$0xff]
    %v4030 = vld [vmem:[#allocation8 + $0x188] sm:$0xff]
    %v4031 = vld [vmem:[#allocation8 + $0x190] sm:$0xff]
    %v4032 = vld [vmem:[#allocation8 + $0x198] sm:$0xff]
    %v4033 = vld [vmem:[#allocation8 + $0x1a0] sm:$0xff]
    %v4034 = vld [vmem:[#allocation8 + $0x1a8] sm:$0xff]
    %v4035 = vld [vmem:[#allocation8 + $0x1b0] sm:$0xff]
    %v4036 = vld [vmem:[#allocation8 + $0x1b8] sm:$0xff]
    %v4037 = vld [vmem:[#allocation8 + $0x1c0] sm:$0xff]
    %v4038 = vld [vmem:[#allocation8 + $0x1c8] sm:$0xff]
    %v4039 = vld [vmem:[#allocation8 + $0x1d0] sm:$0xff]
    %v4040 = vld [vmem:[#allocation8 + $0x1d8] sm:$0xff]
    %v4041 = vld [vmem:[#allocation8 + $0x1e0] sm:$0xff]
    %v4042 = vld [vmem:[#allocation8 + $0x1e8] sm:$0xff]
    %v4043 = vld [vmem:[#allocation8 + $0x1f0] sm:$0xff]
    %v4044 = vld [vmem:[#allocation8 + $0x1f8] sm:$0xff]
    %v4045 = vld [vmem:[%s4] sm:$0x3]
    %v4047 = vlaneseq
    %v4048 = vshrl.u32 %v4047, 7
    %v4049 = vsub.s32 0, %v4048
    %v4050 = vrot.slane %v4045, %v4049
    %v4051 = vlaneseq
    %v4052 = vshrl.u32 %v4051, 7
    %v4053 = vsub.s32 1, %v4052
    %v4054 = vrot.slane %v4045, %v4053
    %v4121 = vunpack.c.l.b16 %v3981
    %v4122 = vunpack.c.h.b16 %v3981
    %v4123 = vunpack.c.l.b16 %v3982
    %v4124 = vunpack.c.h.b16 %v3982
    %v4125 = vunpack.c.l.b16 %v3983
    %v4126 = vunpack.c.h.b16 %v3983
    %v4127 = vunpack.c.l.b16 %v3984
    %v4128 = vunpack.c.h.b16 %v3984
    %v4129 = vunpack.c.l.b16 %v3985
    %v4130 = vunpack.c.h.b16 %v3985
    %v4131 = vunpack.c.l.b16 %v3986
    %v4132 = vunpack.c.h.b16 %v3986
    %v4133 = vunpack.c.l.b16 %v3987
    %v4134 = vunpack.c.h.b16 %v3987
    %v4135 = vunpack.c.l.b16 %v3988
    %v4136 = vunpack.c.h.b16 %v3988
    %v4137 = vunpack.c.l.b16 %v3989
    %v4138 = vunpack.c.h.b16 %v3989
    %v4139 = vunpack.c.l.b16 %v3990
    %v4140 = vunpack.c.h.b16 %v3990
    %v4141 = vunpack.c.l.b16 %v3991
    %v4142 = vunpack.c.h.b16 %v3991
    %v4143 = vunpack.c.l.b16 %v3992
    %v4144 = vunpack.c.h.b16 %v3992
    %v4145 = vunpack.c.l.b16 %v3993
    %v4146 = vunpack.c.h.b16 %v3993
    %v4147 = vunpack.c.l.b16 %v3994
    %v4148 = vunpack.c.h.b16 %v3994
    %v4149 = vunpack.c.l.b16 %v3995
    %v4150 = vunpack.c.h.b16 %v3995
    %v4151 = vunpack.c.l.b16 %v3996
    %v4152 = vunpack.c.h.b16 %v3996
    %v4153 = vunpack.c.l.b16 %v3997
    %v4154 = vunpack.c.h.b16 %v3997
    %v4155 = vunpack.c.l.b16 %v3998
    %v4156 = vunpack.c.h.b16 %v3998
    %v4157 = vunpack.c.l.b16 %v3999
    %v4158 = vunpack.c.h.b16 %v3999
    %v4159 = vunpack.c.l.b16 %v4000
    %v4160 = vunpack.c.h.b16 %v4000
    %v4161 = vunpack.c.l.b16 %v4001
    %v4162 = vunpack.c.h.b16 %v4001
    %v4163 = vunpack.c.l.b16 %v4002
    %v4164 = vunpack.c.h.b16 %v4002
    %v4165 = vunpack.c.l.b16 %v4003
    %v4166 = vunpack.c.h.b16 %v4003
    %v4167 = vunpack.c.l.b16 %v4004
    %v4168 = vunpack.c.h.b16 %v4004
    %v4169 = vunpack.c.l.b16 %v4005
    %v4170 = vunpack.c.h.b16 %v4005
    %v4171 = vunpack.c.l.b16 %v4006
    %v4172 = vunpack.c.h.b16 %v4006
    %v4173 = vunpack.c.l.b16 %v4007
    %v4174 = vunpack.c.h.b16 %v4007
    %v4175 = vunpack.c.l.b16 %v4008
    %v4176 = vunpack.c.h.b16 %v4008
    %v4177 = vunpack.c.l.b16 %v4009
    %v4178 = vunpack.c.h.b16 %v4009
    %v4179 = vunpack.c.l.b16 %v4010
    %v4180 = vunpack.c.h.b16 %v4010
    %v4181 = vunpack.c.l.b16 %v4011
    %v4182 = vunpack.c.h.b16 %v4011
    %v4183 = vunpack.c.l.b16 %v4012
    %v4184 = vunpack.c.h.b16 %v4012
    %v4185 = vunpack.c.l.b16 %v4013
    %v4186 = vunpack.c.h.b16 %v4013
    %v4187 = vunpack.c.l.b16 %v4014
    %v4188 = vunpack.c.h.b16 %v4014
    %v4189 = vunpack.c.l.b16 %v4015
    %v4190 = vunpack.c.h.b16 %v4015
    %v4191 = vunpack.c.l.b16 %v4016
    %v4192 = vunpack.c.h.b16 %v4016
    %v4193 = vunpack.c.l.b16 %v4017
    %v4194 = vunpack.c.h.b16 %v4017
    %v4195 = vunpack.c.l.b16 %v4018
    %v4196 = vunpack.c.h.b16 %v4018
    %v4197 = vunpack.c.l.b16 %v4019
    %v4198 = vunpack.c.h.b16 %v4019
    %v4199 = vunpack.c.l.b16 %v4020
    %v4200 = vunpack.c.h.b16 %v4020
    %v4201 = vunpack.c.l.b16 %v4021
    %v4202 = vunpack.c.h.b16 %v4021
    %v4203 = vunpack.c.l.b16 %v4022
    %v4204 = vunpack.c.h.b16 %v4022
    %v4205 = vunpack.c.l.b16 %v4023
    %v4206 = vunpack.c.h.b16 %v4023
    %v4207 = vunpack.c.l.b16 %v4024
    %v4208 = vunpack.c.h.b16 %v4024
    %v4209 = vunpack.c.l.b16 %v4025
    %v4210 = vunpack.c.h.b16 %v4025
    %v4211 = vunpack.c.l.b16 %v4026
    %v4212 = vunpack.c.h.b16 %v4026
    %v4213 = vunpack.c.l.b16 %v4027
    %v4214 = vunpack.c.h.b16 %v4027
    %v4215 = vunpack.c.l.b16 %v4028
    %v4216 = vunpack.c.h.b16 %v4028
    %v4217 = vunpack.c.l.b16 %v4029
    %v4218 = vunpack.c.h.b16 %v4029
    %v4219 = vunpack.c.l.b16 %v4030
    %v4220 = vunpack.c.h.b16 %v4030
    %v4221 = vunpack.c.l.b16 %v4031
    %v4222 = vunpack.c.h.b16 %v4031
    %v4223 = vunpack.c.l.b16 %v4032
    %v4224 = vunpack.c.h.b16 %v4032
    %v4225 = vunpack.c.l.b16 %v4033
    %v4226 = vunpack.c.h.b16 %v4033
    %v4227 = vunpack.c.l.b16 %v4034
    %v4228 = vunpack.c.h.b16 %v4034
    %v4229 = vunpack.c.l.b16 %v4035
    %v4230 = vunpack.c.h.b16 %v4035
    %v4231 = vunpack.c.l.b16 %v4036
    %v4232 = vunpack.c.h.b16 %v4036
    %v4233 = vunpack.c.l.b16 %v4037
    %v4234 = vunpack.c.h.b16 %v4037
    %v4235 = vunpack.c.l.b16 %v4038
    %v4236 = vunpack.c.h.b16 %v4038
    %v4237 = vunpack.c.l.b16 %v4039
    %v4238 = vunpack.c.h.b16 %v4039
    %v4239 = vunpack.c.l.b16 %v4040
    %v4240 = vunpack.c.h.b16 %v4040
    %v4241 = vunpack.c.l.b16 %v4041
    %v4242 = vunpack.c.h.b16 %v4041
    %v4243 = vunpack.c.l.b16 %v4042
    %v4244 = vunpack.c.h.b16 %v4042
    %v4245 = vunpack.c.l.b16 %v4043
    %v4246 = vunpack.c.h.b16 %v4043
    %v4247 = vunpack.c.l.b16 %v4044
    %v4248 = vunpack.c.h.b16 %v4044
    %v4249 = vpack.c.b16 %v4123, %v4121
    %v4250 = vpack.c.b16 %v4124, %v4122
    %v4251 = vpack.c.b16 %v4127, %v4125
    %v4252 = vpack.c.b16 %v4128, %v4126
    %v4253 = vpack.c.b16 %v4131, %v4129
    %v4254 = vpack.c.b16 %v4132, %v4130
    %v4255 = vpack.c.b16 %v4135, %v4133
    %v4256 = vpack.c.b16 %v4136, %v4134
    %v4257 = vpack.c.b16 %v4139, %v4137
    %v4258 = vpack.c.b16 %v4140, %v4138
    %v4259 = vpack.c.b16 %v4143, %v4141
    %v4260 = vpack.c.b16 %v4144, %v4142
    %v4261 = vpack.c.b16 %v4147, %v4145
    %v4262 = vpack.c.b16 %v4148, %v4146
    %v4263 = vpack.c.b16 %v4151, %v4149
    %v4264 = vpack.c.b16 %v4152, %v4150
    %v4265 = vpack.c.b16 %v4155, %v4153
    %v4266 = vpack.c.b16 %v4156, %v4154
    %v4267 = vpack.c.b16 %v4159, %v4157
    %v4268 = vpack.c.b16 %v4160, %v4158
    %v4269 = vpack.c.b16 %v4163, %v4161
    %v4270 = vpack.c.b16 %v4164, %v4162
    %v4271 = vpack.c.b16 %v4167, %v4165
    %v4272 = vpack.c.b16 %v4168, %v4166
    %v4273 = vpack.c.b16 %v4171, %v4169
    %v4274 = vpack.c.b16 %v4172, %v4170
    %v4275 = vpack.c.b16 %v4175, %v4173
    %v4276 = vpack.c.b16 %v4176, %v4174
    %v4277 = vpack.c.b16 %v4179, %v4177
    %v4278 = vpack.c.b16 %v4180, %v4178
    %v4279 = vpack.c.b16 %v4183, %v4181
    %v4280 = vpack.c.b16 %v4184, %v4182
    %v4281 = vpack.c.b16 %v4187, %v4185
    %v4282 = vpack.c.b16 %v4188, %v4186
    %v4283 = vpack.c.b16 %v4191, %v4189
    %v4284 = vpack.c.b16 %v4192, %v4190
    %v4285 = vpack.c.b16 %v4195, %v4193
    %v4286 = vpack.c.b16 %v4196, %v4194
    %v4287 = vpack.c.b16 %v4199, %v4197
    %v4288 = vpack.c.b16 %v4200, %v4198
    %v4289 = vpack.c.b16 %v4203, %v4201
    %v4290 = vpack.c.b16 %v4204, %v4202
    %v4291 = vpack.c.b16 %v4207, %v4205
    %v4292 = vpack.c.b16 %v4208, %v4206
    %v4293 = vpack.c.b16 %v4211, %v4209
    %v4294 = vpack.c.b16 %v4212, %v4210
    %v4295 = vpack.c.b16 %v4215, %v4213
    %v4296 = vpack.c.b16 %v4216, %v4214
    %v4297 = vpack.c.b16 %v4219, %v4217
    %v4298 = vpack.c.b16 %v4220, %v4218
    %v4299 = vpack.c.b16 %v4223, %v4221
    %v4300 = vpack.c.b16 %v4224, %v4222
    %v4301 = vpack.c.b16 %v4227, %v4225
    %v4302 = vpack.c.b16 %v4228, %v4226
    %v4303 = vpack.c.b16 %v4231, %v4229
    %v4304 = vpack.c.b16 %v4232, %v4230
    %v4305 = vpack.c.b16 %v4235, %v4233
    %v4306 = vpack.c.b16 %v4236, %v4234
    %v4307 = vpack.c.b16 %v4239, %v4237
    %v4308 = vpack.c.b16 %v4240, %v4238
    %v4309 = vpack.c.b16 %v4243, %v4241
    %v4310 = vpack.c.b16 %v4244, %v4242
    %v4311 = vpack.c.b16 %v4247, %v4245
    %v4312 = vpack.c.b16 %v4248, %v4246
    %4377 = vmatprep.subr.bf16.mxu0 %v4250
    %4378 = vmatpush1.bf16.msra.mxu0 %v4249
    %4379 = vmatprep.subr.bf16.mxu0 %v4252
    %4380 = vmatpush1.bf16.msra.mxu0 %v4251
    %4381 = vmatprep.subr.bf16.mxu0 %v4254
    %4382 = vmatpush1.bf16.msra.mxu0 %v4253
    %4383 = vmatprep.subr.bf16.mxu0 %v4256
    %4384 = vmatpush1.bf16.msra.mxu0 %v4255
    %4385 = vmatprep.subr.bf16.mxu0 %v4258
    %4386 = vmatpush1.bf16.msra.mxu0 %v4257
    %4387 = vmatprep.subr.bf16.mxu0 %v4260
    %4388 = vmatpush1.bf16.msra.mxu0 %v4259
    %4389 = vmatprep.subr.bf16.mxu0 %v4262
    %4390 = vmatpush1.bf16.msra.mxu0 %v4261
    %4391 = vmatprep.subr.bf16.mxu0 %v4264
    %4392 = vmatpush1.bf16.msra.mxu0 %v4263
    %4393 = vmatprep.subr.bf16.mxu0 %v4266
    %4394 = vmatpush1.bf16.msra.mxu0 %v4265
    %4395 = vmatprep.subr.bf16.mxu0 %v4268
    %4396 = vmatpush1.bf16.msra.mxu0 %v4267
    %4397 = vmatprep.subr.bf16.mxu0 %v4270
    %4398 = vmatpush1.bf16.msra.mxu0 %v4269
    %4399 = vmatprep.subr.bf16.mxu0 %v4272
    %4400 = vmatpush1.bf16.msra.mxu0 %v4271
    %4401 = vmatprep.subr.bf16.mxu0 %v4274
    %4402 = vmatpush1.bf16.msra.mxu0 %v4273
    %4403 = vmatprep.subr.bf16.mxu0 %v4276
    %4404 = vmatpush1.bf16.msra.mxu0 %v4275
    %4405 = vmatprep.subr.bf16.mxu0 %v4278
    %4406 = vmatpush1.bf16.msra.mxu0 %v4277
    %4407 = vmatprep.subr.bf16.mxu0 %v4280
    %4408 = vmatpush1.bf16.msra.mxu0 %v4279
    %4409 = vmatprep.mubr.bf16.mxu0 %v3950
    %4410 = vmatmul.mubr.bf16.gmra.mrb[0].mxu0 %v3949
    %v4411 = vpop.f32.mrb[0].mxu0
    %v4412 = vadd.f32 %v4050, %v4411
    %v4413 = vpop.f32.mrb[0].mxu0
    %v4414 = vadd.f32 %v4054, %v4413
    %v4415 = vpop.f32.mrb[0].mxu0
    %v4416 = vadd.f32 %v4050, %v4415
    %v4417 = vpop.f32.mrb[0].mxu0
    %v4418 = vadd.f32 %v4054, %v4417
    %4419 = vmatprep.mubr.bf16.mxu0 %v3954
    %4420 = vmatmul.mubr.bf16.gmra.mrb[0].mxu0 %v3953
    %v4421 = vpop.f32.mrb[0].mxu0
    %v4422 = vadd.f32 %v4050, %v4421
    %v4423 = vpop.f32.mrb[0].mxu0
    %v4424 = vadd.f32 %v4054, %v4423
    %v4425 = vpop.f32.mrb[0].mxu0
    %v4426 = vadd.f32 %v4050, %v4425
    %v4427 = vpop.f32.mrb[0].mxu0
    %v4428 = vadd.f32 %v4054, %v4427
    %4429 = vmatprep.mubr.bf16.mxu0 %v3958
    %4430 = vmatmul.mubr.bf16.gmra.mrb[0].mxu0 %v3957
    %v4431 = vpop.f32.mrb[0].mxu0
    %v4432 = vadd.f32 %v4050, %v4431
    %v4433 = vpop.f32.mrb[0].mxu0
    %v4434 = vadd.f32 %v4054, %v4433
    %v4435 = vpop.f32.mrb[0].mxu0
    %v4436 = vadd.f32 %v4050, %v4435
    %v4437 = vpop.f32.mrb[0].mxu0
    %v4438 = vadd.f32 %v4054, %v4437
    %4439 = vmatprep.mubr.bf16.mxu0 %v3962
    %4440 = vmatmul.mubr.bf16.gmra.mrb[0].mxu0 %v3961
    %v4441 = vpop.f32.mrb[0].mxu0
    %v4442 = vadd.f32 %v4050, %v4441
    %v4443 = vpop.f32.mrb[0].mxu0
    %v4444 = vadd.f32 %v4054, %v4443
    %v4445 = vpop.f32.mrb[0].mxu0
    %v4446 = vadd.f32 %v4050, %v4445
    %v4447 = vpop.f32.mrb[0].mxu0
    %v4448 = vadd.f32 %v4054, %v4447
    %4449 = vmatprep.mubr.bf16.mxu0 %v3966
    %4450 = vmatmul.mubr.bf16.gmra.mrb[0].mxu0 %v3965
    %v4451 = vpop.f32.mrb[0].mxu0
    %v4452 = vadd.f32 %v4050, %v4451
    %v4453 = vpop.f32.mrb[0].mxu0
    %v4454 = vadd.f32 %v4054, %v4453
    %v4455 = vpop.f32.mrb[0].mxu0
    %v4456 = vadd.f32 %v4050, %v4455
    %v4457 = vpop.f32.mrb[0].mxu0
    %v4458 = vadd.f32 %v4054, %v4457
    %4459 = vmatprep.mubr.bf16.mxu0 %v3970
    %4460 = vmatmul.mubr.bf16.gmra.mrb[0].mxu0 %v3969
    %v4461 = vpop.f32.mrb[0].mxu0
    %v4462 = vadd.f32 %v4050, %v4461
    %v4463 = vpop.f32.mrb[0].mxu0
    %v4464 = vadd.f32 %v4054, %v4463
    %v4465 = vpop.f32.mrb[0].mxu0
    %v4466 = vadd.f32 %v4050, %v4465
    %v4467 = vpop.f32.mrb[0].mxu0
    %v4468 = vadd.f32 %v4054, %v4467
    %4469 = vmatprep.mubr.bf16.mxu0 %v3974
    %4470 = vmatmul.mubr.bf16.gmra.mrb[0].mxu0 %v3973
    %v4471 = vpop.f32.mrb[0].mxu0
    %v4472 = vadd.f32 %v4050, %v4471
    %v4473 = vpop.f32.mrb[0].mxu0
    %v4474 = vadd.f32 %v4054, %v4473
    %v4475 = vpop.f32.mrb[0].mxu0
    %v4476 = vadd.f32 %v4050, %v4475
    %v4477 = vpop.f32.mrb[0].mxu0
    %v4478 = vadd.f32 %v4054, %v4477
    %4479 = vmatprep.mubr.bf16.mxu0 %v3978
    %4480 = vmatmul.mubr.bf16.gmra.mrb[0].mxu0 %v3977
    %v4481 = vpop.f32.mrb[0].mxu0
    %v4482 = vadd.f32 %v4050, %v4481
    %v4483 = vpop.f32.mrb[0].mxu0
    %v4484 = vadd.f32 %v4054, %v4483
    %v4485 = vpop.f32.mrb[0].mxu0
    %v4486 = vadd.f32 %v4050, %v4485
    %v4487 = vpop.f32.mrb[0].mxu0
    %v4488 = vadd.f32 %v4054, %v4487
    %4489 = vdwg.mxu0
    %4490 = vmatprep.subr.bf16.mxu0 %v4282
    %4491 = vmatpush1.bf16.msra.mxu0 %v4281
    %4492 = vmatprep.subr.bf16.mxu0 %v4284
    %4493 = vmatpush1.bf16.msra.mxu0 %v4283
    %4494 = vmatprep.subr.bf16.mxu0 %v4286
    %4495 = vmatpush1.bf16.msra.mxu0 %v4285
    %4496 = vmatprep.subr.bf16.mxu0 %v4288
    %4497 = vmatpush1.bf16.msra.mxu0 %v4287
    %4498 = vmatprep.subr.bf16.mxu0 %v4290
    %4499 = vmatpush1.bf16.msra.mxu0 %v4289
    %4500 = vmatprep.subr.bf16.mxu0 %v4292
    %4501 = vmatpush1.bf16.msra.mxu0 %v4291
    %4502 = vmatprep.subr.bf16.mxu0 %v4294
    %4503 = vmatpush1.bf16.msra.mxu0 %v4293
    %4504 = vmatprep.subr.bf16.mxu0 %v4296
    %4505 = vmatpush1.bf16.msra.mxu0 %v4295
    %4506 = vmatprep.subr.bf16.mxu0 %v4298
    %4507 = vmatpush1.bf16.msra.mxu0 %v4297
    %4508 = vmatprep.subr.bf16.mxu0 %v4300
    %4509 = vmatpush1.bf16.msra.mxu0 %v4299
    %4510 = vmatprep.subr.bf16.mxu0 %v4302
    %4511 = vmatpush1.bf16.msra.mxu0 %v4301
    %4512 = vmatprep.subr.bf16.mxu0 %v4304
    %4513 = vmatpush1.bf16.msra.mxu0 %v4303
    %4514 = vmatprep.subr.bf16.mxu0 %v4306
    %4515 = vmatpush1.bf16.msra.mxu0 %v4305
    %4516 = vmatprep.subr.bf16.mxu0 %v4308
    %4517 = vmatpush1.bf16.msra.mxu0 %v4307
    %4518 = vmatprep.subr.bf16.mxu0 %v4310
    %4519 = vmatpush1.bf16.msra.mxu0 %v4309
    %4520 = vmatprep.subr.bf16.mxu0 %v4312
    %4521 = vmatpush1.bf16.msra.mxu0 %v4311
    %4522 = vmatprep.mubr.bf16.mxu0 %v3952
    %4523 = vmatmul.mubr.bf16.gmra.mrb[0].mxu0 %v3951
    %v4524 = vpop.f32.mrb[0].mxu0
    %v4525 = vadd.f32 %v4412, %v4524
    %v4526 = vpop.f32.mrb[0].mxu0
    %v4527 = vadd.f32 %v4414, %v4526
    %v4528 = vpop.f32.mrb[0].mxu0
    %v4529 = vadd.f32 %v4416, %v4528
    %v4530 = vpop.f32.mrb[0].mxu0
    %v4531 = vadd.f32 %v4418, %v4530
    %4532 = vmatprep.mubr.bf16.mxu0 %v3956
    %4533 = vmatmul.mubr.bf16.gmra.mrb[0].mxu0 %v3955
    %v4534 = vpop.f32.mrb[0].mxu0
    %v4535 = vadd.f32 %v4422, %v4534
    %v4536 = vpop.f32.mrb[0].mxu0
    %v4537 = vadd.f32 %v4424, %v4536
    %v4538 = vpop.f32.mrb[0].mxu0
    %v4539 = vadd.f32 %v4426, %v4538
    %v4540 = vpop.f32.mrb[0].mxu0
    %v4541 = vadd.f32 %v4428, %v4540
    %4542 = vmatprep.mubr.bf16.mxu0 %v3960
    %4543 = vmatmul.mubr.bf16.gmra.mrb[0].mxu0 %v3959
    %v4544 = vpop.f32.mrb[0].mxu0
    %v4545 = vadd.f32 %v4432, %v4544
    %v4546 = vpop.f32.mrb[0].mxu0
    %v4547 = vadd.f32 %v4434, %v4546
    %v4548 = vpop.f32.mrb[0].mxu0
    %v4549 = vadd.f32 %v4436, %v4548
    %v4550 = vpop.f32.mrb[0].mxu0
    %v4551 = vadd.f32 %v4438, %v4550
    %4552 = vmatprep.mubr.bf16.mxu0 %v3964
    %4553 = vmatmul.mubr.bf16.gmra.mrb[0].mxu0 %v3963
    %v4554 = vpop.f32.mrb[0].mxu0
    %v4555 = vadd.f32 %v4442, %v4554
    %v4556 = vpop.f32.mrb[0].mxu0
    %v4557 = vadd.f32 %v4444, %v4556
    %v4558 = vpop.f32.mrb[0].mxu0
    %v4559 = vadd.f32 %v4446, %v4558
    %v4560 = vpop.f32.mrb[0].mxu0
    %v4561 = vadd.f32 %v4448, %v4560
    %4562 = vmatprep.mubr.bf16.mxu0 %v3968
    %4563 = vmatmul.mubr.bf16.gmra.mrb[0].mxu0 %v3967
    %v4564 = vpop.f32.mrb[0].mxu0
    %v4565 = vadd.f32 %v4452, %v4564
    %v4566 = vpop.f32.mrb[0].mxu0
    %v4567 = vadd.f32 %v4454, %v4566
    %v4568 = vpop.f32.mrb[0].mxu0
    %v4569 = vadd.f32 %v4456, %v4568
    %v4570 = vpop.f32.mrb[0].mxu0
    %v4571 = vadd.f32 %v4458, %v4570
    %4572 = vmatprep.mubr.bf16.mxu0 %v3972
    %4573 = vmatmul.mubr.bf16.gmra.mrb[0].mxu0 %v3971
    %v4574 = vpop.f32.mrb[0].mxu0
    %v4575 = vadd.f32 %v4462, %v4574
    %v4576 = vpop.f32.mrb[0].mxu0
    %v4577 = vadd.f32 %v4464, %v4576
    %v4578 = vpop.f32.mrb[0].mxu0
    %v4579 = vadd.f32 %v4466, %v4578
    %v4580 = vpop.f32.mrb[0].mxu0
    %v4581 = vadd.f32 %v4468, %v4580
    %4582 = vmatprep.mubr.bf16.mxu0 %v3976
    %4583 = vmatmul.mubr.bf16.gmra.mrb[0].mxu0 %v3975
    %v4584 = vpop.f32.mrb[0].mxu0
    %v4585 = vadd.f32 %v4472, %v4584
    %v4586 = vpop.f32.mrb[0].mxu0
    %v4587 = vadd.f32 %v4474, %v4586
    %v4588 = vpop.f32.mrb[0].mxu0
    %v4589 = vadd.f32 %v4476, %v4588
    %v4590 = vpop.f32.mrb[0].mxu0
    %v4591 = vadd.f32 %v4478, %v4590
    %4592 = vmatprep.mubr.bf16.mxu0 %v3980
    %4593 = vmatmul.mubr.bf16.gmra.mrb[0].mxu0 %v3979
    %v4594 = vpop.f32.mrb[0].mxu0
    %v4595 = vadd.f32 %v4482, %v4594
    %v4596 = vpop.f32.mrb[0].mxu0
    %v4597 = vadd.f32 %v4484, %v4596
    %v4598 = vpop.f32.mrb[0].mxu0
    %v4599 = vadd.f32 %v4486, %v4598
    %v4600 = vpop.f32.mrb[0].mxu0
    %v4601 = vadd.f32 %v4488, %v4600
    %4602 = vdwg.mxu0
    %vm4603 = vcmp.gt.f32.partialorder %v4525, 0.0
    %vm4604 = vcmp.gt.f32.partialorder %v4527, 0.0
    %vm4605 = vcmp.gt.f32.partialorder %v4529, 0.0
    %vm4606 = vcmp.gt.f32.partialorder %v4531, 0.0
    %vm4607 = vcmp.gt.f32.partialorder %v4535, 0.0
    %vm4608 = vcmp.gt.f32.partialorder %v4537, 0.0
    %vm4609 = vcmp.gt.f32.partialorder %v4539, 0.0
    %vm4610 = vcmp.gt.f32.partialorder %v4541, 0.0
    %vm4611 = vcmp.gt.f32.partialorder %v4545, 0.0
    %vm4612 = vcmp.gt.f32.partialorder %v4547, 0.0
    %vm4613 = vcmp.gt.f32.partialorder %v4549, 0.0
    %vm4614 = vcmp.gt.f32.partialorder %v4551, 0.0
    %vm4615 = vcmp.gt.f32.partialorder %v4555, 0.0
    %vm4616 = vcmp.gt.f32.partialorder %v4557, 0.0
    %vm4617 = vcmp.gt.f32.partialorder %v4559, 0.0
    %vm4618 = vcmp.gt.f32.partialorder %v4561, 0.0
    %vm4619 = vcmp.gt.f32.partialorder %v4565, 0.0
    %vm4620 = vcmp.gt.f32.partialorder %v4567, 0.0
    %vm4621 = vcmp.gt.f32.partialorder %v4569, 0.0
    %vm4622 = vcmp.gt.f32.partialorder %v4571, 0.0
    %vm4623 = vcmp.gt.f32.partialorder %v4575, 0.0
    %vm4624 = vcmp.gt.f32.partialorder %v4577, 0.0
    %vm4625 = vcmp.gt.f32.partialorder %v4579, 0.0
    %vm4626 = vcmp.gt.f32.partialorder %v4581, 0.0
    %vm4627 = vcmp.gt.f32.partialorder %v4585, 0.0
    %vm4628 = vcmp.gt.f32.partialorder %v4587, 0.0
    %vm4629 = vcmp.gt.f32.partialorder %v4589, 0.0
    %vm4630 = vcmp.gt.f32.partialorder %v4591, 0.0
    %vm4631 = vcmp.gt.f32.partialorder %v4595, 0.0
    %vm4632 = vcmp.gt.f32.partialorder %v4597, 0.0
    %vm4633 = vcmp.gt.f32.partialorder %v4599, 0.0
    %vm4634 = vcmp.gt.f32.partialorder %v4601, 0.0
    %v4635 = vmul.f32 %v4525, 0.01
    %v4636 = vmul.f32 %v4527, 0.01
    %v4637 = vmul.f32 %v4529, 0.01
    %v4638 = vmul.f32 %v4531, 0.01
    %v4639 = vmul.f32 %v4535, 0.01
    %v4640 = vmul.f32 %v4537, 0.01
    %v4641 = vmul.f32 %v4539, 0.01
    %v4642 = vmul.f32 %v4541, 0.01
    %v4643 = vmul.f32 %v4545, 0.01
    %v4644 = vmul.f32 %v4547, 0.01
    %v4645 = vmul.f32 %v4549, 0.01
    %v4646 = vmul.f32 %v4551, 0.01
    %v4647 = vmul.f32 %v4555, 0.01
    %v4648 = vmul.f32 %v4557, 0.01
    %v4649 = vmul.f32 %v4559, 0.01
    %v4650 = vmul.f32 %v4561, 0.01
    %v4651 = vmul.f32 %v4565, 0.01
    %v4652 = vmul.f32 %v4567, 0.01
    %v4653 = vmul.f32 %v4569, 0.01
    %v4654 = vmul.f32 %v4571, 0.01
    %v4655 = vmul.f32 %v4575, 0.01
    %v4656 = vmul.f32 %v4577, 0.01
    %v4657 = vmul.f32 %v4579, 0.01
    %v4658 = vmul.f32 %v4581, 0.01
    %v4659 = vmul.f32 %v4585, 0.01
    %v4660 = vmul.f32 %v4587, 0.01
    %v4661 = vmul.f32 %v4589, 0.01
    %v4662 = vmul.f32 %v4591, 0.01
    %v4663 = vmul.f32 %v4595, 0.01
    %v4664 = vmul.f32 %v4597, 0.01
    %v4665 = vmul.f32 %v4599, 0.01
    %v4666 = vmul.f32 %v4601, 0.01
    %v4667 = vsel %vm4603, %v4525, %v4635
    %v4668 = vsel %vm4604, %v4527, %v4636
    %v4669 = vsel %vm4605, %v4529, %v4637
    %v4670 = vsel %vm4606, %v4531, %v4638
    %v4671 = vsel %vm4607, %v4535, %v4639
    %v4672 = vsel %vm4608, %v4537, %v4640
    %v4673 = vsel %vm4609, %v4539, %v4641
    %v4674 = vsel %vm4610, %v4541, %v4642
    %v4675 = vsel %vm4611, %v4545, %v4643
    %v4676 = vsel %vm4612, %v4547, %v4644
    %v4677 = vsel %vm4613, %v4549, %v4645
    %v4678 = vsel %vm4614, %v4551, %v4646
    %v4679 = vsel %vm4615, %v4555, %v4647
    %v4680 = vsel %vm4616, %v4557, %v4648
    %v4681 = vsel %vm4617, %v4559, %v4649
    %v4682 = vsel %vm4618, %v4561, %v4650
    %v4683 = vsel %vm4619, %v4565, %v4651
    %v4684 = vsel %vm4620, %v4567, %v4652
    %v4685 = vsel %vm4621, %v4569, %v4653
    %v4686 = vsel %vm4622, %v4571, %v4654
    %v4687 = vsel %vm4623, %v4575, %v4655
    %v4688 = vsel %vm4624, %v4577, %v4656
    %v4689 = vsel %vm4625, %v4579, %v4657
    %v4690 = vsel %vm4626, %v4581, %v4658
    %v4691 = vsel %vm4627, %v4585, %v4659
    %v4692 = vsel %vm4628, %v4587, %v4660
    %v4693 = vsel %vm4629, %v4589, %v4661
    %v4694 = vsel %vm4630, %v4591, %v4662
    %v4695 = vsel %vm4631, %v4595, %v4663
    %v4696 = vsel %vm4632, %v4597, %v4664
    %v4697 = vsel %vm4633, %v4599, %v4665
    %v4698 = vsel %vm4634, %v4601, %v4666
    %v4699 = vld [vmem:[%s5] sm:$0xff]
    %v4700 = vpack.c.bf16 %v4669, %v4667
    %v4701 = vpack.c.bf16 %v4670, %v4668
    %v4702 = vpack.c.bf16 %v4673, %v4671
    %v4703 = vpack.c.bf16 %v4674, %v4672
    %v4704 = vpack.c.bf16 %v4677, %v4675
    %v4705 = vpack.c.bf16 %v4678, %v4676
    %v4706 = vpack.c.bf16 %v4681, %v4679
    %v4707 = vpack.c.bf16 %v4682, %v4680
    %v4708 = vpack.c.bf16 %v4685, %v4683
    %v4709 = vpack.c.bf16 %v4686, %v4684
    %v4710 = vpack.c.bf16 %v4689, %v4687
    %v4711 = vpack.c.bf16 %v4690, %v4688
    %v4712 = vpack.c.bf16 %v4693, %v4691
    %v4713 = vpack.c.bf16 %v4694, %v4692
    %v4714 = vpack.c.bf16 %v4697, %v4695
    %v4715 = vpack.c.bf16 %v4698, %v4696
    %v4717 = vunpack.c.l.b16 %v4699
    %v4718 = vunpack.c.h.b16 %v4699
    %v4719 = vpack.c.b16 %v4717, %v4717
    %v4720 = vpack.c.b16 %v4718, %v4718
    %4723 = vmatprep.subr.bf16.mxu0 %v4701
    %4724 = vmatpush1.bf16.xpose.msra.mxu0 %v4700
    %4725 = vmatprep.subr.bf16.mxu0 %v4703
    %4726 = vmatpush1.bf16.xpose.msra.mxu0 %v4702
    %4727 = vmatprep.subr.bf16.mxu0 %v4705
    %4728 = vmatpush1.bf16.xpose.msra.mxu0 %v4704
    %4729 = vmatprep.subr.bf16.mxu0 %v4707
    %4730 = vmatpush1.bf16.xpose.msra.mxu0 %v4706
    %4731 = vmatprep.subr.bf16.mxu0 %v4709
    %4732 = vmatpush1.bf16.xpose.msra.mxu0 %v4708
    %4733 = vmatprep.subr.bf16.mxu0 %v4711
    %4734 = vmatpush1.bf16.xpose.msra.mxu0 %v4710
    %4735 = vmatprep.subr.bf16.mxu0 %v4713
    %4736 = vmatpush1.bf16.xpose.msra.mxu0 %v4712
    %4737 = vmatprep.subr.bf16.mxu0 %v4715
    %4738 = vmatpush1.bf16.xpose.msra.mxu0 %v4714
    %4739 = vmatprep.subr.bf16.mxu0 0
    %4740 = vmatpush1.bf16.xpose.msra.mxu0 0
    %4741 = vmatprep.subr.bf16.mxu0 0
    %4742 = vmatpush1.bf16.xpose.msra.mxu0 0
    %4743 = vmatprep.subr.bf16.mxu0 0
    %4744 = vmatpush1.bf16.xpose.msra.mxu0 0
    %4745 = vmatprep.subr.bf16.mxu0 0
    %4746 = vmatpush1.bf16.xpose.msra.mxu0 0
    %4747 = vmatprep.subr.bf16.mxu0 0
    %4748 = vmatpush1.bf16.xpose.msra.mxu0 0
    %4749 = vmatprep.subr.bf16.mxu0 0
    %4750 = vmatpush1.bf16.xpose.msra.mxu0 0
    %4751 = vmatprep.subr.bf16.mxu0 0
    %4752 = vmatpush1.bf16.xpose.msra.mxu0 0
    %4753 = vmatprep.subr.bf16.mxu0 0
    %4754 = vmatpush1.bf16.xpose.msra.mxu0 0
    %4755 = vmatprep.mubr.bf16.mxu0 %v4720
    %4756 = vmatmul.mubr.bf16.gmra.mrb[0].mxu0 %v4719
    %v4757 = vpop.f32.mrb[0].mxu0
    %v4758 = vadd.f32 0.0, %v4757
    %v4759 = vpop.f32.mrb[0].mxu0
    %v4760 = vpop.f32.mrb[0].mxu0
    %v4761 = vpop.f32.mrb[0].mxu0
    %4762 = vdwg.mxu0
    %s4763 = sld [smem:[#allocation2]]
    %v4764 = vstv %s4763
    %v4765 = vadd.f32 %v4758, %v4764
    %v4766 = vsub.f32 0.0, %v4765
    %v4767 = vmul.f32 %v4766, 1.442695
    %v4768 = vpow.pop %v4767
    %v4769 = vadd.f32 %v4768, 1.0
    %v4770 = vrcp.pop %v4769
    %4771 = vst [vmem:[#allocation9] sm:$0x1] %v4770
    // Predicated region
    $region42: #{tpu_custom_call.1} parent=1 // pred_check
      _
    $region43: #{tpu_custom_call.1} parent=1 // pred_check_branch
      %4773 = sbr.rel (0) target = $region45
    $region44: #{tpu_custom_call.1} parent=1 // pred_region
      %s4775 = ssub.s32 16, 16
      %4776 = vsyncadd [#allocation5], %s4775
      %s4778 = sshll.u32 [#allocation9], 4
      %s4779 = int_to_ptr.vmem [resolvable:$true] %s4778
      %4781 = dma.vmem_to_hbm [thread:$0]  %s4779, 16, %s7, [#allocation5]
    $region45: #{tpu_custom_call.1} parent=1 // pred_fallthru
      _
    // Predicated region
    $region46: #{tpu_custom_call.1} parent=1 // pred_check
      _
    $region47: #{tpu_custom_call.1} parent=1 // pred_check_branch
      %4783 = sbr.rel (0) target = $region49
    $region48: #{tpu_custom_call.1} parent=1 // pred_region
      %4784 = dma.done [#allocation5], 16
    $region49: #{tpu_custom_call.1} parent=1 // pred_fallthru
      _
    %4785 = vsyncpa [#allocation4], 1
    %4786 = vsyncpa [#allocation7], 1
    %4787 = vsyncpa [#allocation5], 1

</llo_original>
